<compile_context>
chip_gen: v6e
topology: v6e:2x2x1
jax: 0.10.0
libtpu: 0.0.40
codegen_flags: <defaults>
</compile_context>

<pallas_src>
import jax
import jax.numpy as jnp
from jax import lax
from jax.experimental import pallas as pl
from jax.experimental.pallas import tpu as pltpu


def _round_up(n, m):
    return -(-n // m) * m


def _tpu_vmem_info():
    """Best-effort (vmem_capacity_bytes, is_v5e); conservative fallbacks."""
    cap = None
    try:
        info = pltpu.get_tpu_info()
        for name in ("vmem_capacity_bytes", "vmem_size_bytes", "vmem_bytes"):
            val = getattr(info, name, None)
            if val:
                cap = int(val)
                break
    except Exception:
        cap = None
    kind = ""
    try:
        kind = jax.devices()[0].device_kind.lower()
    except Exception:
        pass
    if cap is None:
        cap = 64 * 2 ** 20          # conservative (v7x-sized) default
    is_v5e = ("v5 lite" in kind) or ("v5e" in kind) or ("v5litepod" in kind)
    return cap, is_v5e


def selfattention2d_forward(x, params, *, compute_dtype=jnp.bfloat16, tq=None):
    """x: (B, C, H, W) float32, NCHW (PyTorch convention)."""
    wq, bq = params["wq"], params["bq"]
    wk, bk = params["wk"], params["bk"]
    wv, bv = params["wv"], params["bv"]
    gamma = params["gamma"]

    B, C, H, W = x.shape
    N = H * W
    Cq = wq.shape[0]                      # = C // 8
    cbytes = jnp.dtype(compute_dtype).itemsize
    row_align = 8 * (4 // cbytes)         # 8 rows for f32, 16 for packed bf16

    # Fused row layout of the conv outputs (every section tile-aligned so the
    # in-kernel q/k/v slices of the cached scratch never need relayout):
    #   rows [0, koff)        : q   (rows [Cq, koff) are exact zeros)
    #   rows [koff, 2*koff)   : k   (same padding)
    #   rows [voff, voff+C)   : v
    #   row  voff + C         : constant 1 (softmax denominator row)
    koff = _round_up(Cq, row_align)
    voff = 2 * koff
    vrows = _round_up(C + 1, row_align)
    R = voff + vrows
    KC = 9 * C                            # fused conv contraction depth

    w_all = jnp.zeros((R, C, 3, 3), jnp.float32)
    w_all = w_all.at[0:Cq].set(wq)
    w_all = w_all.at[koff:koff + Cq].set(wk)
    w_all = w_all.at[voff:voff + C].set(wv)
    # single fused conv weight: (R, 9*C), column index = (kh*3 + kw)*C + c
    w_flat = jnp.transpose(w_all, (0, 2, 3, 1)).reshape(R, KC).astype(compute_dtype)

    b_all = jnp.zeros((R,), jnp.float32)
    b_all = b_all.at[0:Cq].set(bq)
    b_all = b_all.at[koff:koff + Cq].set(bk)
    b_all = b_all.at[voff:voff + C].set(bv)
    b_all = b_all.at[voff + C].set(1.0)        # ones row -> softmax denominator
    b_all = b_all.reshape(R, 1)

    # 'same'-padding validity masks for the 9 taps, precomputed on the host in
    # compute_dtype, (9, N) so there is no 8-sublane padding per tap.
    hh, ww = jnp.meshgrid(jnp.arange(H), jnp.arange(W), indexing="ij")
    mask_rows = []
    for t in range(9):
        dh, dw = t // 3 - 1, t % 3 - 1
        ok = (hh + dh >= 0) & (hh + dh < H) & (ww + dw >= 0) & (ww + dw < W)
        mask_rows.append(ok.reshape(N))
    masks = jnp.stack(mask_rows, axis=0).astype(compute_dtype)        # (9, N)

    x_flat = x.reshape(B, C, N)                    # channels-first, no transpose
    gamma_m = gamma.reshape(1, 1).astype(jnp.float32)

    vmem_cap, is_v5e = _tpu_vmem_info()

    def attn_bytes(t):                             # resident + temporaries for tile t
        return (2 * C * N * 4 + R * N * (cbytes + 4) + KC * N * cbytes
                + 3 * N * t * 4 + vrows * t * 4 + 2 * C * t * 4)

    if tq is None:
        if (not is_v5e) and N % 256 == 0 and attn_bytes(256) <= (vmem_cap * 3) // 8:
            tq = 256           # fill the 256-wide MXU output dim on v6e/v7x
        elif N % 128 == 0:
            tq = 128           # v5e MXU width / small-VMEM fallback
        else:
            tq = N
    TQ = tq
    assert N % TQ == 0, "query tile must divide H*W"
    n_qt = N // TQ

    # exact reciprocal on the f32 reference path, EUP approx on the perf path
    approx_recip = jnp.dtype(compute_dtype) != jnp.dtype(jnp.float32)

    def kernel(x_ref, w_ref, b_ref, m_ref, g_ref, o_ref, qkv_ref):
        qi = pl.program_id(1)

        # ---- stage 1: fused q/k/v conv, once per batch ---------------------
        @pl.when(qi == 0)
        def _():
            xb = x_ref[0].astype(compute_dtype)            # (C, N), cast once
            taps = []
            for t in range(9):
                dh, dw = t // 3 - 1, t % 3 - 1
                off = dh * W + dw                           # flat-index shift
                if off == 0:
                    xs = xb
                else:
                    # xs[:, n] = xb[:, (n + off) mod N]  (XLU lane rotate)
                    xs = pltpu.roll(xb, shift=(-off) % N, axis=1)
                taps.append(xs * m_ref[pl.ds(t, 1), :])     # zero out-of-image taps
            slab = jnp.concatenate(taps, axis=0)            # (9C, N), K = 9C
            acc = jnp.dot(w_ref[...], slab,
                          preferred_element_type=jnp.float32)          # (R, N)
            qkv_ref[...] = (acc + b_ref[...]).astype(qkv_ref.dtype)

        # ---- stage 2: attention for this query tile ------------------------
        start = pl.multiple_of(qi * TQ, TQ)
        q = qkv_ref[pl.ds(0, koff), pl.ds(start, TQ)]       # (koff, TQ)
        k = qkv_ref[pl.ds(koff, koff), :]                   # (koff, N)
        v = qkv_ref[pl.ds(voff, vrows), :]                  # (vrows, N), row C == 1

        # logits with keys on sublanes, queries on lanes:
        #   s[n, t] = sum_c k[c, n] * q[c, start + t]
        s = lax.dot_general(k, q, (((0,), (0,)), ((), ())),
                            preferred_element_type=jnp.float32)        # (N, TQ)
        m_max = jnp.max(s, axis=0, keepdims=True)                      # (1, TQ)
        p = jnp.exp(s - m_max)                                         # unnormalized

        # o_aug[c, t] = sum_n v[c, n] * p[n, t] -- natural (M,K)x(K,N) matmul,
        # no relayout of the (N, TQ) probs; row C is the softmax denominator.
        o_aug = lax.dot_general(v, p.astype(compute_dtype),
                                (((1,), (0,)), ((), ())),
                                preferred_element_type=jnp.float32)    # (vrows, TQ)
        scale = g_ref[0, 0] * pl.reciprocal(o_aug[C:C + 1, :], approx=approx_recip)
        res = x_ref[0, :, pl.ds(start, TQ)]                            # residual
        o_ref[0] = (o_aug[0:C, :] * scale + res).astype(o_ref.dtype)

    # scoped-VMEM budget sized from the actual footprint, generation-aware cap
    est = (2 * C * N * 4                               # x block (double-buffered)
           + (R * KC * cbytes + 16 * N * cbytes + R * 128 * 4)   # consts (1-buf)
           + 2 * C * TQ * 4                            # output block
           + R * N * cbytes                            # qkv scratch
           + KC * N * cbytes + R * N * 4               # conv slab + f32 accumulator
           + 2 * C * N * cbytes                        # rolled-tap temporaries
           + 2 * N * TQ * 4 + N * TQ * cbytes          # logits / probs
           + vrows * TQ * 4)                           # o_aug
    vmem_limit = int(min((vmem_cap * 3) // 4, max(32 * 2 ** 20, 2 * est)))

    cost = pl.CostEstimate(
        flops=int(2 * B * (R * KC * N + koff * N * N + vrows * N * N)),
        transcendentals=int(B * N * N),
        bytes_accessed=int(2 * B * C * N * 4 + R * KC * cbytes + 9 * N * cbytes))

    def build(single_buffer_consts):
        def const_spec(shape, imap):
            if single_buffer_consts:
                try:   # constant-index inputs: double-buffering only wastes VMEM
                    return pl.BlockSpec(shape, imap, pipeline_mode=pl.Buffered(1))
                except Exception:
                    pass
            return pl.BlockSpec(shape, imap)

        return pl.pallas_call(
            kernel,
            out_shape=jax.ShapeDtypeStruct((B, C, N), jnp.float32),
            grid=(B, n_qt),
            in_specs=[
                pl.BlockSpec((1, C, N), lambda b, qi: (b, 0, 0)),    # x, channels-first
                const_spec((R, KC), lambda b, qi: (0, 0)),           # fused conv weights
                const_spec((R, 1), lambda b, qi: (0, 0)),            # fused bias (+1 row)
                const_spec((9, N), lambda b, qi: (0, 0)),            # border masks
                pl.BlockSpec(memory_space=pltpu.MemorySpace.SMEM),   # gamma scalar
            ],
            out_specs=pl.BlockSpec((1, C, TQ), lambda b, qi: (b, 0, qi)),
            scratch_shapes=[pltpu.VMEM((R, N), compute_dtype)],      # cached q|k|v|1
            compiler_params=pltpu.CompilerParams(
                dimension_semantics=("parallel", "arbitrary"),
                vmem_limit_bytes=vmem_limit),
            cost_estimate=cost,
        )

    args = (x_flat, w_flat, b_all, masks, gamma_m)
    try:
        out_flat = build(True)(*args)
    except Exception:
        # pipeline_mode=pl.Buffered(1) not supported on this jax version ->
        # rebuild with default (double-buffered) specs.
        out_flat = build(False)(*args)

    # channels-first output reshapes straight back to NCHW (no transpose)
    return out_flat.reshape(B, C, H, W)


def reference_forward(x, params):
    """Pure-JAX reference mirroring the PyTorch forward exactly."""
    def conv(x, w, b):
        y = lax.conv_general_dilated(
            x, w, window_strides=(1, 1), padding="SAME",
            dimension_numbers=("NCHW", "OIHW", "NCHW"))
        return y + b[None, :, None, None]

    B, C, H, W = x.shape
    q = conv(x, params["wq"], params["bq"]).reshape(B, -1, H * W).transpose(0, 2, 1)
    k = conv(x, params["wk"], params["bk"]).reshape(B, -1, H * W)
    v = conv(x, params["wv"], params["bv"]).reshape(B, -1, H * W)
    attn = jax.nn.softmax(jnp.einsum("bnc,bcm->bnm", q, k), axis=-1)
    out = jnp.einsum("bcn,bmn->bcm", v, attn).reshape(x.shape)
    return params["gamma"] * out + x


if __name__ == "__main__":
    B, C, H, W = 2, 16, 16, 16       # in_channels = 16  ->  Cq = 2, N = 256
    Cq = C // 8

    key = jax.random.PRNGKey(0)
    kx, k1, k2, k3, k4, k5, k6 = jax.random.split(key, 7)

    x = jax.random.normal(kx, (B, C, H, W), dtype=jnp.float32)
    params = {
        "wq": 0.1 * jax.random.normal(k1, (Cq, C, 3, 3), dtype=jnp.float32),
        "bq": 0.1 * jax.random.normal(k2, (Cq,), dtype=jnp.float32),
        "wk": 0.1 * jax.random.normal(k3, (Cq, C, 3, 3), dtype=jnp.float32),
        "bk": 0.1 * jax.random.normal(k4, (Cq,), dtype=jnp.float32),
        "wv": 0.1 * jax.random.normal(k5, (C, C, 3, 3), dtype=jnp.float32),
        "bv": 0.1 * jax.random.normal(k6, (C,), dtype=jnp.float32),
        # PyTorch __init__ sets gamma = 0 (output == input); use a nonzero
        # deterministic value so the attention path is actually exercised.
        "gamma": jnp.asarray([0.5], dtype=jnp.float32),
    }

    ref = jax.block_until_ready(reference_forward(x, params))

    # exact-arithmetic path (f32 MXU inputs, exact reciprocal)
    out_f32 = jax.block_until_ready(
        selfattention2d_forward(x, params, compute_dtype=jnp.float32))
    assert out_f32.shape == x.shape and out_f32.dtype == jnp.float32
    err32 = jnp.max(jnp.abs(out_f32 - ref))
    assert jnp.allclose(out_f32, ref, atol=5e-3, rtol=5e-3), (
        f"f32 path mismatch: max abs err = {err32}")

    # performance path (bf16 MXU inputs, f32 accumulation / f32 softmax stats)
    out_bf16 = jax.block_until_ready(selfattention2d_forward(x, params))
    errbf = jnp.max(jnp.abs(out_bf16 - ref))
    assert jnp.allclose(out_bf16, ref, atol=5e-2, rtol=5e-2), (
        f"bf16 path mismatch: max abs err = {errbf}")

    print("KERNEL_OK")
</pallas_src>

<mosaic_0001>
module attributes {stable_mosaic.version = 11 : i64} {
  func.func @kernel(%arg0: i32, %arg1: i32, %arg2: memref<1x16x256xf32, #tpu.memory_space<vmem>>, %arg3: memref<40x144xf32, #tpu.memory_space<vmem>>, %arg4: memref<40x1xf32, #tpu.memory_space<vmem>>, %arg5: memref<9x256xf32, #tpu.memory_space<vmem>>, %arg6: memref<1x1xf32, #tpu.memory_space<smem>>, %arg7: memref<1x16x256xf32, #tpu.memory_space<vmem>>, %arg8: memref<40x256xf32, #tpu.memory_space<vmem>>) attributes {dimension_semantics = [#tpu.dimension_semantics<parallel>, #tpu.dimension_semantics<arbitrary>], iteration_bounds = array<i64: 2, 1>, scalar_prefetch = 0 : i64, scratch_operands = 1 : i64, tpu.core_type = #tpu.core_type<tc>, window_params = [{transform_indices = @transform_0, window_bounds = array<i64: 1, 16, 256>}, {pipeline_mode = #tpu.pipeline_mode<synchronous>, transform_indices = @transform_1, window_bounds = array<i64: 40, 144>}, {pipeline_mode = #tpu.pipeline_mode<synchronous>, transform_indices = @transform_2, window_bounds = array<i64: 40, 1>}, {pipeline_mode = #tpu.pipeline_mode<synchronous>, transform_indices = @transform_3, window_bounds = array<i64: 9, 256>}, {transform_indices = @transform_4, window_bounds = array<i64: 1, 1>}, {transform_indices = @transform_5, window_bounds = array<i64: 1, 16, 256>}]} {
    %c0_i32 = arith.constant 0 : i32
    %0 = arith.cmpi eq, %arg1, %c0_i32 : i32
    %1 = arith.extui %0 : i1 to i32
    %c0_i32_0 = arith.constant 0 : i32
    %2 = arith.cmpi ne, %1, %c0_i32_0 : i32
    scf.if %2 {
      %c0_12 = arith.constant 0 : index
      %c0_13 = arith.constant 0 : index
      %c0_14 = arith.constant 0 : index
      %31 = vector.load %arg2[%c0_12, %c0_13, %c0_14] : memref<1x16x256xf32, #tpu.memory_space<vmem>>, vector<1x16x256xf32>
      %32 = vector.shape_cast %31 : vector<1x16x256xf32> to vector<16x256xf32>
      %c17_i32 = arith.constant 17 : i32
      %33 = tpu.dynamic_rotate %32 by %c17_i32 dim 1 : vector<16x256xf32>, i32 -> vector<16x256xf32>
      %c0_15 = arith.constant 0 : index
      %c0_16 = arith.constant 0 : index
      %34 = vector.load %arg5[%c0_15, %c0_16] : memref<9x256xf32, #tpu.memory_space<vmem>>, vector<1x256xf32>
      %35 = vector.broadcast %34 : vector<1x256xf32> to vector<16x256xf32>
      %36 = arith.mulf %33, %35 : vector<16x256xf32>
      %c16_i32 = arith.constant 16 : i32
      %37 = tpu.dynamic_rotate %32 by %c16_i32 dim 1 : vector<16x256xf32>, i32 -> vector<16x256xf32>
      %c1 = arith.constant 1 : index
      %c0_17 = arith.constant 0 : index
      %38 = vector.load %arg5[%c1, %c0_17] : memref<9x256xf32, #tpu.memory_space<vmem>>, vector<1x256xf32>
      %39 = vector.broadcast %38 : vector<1x256xf32> to vector<16x256xf32>
      %40 = arith.mulf %37, %39 : vector<16x256xf32>
      %c15_i32 = arith.constant 15 : i32
      %41 = tpu.dynamic_rotate %32 by %c15_i32 dim 1 : vector<16x256xf32>, i32 -> vector<16x256xf32>
      %c2 = arith.constant 2 : index
      %c0_18 = arith.constant 0 : index
      %42 = vector.load %arg5[%c2, %c0_18] : memref<9x256xf32, #tpu.memory_space<vmem>>, vector<1x256xf32>
      %43 = vector.broadcast %42 : vector<1x256xf32> to vector<16x256xf32>
      %44 = arith.mulf %41, %43 : vector<16x256xf32>
      %c1_i32 = arith.constant 1 : i32
      %45 = tpu.dynamic_rotate %32 by %c1_i32 dim 1 : vector<16x256xf32>, i32 -> vector<16x256xf32>
      %c3 = arith.constant 3 : index
      %c0_19 = arith.constant 0 : index
      %46 = vector.load %arg5[%c3, %c0_19] : memref<9x256xf32, #tpu.memory_space<vmem>>, vector<1x256xf32>
      %47 = vector.broadcast %46 : vector<1x256xf32> to vector<16x256xf32>
      %48 = arith.mulf %45, %47 : vector<16x256xf32>
      %c4 = arith.constant 4 : index
      %c0_20 = arith.constant 0 : index
      %49 = vector.load %arg5[%c4, %c0_20] : memref<9x256xf32, #tpu.memory_space<vmem>>, vector<1x256xf32>
      %50 = vector.broadcast %49 : vector<1x256xf32> to vector<16x256xf32>
      %51 = arith.mulf %32, %50 : vector<16x256xf32>
      %c255_i32 = arith.constant 255 : i32
      %52 = tpu.dynamic_rotate %32 by %c255_i32 dim 1 : vector<16x256xf32>, i32 -> vector<16x256xf32>
      %c5 = arith.constant 5 : index
      %c0_21 = arith.constant 0 : index
      %53 = vector.load %arg5[%c5, %c0_21] : memref<9x256xf32, #tpu.memory_space<vmem>>, vector<1x256xf32>
      %54 = vector.broadcast %53 : vector<1x256xf32> to vector<16x256xf32>
      %55 = arith.mulf %52, %54 : vector<16x256xf32>
      %c241_i32 = arith.constant 241 : i32
      %56 = tpu.dynamic_rotate %32 by %c241_i32 dim 1 : vector<16x256xf32>, i32 -> vector<16x256xf32>
      %c6 = arith.constant 6 : index
      %c0_22 = arith.constant 0 : index
      %57 = vector.load %arg5[%c6, %c0_22] : memref<9x256xf32, #tpu.memory_space<vmem>>, vector<1x256xf32>
      %58 = vector.broadcast %57 : vector<1x256xf32> to vector<16x256xf32>
      %59 = arith.mulf %56, %58 : vector<16x256xf32>
      %c240_i32 = arith.constant 240 : i32
      %60 = tpu.dynamic_rotate %32 by %c240_i32 dim 1 : vector<16x256xf32>, i32 -> vector<16x256xf32>
      %c7 = arith.constant 7 : index
      %c0_23 = arith.constant 0 : index
      %61 = vector.load %arg5[%c7, %c0_23] : memref<9x256xf32, #tpu.memory_space<vmem>>, vector<1x256xf32>
      %62 = vector.broadcast %61 : vector<1x256xf32> to vector<16x256xf32>
      %63 = arith.mulf %60, %62 : vector<16x256xf32>
      %c239_i32 = arith.constant 239 : i32
      %64 = tpu.dynamic_rotate %32 by %c239_i32 dim 1 : vector<16x256xf32>, i32 -> vector<16x256xf32>
      %c8_24 = arith.constant 8 : index
      %c0_25 = arith.constant 0 : index
      %65 = vector.load %arg5[%c8_24, %c0_25] : memref<9x256xf32, #tpu.memory_space<vmem>>, vector<1x256xf32>
      %66 = vector.broadcast %65 : vector<1x256xf32> to vector<16x256xf32>
      %67 = arith.mulf %64, %66 : vector<16x256xf32>
      %68 = tpu.concatenate %36, %40, %44, %48, %51, %55, %59, %63, %67 in 0 : vector<16x256xf32>, vector<16x256xf32>, vector<16x256xf32>, vector<16x256xf32>, vector<16x256xf32>, vector<16x256xf32>, vector<16x256xf32>, vector<16x256xf32>, vector<16x256xf32> -> vector<144x256xf32>
      %c0_26 = arith.constant 0 : index
      %c0_27 = arith.constant 0 : index
      %69 = vector.load %arg3[%c0_26, %c0_27] : memref<40x144xf32, #tpu.memory_space<vmem>>, vector<40x144xf32>
      %cst_28 = arith.constant dense<0.000000e+00> : vector<40x256xf32>
      %70 = tpu.matmul %69, %68, %cst_28 {dimension_numbers = #tpu.dot_dimension_numbers<[1], [0], [0], [1], [0, 0, 1, 1], [], []>} : vector<40x144xf32>, vector<144x256xf32>, vector<40x256xf32> -> vector<40x256xf32>
      %c0_29 = arith.constant 0 : index
      %c0_30 = arith.constant 0 : index
      %71 = vector.load %arg4[%c0_29, %c0_30] : memref<40x1xf32, #tpu.memory_space<vmem>>, vector<40x1xf32>
      %72 = vector.broadcast %71 : vector<40x1xf32> to vector<40x256xf32>
      %73 = arith.addf %70, %72 : vector<40x256xf32>
      %c0_31 = arith.constant 0 : index
      %c0_32 = arith.constant 0 : index
      %74 = vector.load %arg8[%c0_31, %c0_32] : memref<40x256xf32, #tpu.memory_space<vmem>>, vector<40x256xf32>
      tpu.vector_store %arg8[%c0_31, %c0_32], %73 {strides = array<i32>} : memref<40x256xf32, #tpu.memory_space<vmem>>, vector<40x256xf32>,
    } else {
    }
    %c256_i32 = arith.constant 256 : i32
    %3 = arith.muli %arg1, %c256_i32 : i32
    %4 = tpu.assume_multiple %3, 256 : i32
    %c0 = arith.constant 0 : index
    %5 = arith.index_cast %4 : i32 to index
    %6 = vector.load %arg8[%c0, %5] : memref<40x256xf32, #tpu.memory_space<vmem>>, vector<8x256xf32>
    %c8 = arith.constant 8 : index
    %c0_1 = arith.constant 0 : index
    %7 = vector.load %arg8[%c8, %c0_1] : memref<40x256xf32, #tpu.memory_space<vmem>>, vector<8x256xf32>
    %c16 = arith.constant 16 : index
    %c0_2 = arith.constant 0 : index
    %8 = vector.load %arg8[%c16, %c0_2] : memref<40x256xf32, #tpu.memory_space<vmem>>, vector<24x256xf32>
    %cst = arith.constant dense<0.000000e+00> : vector<256x256xf32>
    %9 = tpu.matmul %7, %6, %cst {dimension_numbers = #tpu.dot_dimension_numbers<[0], [0], [1], [1], [0, 1, 1, 1], [], []>} : vector<8x256xf32>, vector<8x256xf32>, vector<256x256xf32> -> vector<256x256xf32>
    %cst_3 = arith.constant dense<0xFF800000> : vector<256xf32>
    %10 = vector.multi_reduction <maximumf>, %9, %cst_3 [0] : vector<256x256xf32> to vector<256xf32>
    %11 = vector.shape_cast %10 : vector<256xf32> to vector<1x256xf32>
    %12 = vector.broadcast %11 : vector<1x256xf32> to vector<256x256xf32>
    %13 = arith.subf %9, %12 : vector<256x256xf32>
    %14 = math.exp %13 : vector<256x256xf32>
    %cst_4 = arith.constant dense<0.000000e+00> : vector<24x256xf32>
    %15 = tpu.matmul %8, %14, %cst_4 {dimension_numbers = #tpu.dot_dimension_numbers<[1], [0], [0], [1], [0, 0, 1, 1], [], []>} : vector<24x256xf32>, vector<256x256xf32>, vector<24x256xf32> -> vector<24x256xf32>
    %c0_5 = arith.constant 0 : index
    %c0_6 = arith.constant 0 : index
    %16 = memref.load %arg6[%c0_5, %c0_6] : memref<1x1xf32, #tpu.memory_space<smem>>
    %17 = vector.extract_strided_slice %15 {offsets = [16, 0], sizes = [1, 256], strides = [1, 1]} : vector<24x256xf32> to vector<1x256xf32>
    %18 = tpu.reciprocal %17 : vector<1x256xf32> -> vector<1x256xf32>
    %19 = vector.broadcast %16 : f32 to vector<1x256xf32>
    %20 = arith.mulf %19, %18 : vector<1x256xf32>
    %c0_7 = arith.constant 0 : index
    %c0_8 = arith.constant 0 : index
    %21 = arith.index_cast %4 : i32 to index
    %22 = vector.load %arg2[%c0_7, %c0_8, %21] : memref<1x16x256xf32, #tpu.memory_space<vmem>>, vector<1x16x256xf32>
    %23 = vector.shape_cast %22 : vector<1x16x256xf32> to vector<16x256xf32>
    %24 = vector.extract_strided_slice %15 {offsets = [0, 0], sizes = [16, 256], strides = [1, 1]} : vector<24x256xf32> to vector<16x256xf32>
    %25 = vector.broadcast %20 : vector<1x256xf32> to vector<16x256xf32>
    %26 = arith.mulf %24, %25 : vector<16x256xf32>
    %27 = arith.addf %26, %23 : vector<16x256xf32>
    %c0_9 = arith.constant 0 : index
    %c0_10 = arith.constant 0 : index
    %c0_11 = arith.constant 0 : index
    %28 = vector.load %arg7[%c0_9, %c0_10, %c0_11] : memref<1x16x256xf32, #tpu.memory_space<vmem>>, vector<1x16x256xf32>
    %29 = vector.shape_cast %28 : vector<1x16x256xf32> to vector<16x256xf32>
    %30 = vector.shape_cast %27 : vector<16x256xf32> to vector<1x16x256xf32>
    tpu.vector_store %arg7[%c0_9, %c0_10, %c0_11], %30 {strides = array<i32>} : memref<1x16x256xf32, #tpu.memory_space<vmem>>, vector<1x16x256xf32>,
    return
  }
  func.func @transform_0(%arg0: i32, %arg1: i32) -> (i32, i32, i32) {
    %c0_i32 = arith.constant 0 : i32
    %c0_i32_0 = arith.constant 0 : i32
    %c0_i32_1 = arith.constant 0 : i32
    return %arg0, %c0_i32, %c0_i32_0 : i32, i32, i32
  }
  func.func @transform_1(%arg0: i32, %arg1: i32) -> (i32, i32) {
    %c0_i32 = arith.constant 0 : i32
    %c0_i32_0 = arith.constant 0 : i32
    %c0_i32_1 = arith.constant 0 : i32
    return %c0_i32, %c0_i32_0 : i32, i32
  }
  func.func @transform_2(%arg0: i32, %arg1: i32) -> (i32, i32) {
    %c0_i32 = arith.constant 0 : i32
    %c0_i32_0 = arith.constant 0 : i32
    %c0_i32_1 = arith.constant 0 : i32
    return %c0_i32, %c0_i32_0 : i32, i32
  }
  func.func @transform_3(%arg0: i32, %arg1: i32) -> (i32, i32) {
    %c0_i32 = arith.constant 0 : i32
    %c0_i32_0 = arith.constant 0 : i32
    %c0_i32_1 = arith.constant 0 : i32
    return %c0_i32, %c0_i32_0 : i32, i32
  }
  func.func @transform_4(%arg0: i32, %arg1: i32) -> (i32, i32) {
    %c0_i32 = arith.constant 0 : i32
    %c0_i32_0 = arith.constant 0 : i32
    %c0_i32_1 = arith.constant 0 : i32
    return %c0_i32, %c0_i32_0 : i32, i32
  }
  func.func @transform_5(%arg0: i32, %arg1: i32) -> (i32, i32, i32) {
    %c0_i32 = arith.constant 0 : i32
    %c0_i32_0 = arith.constant 0 : i32
    return %arg0, %c0_i32, %arg1 : i32, i32, i32
  }
}

module attributes {stable_mosaic.version = 11 : i64} {
  func.func @kernel(%arg0: i32, %arg1: i32, %arg2: memref<1x16x256xf32, #tpu.memory_space<vmem>>, %arg3: memref<40x144xf32, #tpu.memory_space<vmem>>, %arg4: memref<40x1xf32, #tpu.memory_space<vmem>>, %arg5: memref<9x256xf32, #tpu.memory_space<vmem>>, %arg6: memref<1x1xf32, #tpu.memory_space<smem>>, %arg7: memref<1x16x256xf32, #tpu.memory_space<vmem>>, %arg8: memref<40x256xf32, #tpu.memory_space<vmem>>) attributes {dimension_semantics = [#tpu.dimension_semantics<parallel>, #tpu.dimension_semantics<arbitrary>], iteration_bounds = array<i64: 2, 1>, scalar_prefetch = 0 : i64, scratch_operands = 1 : i64, tpu.core_type = #tpu.core_type<tc>, window_params = [{transform_indices = @transform_0, window_bounds = array<i64: 1, 16, 256>}, {pipeline_mode = #tpu.pipeline_mode<synchronous>, transform_indices = @transform_1, window_bounds = array<i64: 40, 144>}, {pipeline_mode = #tpu.pipeline_mode<synchronous>, transform_indices = @transform_2, window_bounds = array<i64: 40, 1>}, {pipeline_mode = #tpu.pipeline_mode<synchronous>, transform_indices = @transform_3, window_bounds = array<i64: 9, 256>}, {transform_indices = @transform_4, window_bounds = array<i64: 1, 1>}, {transform_indices = @transform_5, window_bounds = array<i64: 1, 16, 256>}]} {
    %c0_i32 = arith.constant 0 : i32
    %0 = arith.cmpi eq, %arg1, %c0_i32 : i32
    %1 = arith.extui %0 : i1 to i32
    %c0_i32_0 = arith.constant 0 : i32
    %2 = arith.cmpi ne, %1, %c0_i32_0 : i32
    scf.if %2 {
      %c0_12 = arith.constant 0 : index
      %c0_13 = arith.constant 0 : index
      %c0_14 = arith.constant 0 : index
      %31 = vector.load %arg2[%c0_12, %c0_13, %c0_14] : memref<1x16x256xf32, #tpu.memory_space<vmem>>, vector<1x16x256xf32>
      %32 = vector.shape_cast %31 : vector<1x16x256xf32> to vector<16x256xf32>
      %c17_i32 = arith.constant 17 : i32
      %33 = tpu.dynamic_rotate %32 by %c17_i32 dim 1 : vector<16x256xf32>, i32 -> vector<16x256xf32>
      %c0_15 = arith.constant 0 : index
      %c0_16 = arith.constant 0 : index
      %34 = vector.load %arg5[%c0_15, %c0_16] : memref<9x256xf32, #tpu.memory_space<vmem>>, vector<1x256xf32>
      %35 = vector.broadcast %34 : vector<1x256xf32> to vector<16x256xf32>
      %36 = arith.mulf %33, %35 : vector<16x256xf32>
      %c16_i32 = arith.constant 16 : i32
      %37 = tpu.dynamic_rotate %32 by %c16_i32 dim 1 : vector<16x256xf32>, i32 -> vector<16x256xf32>
      %c1 = arith.constant 1 : index
      %c0_17 = arith.constant 0 : index
      %38 = vector.load %arg5[%c1, %c0_17] : memref<9x256xf32, #tpu.memory_space<vmem>>, vector<1x256xf32>
      %39 = vector.broadcast %38 : vector<1x256xf32> to vector<16x256xf32>
      %40 = arith.mulf %37, %39 : vector<16x256xf32>
      %c15_i32 = arith.constant 15 : i32
      %41 = tpu.dynamic_rotate %32 by %c15_i32 dim 1 : vector<16x256xf32>, i32 -> vector<16x256xf32>
      %c2 = arith.constant 2 : index
      %c0_18 = arith.constant 0 : index
      %42 = vector.load %arg5[%c2, %c0_18] : memref<9x256xf32, #tpu.memory_space<vmem>>, vector<1x256xf32>
      %43 = vector.broadcast %42 : vector<1x256xf32> to vector<16x256xf32>
      %44 = arith.mulf %41, %43 : vector<16x256xf32>
      %c1_i32 = arith.constant 1 : i32
      %45 = tpu.dynamic_rotate %32 by %c1_i32 dim 1 : vector<16x256xf32>, i32 -> vector<16x256xf32>
      %c3 = arith.constant 3 : index
      %c0_19 = arith.constant 0 : index
      %46 = vector.load %arg5[%c3, %c0_19] : memref<9x256xf32, #tpu.memory_space<vmem>>, vector<1x256xf32>
      %47 = vector.broadcast %46 : vector<1x256xf32> to vector<16x256xf32>
      %48 = arith.mulf %45, %47 : vector<16x256xf32>
      %c4 = arith.constant 4 : index
      %c0_20 = arith.constant 0 : index
      %49 = vector.load %arg5[%c4, %c0_20] : memref<9x256xf32, #tpu.memory_space<vmem>>, vector<1x256xf32>
      %50 = vector.broadcast %49 : vector<1x256xf32> to vector<16x256xf32>
      %51 = arith.mulf %32, %50 : vector<16x256xf32>
      %c255_i32 = arith.constant 255 : i32
      %52 = tpu.dynamic_rotate %32 by %c255_i32 dim 1 : vector<16x256xf32>, i32 -> vector<16x256xf32>
      %c5 = arith.constant 5 : index
      %c0_21 = arith.constant 0 : index
      %53 = vector.load %arg5[%c5, %c0_21] : memref<9x256xf32, #tpu.memory_space<vmem>>, vector<1x256xf32>
      %54 = vector.broadcast %53 : vector<1x256xf32> to vector<16x256xf32>
      %55 = arith.mulf %52, %54 : vector<16x256xf32>
      %c241_i32 = arith.constant 241 : i32
      %56 = tpu.dynamic_rotate %32 by %c241_i32 dim 1 : vector<16x256xf32>, i32 -> vector<16x256xf32>
      %c6 = arith.constant 6 : index
      %c0_22 = arith.constant 0 : index
      %57 = vector.load %arg5[%c6, %c0_22] : memref<9x256xf32, #tpu.memory_space<vmem>>, vector<1x256xf32>
      %58 = vector.broadcast %57 : vector<1x256xf32> to vector<16x256xf32>
      %59 = arith.mulf %56, %58 : vector<16x256xf32>
      %c240_i32 = arith.constant 240 : i32
      %60 = tpu.dynamic_rotate %32 by %c240_i32 dim 1 : vector<16x256xf32>, i32 -> vector<16x256xf32>
      %c7 = arith.constant 7 : index
      %c0_23 = arith.constant 0 : index
      %61 = vector.load %arg5[%c7, %c0_23] : memref<9x256xf32, #tpu.memory_space<vmem>>, vector<1x256xf32>
      %62 = vector.broadcast %61 : vector<1x256xf32> to vector<16x256xf32>
      %63 = arith.mulf %60, %62 : vector<16x256xf32>
      %c239_i32 = arith.constant 239 : i32
      %64 = tpu.dynamic_rotate %32 by %c239_i32 dim 1 : vector<16x256xf32>, i32 -> vector<16x256xf32>
      %c8_24 = arith.constant 8 : index
      %c0_25 = arith.constant 0 : index
      %65 = vector.load %arg5[%c8_24, %c0_25] : memref<9x256xf32, #tpu.memory_space<vmem>>, vector<1x256xf32>
      %66 = vector.broadcast %65 : vector<1x256xf32> to vector<16x256xf32>
      %67 = arith.mulf %64, %66 : vector<16x256xf32>
      %68 = tpu.concatenate %36, %40, %44, %48, %51, %55, %59, %63, %67 in 0 : vector<16x256xf32>, vector<16x256xf32>, vector<16x256xf32>, vector<16x256xf32>, vector<16x256xf32>, vector<16x256xf32>, vector<16x256xf32>, vector<16x256xf32>, vector<16x256xf32> -> vector<144x256xf32>
      %c0_26 = arith.constant 0 : index
      %c0_27 = arith.constant 0 : index
      %69 = vector.load %arg3[%c0_26, %c0_27] : memref<40x144xf32, #tpu.memory_space<vmem>>, vector<40x144xf32>
      %cst_28 = arith.constant dense<0.000000e+00> : vector<40x256xf32>
      %70 = tpu.matmul %69, %68, %cst_28 {dimension_numbers = #tpu.dot_dimension_numbers<[1], [0], [0], [1], [0, 0, 1, 1], [], []>} : vector<40x144xf32>, vector<144x256xf32>, vector<40x256xf32> -> vector<40x256xf32>
      %c0_29 = arith.constant 0 : index
      %c0_30 = arith.constant 0 : index
      %71 = vector.load %arg4[%c0_29, %c0_30] : memref<40x1xf32, #tpu.memory_space<vmem>>, vector<40x1xf32>
      %72 = vector.broadcast %71 : vector<40x1xf32> to vector<40x256xf32>
      %73 = arith.addf %70, %72 : vector<40x256xf32>
      %c0_31 = arith.constant 0 : index
      %c0_32 = arith.constant 0 : index
      %74 = vector.load %arg8[%c0_31, %c0_32] : memref<40x256xf32, #tpu.memory_space<vmem>>, vector<40x256xf32>
      tpu.vector_store %arg8[%c0_31, %c0_32], %73 {strides = array<i32>} : memref<40x256xf32, #tpu.memory_space<vmem>>, vector<40x256xf32>,
    } else {
    }
    %c256_i32 = arith.constant 256 : i32
    %3 = arith.muli %arg1, %c256_i32 : i32
    %4 = tpu.assume_multiple %3, 256 : i32
    %c0 = arith.constant 0 : index
    %5 = arith.index_cast %4 : i32 to index
    %6 = vector.load %arg8[%c0, %5] : memref<40x256xf32, #tpu.memory_space<vmem>>, vector<8x256xf32>
    %c8 = arith.constant 8 : index
    %c0_1 = arith.constant 0 : index
    %7 = vector.load %arg8[%c8, %c0_1] : memref<40x256xf32, #tpu.memory_space<vmem>>, vector<8x256xf32>
    %c16 = arith.constant 16 : index
    %c0_2 = arith.constant 0 : index
    %8 = vector.load %arg8[%c16, %c0_2] : memref<40x256xf32, #tpu.memory_space<vmem>>, vector<24x256xf32>
    %cst = arith.constant dense<0.000000e+00> : vector<256x256xf32>
    %9 = tpu.matmul %7, %6, %cst {dimension_numbers = #tpu.dot_dimension_numbers<[0], [0], [1], [1], [0, 1, 1, 1], [], []>} : vector<8x256xf32>, vector<8x256xf32>, vector<256x256xf32> -> vector<256x256xf32>
    %cst_3 = arith.constant dense<0xFF800000> : vector<256xf32>
    %10 = vector.multi_reduction <maximumf>, %9, %cst_3 [0] : vector<256x256xf32> to vector<256xf32>
    %11 = vector.shape_cast %10 : vector<256xf32> to vector<1x256xf32>
    %12 = vector.broadcast %11 : vector<1x256xf32> to vector<256x256xf32>
    %13 = arith.subf %9, %12 : vector<256x256xf32>
    %14 = math.exp %13 : vector<256x256xf32>
    %cst_4 = arith.constant dense<0.000000e+00> : vector<24x256xf32>
    %15 = tpu.matmul %8, %14, %cst_4 {dimension_numbers = #tpu.dot_dimension_numbers<[1], [0], [0], [1], [0, 0, 1, 1], [], []>} : vector<24x256xf32>, vector<256x256xf32>, vector<24x256xf32> -> vector<24x256xf32>
    %c0_5 = arith.constant 0 : index
    %c0_6 = arith.constant 0 : index
    %16 = memref.load %arg6[%c0_5, %c0_6] : memref<1x1xf32, #tpu.memory_space<smem>>
    %17 = vector.extract_strided_slice %15 {offsets = [16, 0], sizes = [1, 256], strides = [1, 1]} : vector<24x256xf32> to vector<1x256xf32>
    %18 = tpu.reciprocal %17 : vector<1x256xf32> -> vector<1x256xf32>
    %19 = vector.broadcast %16 : f32 to vector<1x256xf32>
    %20 = arith.mulf %19, %18 : vector<1x256xf32>
    %c0_7 = arith.constant 0 : index
    %c0_8 = arith.constant 0 : index
    %21 = arith.index_cast %4 : i32 to index
    %22 = vector.load %arg2[%c0_7, %c0_8, %21] : memref<1x16x256xf32, #tpu.memory_space<vmem>>, vector<1x16x256xf32>
    %23 = vector.shape_cast %22 : vector<1x16x256xf32> to vector<16x256xf32>
    %24 = vector.extract_strided_slice %15 {offsets = [0, 0], sizes = [16, 256], strides = [1, 1]} : vector<24x256xf32> to vector<16x256xf32>
    %25 = vector.broadcast %20 : vector<1x256xf32> to vector<16x256xf32>
    %26 = arith.mulf %24, %25 : vector<16x256xf32>
    %27 = arith.addf %26, %23 : vector<16x256xf32>
    %c0_9 = arith.constant 0 : index
    %c0_10 = arith.constant 0 : index
    %c0_11 = arith.constant 0 : index
    %28 = vector.load %arg7[%c0_9, %c0_10, %c0_11] : memref<1x16x256xf32, #tpu.memory_space<vmem>>, vector<1x16x256xf32>
    %29 = vector.shape_cast %28 : vector<1x16x256xf32> to vector<16x256xf32>
    %30 = vector.shape_cast %27 : vector<16x256xf32> to vector<1x16x256xf32>
    tpu.vector_store %arg7[%c0_9, %c0_10, %c0_11], %30 {strides = array<i32>} : memref<1x16x256xf32, #tpu.memory_space<vmem>>, vector<1x16x256xf32>,
    return
  }
  func.func @transform_0(%arg0: i32, %arg1: i32) -> (i32, i32, i32) {
    %c0_i32 = arith.constant 0 : i32
    %c0_i32_0 = arith.constant 0 : i32
    %c0_i32_1 = arith.constant 0 : i32
    return %arg0, %c0_i32, %c0_i32_0 : i32, i32, i32
  }
  func.func @transform_1(%arg0: i32, %arg1: i32) -> (i32, i32) {
    %c0_i32 = arith.constant 0 : i32
    %c0_i32_0 = arith.constant 0 : i32
    %c0_i32_1 = arith.constant 0 : i32
    return %c0_i32, %c0_i32_0 : i32, i32
  }
  func.func @transform_2(%arg0: i32, %arg1: i32) -> (i32, i32) {
    %c0_i32 = arith.constant 0 : i32
    %c0_i32_0 = arith.constant 0 : i32
    %c0_i32_1 = arith.constant 0 : i32
    return %c0_i32, %c0_i32_0 : i32, i32
  }
  func.func @transform_3(%arg0: i32, %arg1: i32) -> (i32, i32) {
    %c0_i32 = arith.constant 0 : i32
    %c0_i32_0 = arith.constant 0 : i32
    %c0_i32_1 = arith.constant 0 : i32
    return %c0_i32, %c0_i32_0 : i32, i32
  }
  func.func @transform_4(%arg0: i32, %arg1: i32) -> (i32, i32) {
    %c0_i32 = arith.constant 0 : i32
    %c0_i32_0 = arith.constant 0 : i32
    %c0_i32_1 = arith.constant 0 : i32
    return %c0_i32, %c0_i32_0 : i32, i32
  }
  func.func @transform_5(%arg0: i32, %arg1: i32) -> (i32, i32, i32) {
    %c0_i32 = arith.constant 0 : i32
    %c0_i32_0 = arith.constant 0 : i32
    return %arg0, %c0_i32, %arg1 : i32, i32, i32
  }
}

</mosaic_0001>

<llo_original>
// kernel: tpu_custom_call.1
$region0: #{tpu_custom_call.1}
  #allocation0 [shape = 'u32[]', space=smem, size = 0x4, offset = 0x4, fixed_abs, tag = 'smem constant byte address 0x4 - core index']
  #allocation1 [shape = 'u32[144,128]{1,0:T(1,128)}', space=vmem, size = 0x12000, scoped, tag = 'internal scratch']
  #allocation2 [shape = 'f32[40,256]{1,0:T(8,128)}', space=vmem, size = 0xa000, scoped, tag = 'scratch operand']
  #allocation3 [shape = 'f32[1,1]{1,0:T(1,128)S(6)}', space=smem, size = 0x200, scoped, tag = 'scoped memory for tpu_custom_call.1']
  %s0 = inlined_call_operand.hbm [shape: f32[2,16,256], index: 0, kind: input, shape index: {}]
  %s1 = inlined_call_operand.hbm [shape: f32[40,144], index: 1, kind: input, shape index: {}]
  %s2 = inlined_call_operand.vmem [shape: f32[40,1], index: 2, kind: input, shape index: {}]
  %s3 = inlined_call_operand.vmem [shape: f32[9,256], index: 3, kind: input, shape index: {}]
  %s4 = inlined_call_operand.<no memory space> [shape: f32[1,1], index: 4, kind: input, shape index: {}]
  %s5 = inlined_call_operand.hbm [shape: f32[2,16,256], index: 5, kind: output, shape index: {}]
  %s6 = sld [smem:[#allocation0]]
  $region65: #{tpu_custom_call.1} parent=0
    _
  %s8 = ssub.s32 1, %s6
  %s9 = scalar_select 0, %s8, %s6
  %10 = sst [smem:[#allocation3]] %s4
  $region1: #{tpu_custom_call.1} parent=0
    #allocation4 [shape = 'u8[32768]{0}', space=vmem, size = 0x8000, scoped, tag = 'input window, operand 0']
    #allocation5 [shape = 's32[2]{0}', space=sflag, size = 0x8, scoped, tag = 'scoped memory for tpu_custom_call.1']
    #allocation6 [shape = 's32[2]{0}', space=sflag, size = 0x8, scoped, tag = 'scoped memory for tpu_custom_call.1']
    #allocation7 [shape = 'u8[40960]{0}', space=vmem, size = 0xa000, scoped, tag = 'input window, operand 1, single buffered']
    #allocation8 [shape = 's32[1]{0}', space=sflag, size = 0x4, scoped, tag = 'scoped memory for tpu_custom_call.1']
    #allocation9 [shape = 'u8[32768]{0}', space=vmem, size = 0x8000, scoped, tag = 'output window, operand 0']
    %11 = vsyncpa [#allocation5], 0
    %s12 = scalar_lea.sflag [#allocation5], 1
    %13 = vsyncpa %s12, 0
    %14 = vsyncpa [#allocation8], 0
    %15 = vsyncpa [#allocation6], 0
    %s16 = scalar_lea.sflag [#allocation6], 1
    %17 = vsyncpa %s16, 0
    loop: start=0, step=1, limit=4
    $region2: #{tpu_custom_call.1} parent=1 // loop_pre_header
      _
    $region3: #{tpu_custom_call.1} parent=1 // loop_header
      %s19 = sphi 0, %s23
      %p20 = scmp.ge.s32.totalorder %s19, 4
      %s26 = sphi 0, %s38
      %s27 = sphi 0, %s34
      %s28 = sphi 0, %s26
      %s29 = sphi 0, %s27
      %s30 = sphi 0, %s28
      %s31 = sphi 0, %s29
      %s41 = sphi 0, %s43
      %s44 = sphi 0, %s41
      %s45 = sphi 0, %s44
      %s61 = sphi 0, %s45
      %s65 = sphi 0, %s65
      %s67 = sphi 0, %s65
      %s68 = sphi 0, %s67
      %s82 = sphi 0, %s68
      %s86 = sphi 0, %s86
      %s88 = sphi 0, %s86
      %s89 = sphi 0, %s88
      %s103 = sphi 0, %s89
      %s107 = sphi 0, %s107
      %s109 = sphi 0, %s107
      %s110 = sphi 0, %s109
      %s124 = sphi 0, %s110
      %s128 = sphi 0, %s128
      %s130 = sphi 0, %s128
      %s131 = sphi 0, %s130
      %s145 = sphi 0, %s131
      %s153 = sphi 0, %s155
      %s156 = sphi 0, %s153
      %s157 = sphi 0, %s156
      %s173 = sphi 0, %s157
    $region4: #{tpu_custom_call.1} parent=1 // loop_header_branch
      %22 = sbr.rel (%p20) target = $region8
    $region5: #{tpu_custom_call.1} parent=1 // loop_body
      %s24 = ssub.s32 %s19, 1
      %s25 = ssub.s32 %s19, 2
      %s32 = sadd.s32 1, %s27
      %p33 = scmp.ge.s32.totalorder %s32, 1
      %s34 = scalar_select %p33, 0, %s32
      %s35 = sadd.s32 1, %s26
      %s36 = scalar_select %p33, %s35, %s26
      %p37 = scmp.ge.s32.totalorder %s36, 2
      %s38 = scalar_select %p37, 0, %s36
      %s39 = ssub.s32 %s26, %s38
      %p40 = scmp.eq.s32.totalorder %s39, 0
      %s42 = sadd.s32 %s41, 1
      %s43 = scalar_select %p40, %s41, %s42
      %p46 = pneg %p40
      %p47 = scmp.eq.s32.totalorder %s19, 1
      %p48 = por %p46, %p47
      %p49 = scmp.ne.s32.totalorder %s41, %s44
      %p50 = scmp.eq.s32.totalorder %s19, 0
      %p51 = por %p49, %p50
      %p52 = scmp.ne.s32.totalorder %s41, %s44
      %p53 = scmp.eq.s32.totalorder %s24, 1
      %p54 = por %p52, %p53
      %p55 = scmp.ne.s32.totalorder %s44, %s45
      %p56 = scmp.eq.s32.totalorder %s24, 0
      %p57 = por %p55, %p56
      %p58 = scmp.ne.s32.totalorder %s44, %s45
      %p59 = scmp.eq.s32.totalorder %s25, 1
      %p60 = por %p58, %p59
      %p62 = scmp.ne.s32.totalorder %s45, %s61
      %p63 = scmp.eq.s32.totalorder %s25, 0
      %p64 = por %p62, %p63
      %s66 = sadd.s32 %s65, 1
      %p69 = scmp.eq.s32.totalorder %s19, 1
      %p70 = scmp.ne.s32.totalorder %s65, %s67
      %p71 = scmp.eq.s32.totalorder %s19, 0
      %p72 = por %p70, %p71
      %p73 = scmp.ne.s32.totalorder %s65, %s67
      %p74 = scmp.eq.s32.totalorder %s24, 1
      %p75 = por %p73, %p74
      %p76 = scmp.ne.s32.totalorder %s67, %s68
      %p77 = scmp.eq.s32.totalorder %s24, 0
      %p78 = por %p76, %p77
      %p79 = scmp.ne.s32.totalorder %s67, %s68
      %p80 = scmp.eq.s32.totalorder %s25, 1
      %p81 = por %p79, %p80
      %p83 = scmp.ne.s32.totalorder %s68, %s82
      %p84 = scmp.eq.s32.totalorder %s25, 0
      %p85 = por %p83, %p84
      %s87 = sadd.s32 %s86, 1
      %p90 = scmp.eq.s32.totalorder %s19, 1
      %p91 = scmp.ne.s32.totalorder %s86, %s88
      %p92 = scmp.eq.s32.totalorder %s19, 0
      %p93 = por %p91, %p92
      %p94 = scmp.ne.s32.totalorder %s86, %s88
      %p95 = scmp.eq.s32.totalorder %s24, 1
      %p96 = por %p94, %p95
      %p97 = scmp.ne.s32.totalorder %s88, %s89
      %p98 = scmp.eq.s32.totalorder %s24, 0
      %p99 = por %p97, %p98
      %p100 = scmp.ne.s32.totalorder %s88, %s89
      %p101 = scmp.eq.s32.totalorder %s25, 1
      %p102 = por %p100, %p101
      %p104 = scmp.ne.s32.totalorder %s89, %s103
      %p105 = scmp.eq.s32.totalorder %s25, 0
      %p106 = por %p104, %p105
      %s108 = sadd.s32 %s107, 1
      %p111 = scmp.eq.s32.totalorder %s19, 1
      %p112 = scmp.ne.s32.totalorder %s107, %s109
      %p113 = scmp.eq.s32.totalorder %s19, 0
      %p114 = por %p112, %p113
      %p115 = scmp.ne.s32.totalorder %s107, %s109
      %p116 = scmp.eq.s32.totalorder %s24, 1
      %p117 = por %p115, %p116
      %p118 = scmp.ne.s32.totalorder %s109, %s110
      %p119 = scmp.eq.s32.totalorder %s24, 0
      %p120 = por %p118, %p119
      %p121 = scmp.ne.s32.totalorder %s109, %s110
      %p122 = scmp.eq.s32.totalorder %s25, 1
      %p123 = por %p121, %p122
      %p125 = scmp.ne.s32.totalorder %s110, %s124
      %p126 = scmp.eq.s32.totalorder %s25, 0
      %p127 = por %p125, %p126
      %s129 = sadd.s32 %s128, 1
      %p132 = scmp.eq.s32.totalorder %s19, 1
      %p133 = scmp.ne.s32.totalorder %s128, %s130
      %p134 = scmp.eq.s32.totalorder %s19, 0
      %p135 = por %p133, %p134
      %p136 = scmp.ne.s32.totalorder %s128, %s130
      %p137 = scmp.eq.s32.totalorder %s24, 1
      %p138 = por %p136, %p137
      %p139 = scmp.ne.s32.totalorder %s130, %s131
      %p140 = scmp.eq.s32.totalorder %s24, 0
      %p141 = por %p139, %p140
      %p142 = scmp.ne.s32.totalorder %s130, %s131
      %p143 = scmp.eq.s32.totalorder %s25, 1
      %p144 = por %p142, %p143
      %p146 = scmp.ne.s32.totalorder %s131, %s145
      %p147 = scmp.eq.s32.totalorder %s25, 0
      %p148 = por %p146, %p147
      %s149 = ssub.s32 %s26, %s38
      %s150 = ssub.s32 %s27, %s34
      %s151 = sor.u32 %s149, %s150
      %p152 = scmp.eq.s32.totalorder %s151, 0
      %s154 = sadd.s32 %s153, 1
      %s155 = scalar_select %p152, %s153, %s154
      %p158 = pneg %p152
      %p159 = scmp.eq.s32.totalorder %s19, 1
      %p160 = por %p158, %p159
      %p161 = scmp.ne.s32.totalorder %s153, %s156
      %p162 = scmp.eq.s32.totalorder %s19, 0
      %p163 = por %p161, %p162
      %p164 = scmp.ne.s32.totalorder %s153, %s156
      %p165 = scmp.eq.s32.totalorder %s24, 1
      %p166 = por %p164, %p165
      %p167 = scmp.ne.s32.totalorder %s156, %s157
      %p168 = scmp.eq.s32.totalorder %s24, 0
      %p169 = por %p167, %p168
      %p170 = scmp.ne.s32.totalorder %s156, %s157
      %p171 = scmp.eq.s32.totalorder %s25, 1
      %p172 = por %p170, %p171
      %p174 = scmp.ne.s32.totalorder %s157, %s173
      %p175 = scmp.eq.s32.totalorder %s25, 0
      %p176 = por %p174, %p175
      %p177 = scmp.le.s32.totalorder 1, %s19
      %p178 = scmp.lt.s32.totalorder %s19, 3
      %p179 = pnand %p177, %p178
      %p180 = pneg %p179
      // Predicated region
      $region9: #{tpu_custom_call.1} parent=5 // pred_check
        _
      $region10: #{tpu_custom_call.1} parent=5 // pred_check_branch
        %182 = sbr.rel (%p179) target = $region12
      $region11: #{tpu_custom_call.1} parent=5 // pred_region
        %s183 = ssub.s32 %s19, 1
        // Predicated region
        $region13: #{tpu_custom_call.1} parent=11 // pred_check
          %p184 = pneg %p78
        $region14: #{tpu_custom_call.1} parent=11 // pred_check_branch
          %186 = sbr.rel (%p184) target = $region16
        $region15: #{tpu_custom_call.1} parent=11 // pred_region
          %s188 = ssub.s32 1280, 1280
          %189 = vsyncadd [#allocation8], %s188
          %s190 = sshll.u32 [#allocation7], 4
          %s191 = int_to_ptr.vmem [resolvable:$true] %s190
          %196 = dma.hbm_to_vmem [thread:$0]  %s1, 1280, %s191, [#allocation8], 256, 256, 16
        $region16: #{tpu_custom_call.1} parent=11 // pred_fallthru
          _
        // Predicated region
        $region17: #{tpu_custom_call.1} parent=11 // pred_check
          %p197 = pneg %p99
        $region18: #{tpu_custom_call.1} parent=11 // pred_check_branch
          %199 = sbr.rel (%p197) target = $region20
        $region19: #{tpu_custom_call.1} parent=11 // pred_region
          _
        $region20: #{tpu_custom_call.1} parent=11 // pred_fallthru
          _
        // Predicated region
        $region21: #{tpu_custom_call.1} parent=11 // pred_check
          %p200 = pneg %p120
        $region22: #{tpu_custom_call.1} parent=11 // pred_check_branch
          %202 = sbr.rel (%p200) target = $region24
        $region23: #{tpu_custom_call.1} parent=11 // pred_region
          _
        $region24: #{tpu_custom_call.1} parent=11 // pred_fallthru
          _
        // Predicated region
        $region25: #{tpu_custom_call.1} parent=11 // pred_check
          %p203 = pneg %p141
        $region26: #{tpu_custom_call.1} parent=11 // pred_check_branch
          %205 = sbr.rel (%p203) target = $region28
        $region27: #{tpu_custom_call.1} parent=11 // pred_region
          _
        $region28: #{tpu_custom_call.1} parent=11 // pred_fallthru
          _
      $region12: #{tpu_custom_call.1} parent=5 // pred_fallthru
        _
      %p206 = scmp.lt.s32.totalorder %s19, 2
      // Predicated region
      $region29: #{tpu_custom_call.1} parent=5 // pred_check
        %p207 = pneg %p206
      $region30: #{tpu_custom_call.1} parent=5 // pred_check_branch
        %209 = sbr.rel (%p207) target = $region32
      $region31: #{tpu_custom_call.1} parent=5 // pred_region
        // Predicated region
        $region33: #{tpu_custom_call.1} parent=31 // pred_check
          %p210 = pneg %p51
        $region34: #{tpu_custom_call.1} parent=31 // pred_check_branch
          %212 = sbr.rel (%p210) target = $region36
        $region35: #{tpu_custom_call.1} parent=31 // pred_region
          %s213 = sand.u32 %s41, 1
          %s214 = scalar_lea.sflag [#allocation5], %s213
          %s215 = sand.u32 %s41, 1
          %s216 = smul.addr %s215, 32
          %s217 = scalar_lea.vmem [#allocation4], %s216
          %s219 = ssub.s32 512, 512
          %220 = vsyncadd %s214, %s219
          %s221 = smul.addr %s26, 4
          %s222 = smul.addr %s221, 128
          %s223 = scalar_lea.hbm %s0, %s222
          %s224 = sshll.u32 %s217, 4
          %s225 = int_to_ptr.vmem [resolvable:$true] %s224
          %230 = dma.hbm_to_vmem [thread:$0]  %s223, 512, %s225, %s214, 256, 256, 16
        $region36: #{tpu_custom_call.1} parent=31 // pred_fallthru
          _
      $region32: #{tpu_custom_call.1} parent=5 // pred_fallthru
        _
      %p231 = scmp.le.s32.totalorder 1, %s19
      %p232 = scmp.lt.s32.totalorder %s19, 3
      %p233 = pnand %p231, %p232
      %p234 = pneg %p233
      // Predicated region
      $region37: #{tpu_custom_call.1} parent=5 // pred_check
        _
      $region38: #{tpu_custom_call.1} parent=5 // pred_check_branch
        %236 = sbr.rel (%p233) target = $region40
      $region39: #{tpu_custom_call.1} parent=5 // pred_region
        %s237 = ssub.s32 %s19, 1
        %s238 = sand.u32 %s44, 1
        %s239 = scalar_lea.sflag [#allocation5], %s238
        %s240 = sand.u32 %s44, 1
        %s241 = smul.addr %s240, 32
        %s242 = scalar_lea.vmem [#allocation4], %s241
        // Predicated region
        $region41: #{tpu_custom_call.1} parent=39 // pred_check
          %p243 = pneg %p57
        $region42: #{tpu_custom_call.1} parent=39 // pred_check_branch
          %245 = sbr.rel (%p243) target = $region44
        $region43: #{tpu_custom_call.1} parent=39 // pred_region
          %246 = dma.done %s239, 512
        $region44: #{tpu_custom_call.1} parent=39 // pred_fallthru
          _
        // Predicated region
        $region45: #{tpu_custom_call.1} parent=39 // pred_check
          %p247 = pneg %p78
        $region46: #{tpu_custom_call.1} parent=39 // pred_check_branch
          %249 = sbr.rel (%p247) target = $region48
        $region47: #{tpu_custom_call.1} parent=39 // pred_region
          %250 = dma.done [#allocation8], 1280
        $region48: #{tpu_custom_call.1} parent=39 // pred_fallthru
          _
        %s251 = sand.u32 %s44, 1
        %s252 = scalar_lea.sflag [#allocation5], %s251
        %s253 = sand.u32 %s44, 1
        %s254 = smul.addr %s253, 32
        %s255 = scalar_lea.vmem [#allocation4], %s254
        %p256 = pneg %p57
        %p257 = pneg %p54
        %p258 = pneg %p78
        %p259 = pneg %p75
        %p260 = pneg %p99
        %p261 = pneg %p96
        %p262 = pneg %p120
        %p263 = pneg %p117
        %p264 = pneg %p141
        %p265 = pneg %p138
        %p266 = pneg %p169
        %p267 = pneg %p166
        %s268 = sand.u32 %s156, 1
        %s269 = scalar_lea.sflag [#allocation6], %s268
        %s270 = sand.u32 %s156, 1
        %s271 = smul.addr %s270, 32
        %s272 = scalar_lea.vmem [#allocation9], %s271
        %s273 = smul.u32 2, %s29
        %p274 = scmp.eq.s32.totalorder %s29, 0
        // Predicated region
        $region49: #{tpu_custom_call.1} parent=39 // pred_check
          %p275 = pneg %p274
        $region50: #{tpu_custom_call.1} parent=39 // pred_check_branch
          %277 = sbr.rel (%p275) target = $region52
        $region51: #{tpu_custom_call.1} parent=39 // pred_region
          %v278 = vld [vmem:[%s242] sm:$0xff]
          %v279 = vld [vmem:[%s242 + $0x8] sm:$0xff]
          %v280 = vld [vmem:[%s242 + $0x10] sm:$0xff]
          %v281 = vld [vmem:[%s242 + $0x18] sm:$0xff]
          %282 = vrot.lane.b32.xlu0 %v278, 17
          %v283 = vpop.permute.xlu0 %282
          %284 = vrot.lane.b32.xlu0 %v280, 17
          %v285 = vpop.permute.xlu0 %284
          %286 = vrot.lane.b32.xlu0 %v279, 17
          %v287 = vpop.permute.xlu0 %286
          %288 = vrot.lane.b32.xlu0 %v281, 17
          %v289 = vpop.permute.xlu0 %288
          %v290 = vlaneseq
          %v291 = vand.u32 %v290, 127
          %vm292 = vcmp.lt.s32.totalorder %v291, 17
          %v293 = vsel %vm292, %v283, %v287
          %v294 = vsel %vm292, %v285, %v289
          %v295 = vsel %vm292, %v287, %v283
          %v296 = vsel %vm292, %v289, %v285
          %v297 = vld [vmem:[%s3] ss:$8 sm:$0x3]
          %v299 = vlaneseq
          %v300 = vshrl.u32 %v299, 7
          %v301 = vsub.s32 0, %v300
          %v302 = vrot.slane %v297, %v301
          %v303 = vlaneseq
          %v304 = vshrl.u32 %v303, 7
          %v305 = vsub.s32 1, %v304
          %v306 = vrot.slane %v297, %v305
          %v309 = vmul.f32 %v295, %v302
          %v310 = vmul.f32 %v293, %v306
          %v311 = vmul.f32 %v296, %v302
          %v312 = vmul.f32 %v294, %v306
          %313 = vrot.lane.b32.xlu0 %v278, 16
          %v314 = vpop.permute.xlu0 %313
          %315 = vrot.lane.b32.xlu0 %v280, 16
          %v316 = vpop.permute.xlu0 %315
          %317 = vrot.lane.b32.xlu0 %v279, 16
          %v318 = vpop.permute.xlu0 %317
          %319 = vrot.lane.b32.xlu0 %v281, 16
          %v320 = vpop.permute.xlu0 %319
          %vm321 = vcmp.lt.s32.totalorder %v291, 16
          %v322 = vsel %vm321, %v314, %v318
          %v323 = vsel %vm321, %v316, %v320
          %v324 = vsel %vm321, %v318, %v314
          %v325 = vsel %vm321, %v320, %v316
          %s326 = scalar_lea.vmem %s3, 1
          %v327 = vld [vmem:[%s326] ss:$8 sm:$0x3]
          %v329 = vlaneseq
          %v330 = vshrl.u32 %v329, 7
          %v331 = vsub.s32 0, %v330
          %v332 = vrot.slane %v327, %v331
          %v333 = vlaneseq
          %v334 = vshrl.u32 %v333, 7
          %v335 = vsub.s32 1, %v334
          %v336 = vrot.slane %v327, %v335
          %v339 = vmul.f32 %v324, %v332
          %v340 = vmul.f32 %v322, %v336
          %v341 = vmul.f32 %v325, %v332
          %v342 = vmul.f32 %v323, %v336
          %343 = vrot.lane.b32.xlu0 %v278, 15
          %v344 = vpop.permute.xlu0 %343
          %345 = vrot.lane.b32.xlu0 %v280, 15
          %v346 = vpop.permute.xlu0 %345
          %347 = vrot.lane.b32.xlu0 %v279, 15
          %v348 = vpop.permute.xlu0 %347
          %349 = vrot.lane.b32.xlu0 %v281, 15
          %v350 = vpop.permute.xlu0 %349
          %vm351 = vcmp.lt.s32.totalorder %v291, 15
          %v352 = vsel %vm351, %v344, %v348
          %v353 = vsel %vm351, %v346, %v350
          %v354 = vsel %vm351, %v348, %v344
          %v355 = vsel %vm351, %v350, %v346
          %s356 = scalar_lea.vmem %s3, 2
          %v357 = vld [vmem:[%s356] ss:$8 sm:$0x3]
          %v359 = vlaneseq
          %v360 = vshrl.u32 %v359, 7
          %v361 = vsub.s32 0, %v360
          %v362 = vrot.slane %v357, %v361
          %v363 = vlaneseq
          %v364 = vshrl.u32 %v363, 7
          %v365 = vsub.s32 1, %v364
          %v366 = vrot.slane %v357, %v365
          %v369 = vmul.f32 %v354, %v362
          %v370 = vmul.f32 %v352, %v366
          %v371 = vmul.f32 %v355, %v362
          %v372 = vmul.f32 %v353, %v366
          %373 = vrot.lane.b32.xlu0 %v278, 1
          %v374 = vpop.permute.xlu0 %373
          %375 = vrot.lane.b32.xlu0 %v280, 1
          %v376 = vpop.permute.xlu0 %375
          %377 = vrot.lane.b32.xlu0 %v279, 1
          %v378 = vpop.permute.xlu0 %377
          %379 = vrot.lane.b32.xlu0 %v281, 1
          %v380 = vpop.permute.xlu0 %379
          %vm381 = vcmp.lt.s32.totalorder %v291, 1
          %v382 = vsel %vm381, %v374, %v378
          %v383 = vsel %vm381, %v376, %v380
          %v384 = vsel %vm381, %v378, %v374
          %v385 = vsel %vm381, %v380, %v376
          %s386 = scalar_lea.vmem %s3, 3
          %v387 = vld [vmem:[%s386] ss:$8 sm:$0x3]
          %v389 = vlaneseq
          %v390 = vshrl.u32 %v389, 7
          %v391 = vsub.s32 0, %v390
          %v392 = vrot.slane %v387, %v391
          %v393 = vlaneseq
          %v394 = vshrl.u32 %v393, 7
          %v395 = vsub.s32 1, %v394
          %v396 = vrot.slane %v387, %v395
          %v399 = vmul.f32 %v384, %v392
          %v400 = vmul.f32 %v382, %v396
          %v401 = vmul.f32 %v385, %v392
          %v402 = vmul.f32 %v383, %v396
          %s403 = scalar_lea.vmem %s3, 4
          %v404 = vld [vmem:[%s403] ss:$8 sm:$0x3]
          %v406 = vlaneseq
          %v407 = vshrl.u32 %v406, 7
          %v408 = vsub.s32 0, %v407
          %v409 = vrot.slane %v404, %v408
          %v410 = vlaneseq
          %v411 = vshrl.u32 %v410, 7
          %v412 = vsub.s32 1, %v411
          %v413 = vrot.slane %v404, %v412
          %v416 = vmul.f32 %v278, %v409
          %v417 = vmul.f32 %v279, %v413
          %v418 = vmul.f32 %v280, %v409
          %v419 = vmul.f32 %v281, %v413
          %420 = vrot.lane.b32.xlu0 %v278, 127
          %v421 = vpop.permute.xlu0 %420
          %422 = vrot.lane.b32.xlu0 %v280, 127
          %v423 = vpop.permute.xlu0 %422
          %424 = vrot.lane.b32.xlu0 %v279, 127
          %v425 = vpop.permute.xlu0 %424
          %426 = vrot.lane.b32.xlu0 %v281, 127
          %v427 = vpop.permute.xlu0 %426
          %vm428 = vcmp.lt.s32.totalorder %v291, 127
          %v429 = vsel %vm428, %v421, %v425
          %v430 = vsel %vm428, %v423, %v427
          %v431 = vsel %vm428, %v425, %v421
          %v432 = vsel %vm428, %v427, %v423
          %s433 = scalar_lea.vmem %s3, 5
          %v434 = vld [vmem:[%s433] ss:$8 sm:$0x3]
          %v436 = vlaneseq
          %v437 = vshrl.u32 %v436, 7
          %v438 = vsub.s32 0, %v437
          %v439 = vrot.slane %v434, %v438
          %v440 = vlaneseq
          %v441 = vshrl.u32 %v440, 7
          %v442 = vsub.s32 1, %v441
          %v443 = vrot.slane %v434, %v442
          %v446 = vmul.f32 %v429, %v439
          %v447 = vmul.f32 %v431, %v443
          %v448 = vmul.f32 %v430, %v439
          %v449 = vmul.f32 %v432, %v443
          %450 = vrot.lane.b32.xlu0 %v278, 113
          %v451 = vpop.permute.xlu0 %450
          %452 = vrot.lane.b32.xlu0 %v280, 113
          %v453 = vpop.permute.xlu0 %452
          %454 = vrot.lane.b32.xlu0 %v279, 113
          %v455 = vpop.permute.xlu0 %454
          %456 = vrot.lane.b32.xlu0 %v281, 113
          %v457 = vpop.permute.xlu0 %456
          %vm458 = vcmp.lt.s32.totalorder %v291, 113
          %v459 = vsel %vm458, %v451, %v455
          %v460 = vsel %vm458, %v453, %v457
          %v461 = vsel %vm458, %v455, %v451
          %v462 = vsel %vm458, %v457, %v453
          %s463 = scalar_lea.vmem %s3, 6
          %v464 = vld [vmem:[%s463] ss:$8 sm:$0x3]
          %v466 = vlaneseq
          %v467 = vshrl.u32 %v466, 7
          %v468 = vsub.s32 0, %v467
          %v469 = vrot.slane %v464, %v468
          %v470 = vlaneseq
          %v471 = vshrl.u32 %v470, 7
          %v472 = vsub.s32 1, %v471
          %v473 = vrot.slane %v464, %v472
          %v476 = vmul.f32 %v459, %v469
          %v477 = vmul.f32 %v461, %v473
          %v478 = vmul.f32 %v460, %v469
          %v479 = vmul.f32 %v462, %v473
          %480 = vrot.lane.b32.xlu0 %v278, 112
          %v481 = vpop.permute.xlu0 %480
          %482 = vrot.lane.b32.xlu0 %v280, 112
          %v483 = vpop.permute.xlu0 %482
          %484 = vrot.lane.b32.xlu0 %v279, 112
          %v485 = vpop.permute.xlu0 %484
          %486 = vrot.lane.b32.xlu0 %v281, 112
          %v487 = vpop.permute.xlu0 %486
          %vm488 = vcmp.lt.s32.totalorder %v291, 112
          %v489 = vsel %vm488, %v481, %v485
          %v490 = vsel %vm488, %v483, %v487
          %v491 = vsel %vm488, %v485, %v481
          %v492 = vsel %vm488, %v487, %v483
          %s493 = scalar_lea.vmem %s3, 7
          %v494 = vld [vmem:[%s493] ss:$8 sm:$0x3]
          %v496 = vlaneseq
          %v497 = vshrl.u32 %v496, 7
          %v498 = vsub.s32 0, %v497
          %v499 = vrot.slane %v494, %v498
          %v500 = vlaneseq
          %v501 = vshrl.u32 %v500, 7
          %v502 = vsub.s32 1, %v501
          %v503 = vrot.slane %v494, %v502
          %v506 = vmul.f32 %v489, %v499
          %v507 = vmul.f32 %v491, %v503
          %v508 = vmul.f32 %v490, %v499
          %v509 = vmul.f32 %v492, %v503
          %510 = vrot.lane.b32.xlu0 %v278, 111
          %v511 = vpop.permute.xlu0 %510
          %512 = vrot.lane.b32.xlu0 %v280, 111
          %v513 = vpop.permute.xlu0 %512
          %514 = vrot.lane.b32.xlu0 %v279, 111
          %v515 = vpop.permute.xlu0 %514
          %516 = vrot.lane.b32.xlu0 %v281, 111
          %v517 = vpop.permute.xlu0 %516
          %vm518 = vcmp.lt.s32.totalorder %v291, 111
          %v519 = vsel %vm518, %v511, %v515
          %v520 = vsel %vm518, %v513, %v517
          %v521 = vsel %vm518, %v515, %v511
          %v522 = vsel %vm518, %v517, %v513
          %s523 = scalar_lea.vmem %s3, 16
          %v524 = vld [vmem:[%s523] ss:$8 sm:$0x3]
          %v526 = vlaneseq
          %v527 = vshrl.u32 %v526, 7
          %v528 = vsub.s32 0, %v527
          %v529 = vrot.slane %v524, %v528
          %v530 = vlaneseq
          %v531 = vshrl.u32 %v530, 7
          %v532 = vsub.s32 1, %v531
          %v533 = vrot.slane %v524, %v532
          %v536 = vmul.f32 %v519, %v529
          %v537 = vmul.f32 %v521, %v533
          %v538 = vmul.f32 %v520, %v529
          %v539 = vmul.f32 %v522, %v533
          %v540 = vld [vmem:[#allocation7] sm:$0xff]
          %v541 = vld [vmem:[#allocation7 + $0x8] sm:$0xff]
          %v542 = vld [vmem:[#allocation7 + $0x10] sm:$0xff]
          %v543 = vld [vmem:[#allocation7 + $0x18] sm:$0xff]
          %v544 = vld [vmem:[#allocation7 + $0x20] sm:$0xff]
          %v545 = vld [vmem:[#allocation7 + $0x28] sm:$0xff]
          %v546 = vld [vmem:[#allocation7 + $0x30] sm:$0xff]
          %v547 = vld [vmem:[#allocation7 + $0x38] sm:$0xff]
          %v548 = vld [vmem:[#allocation7 + $0x40] sm:$0xff]
          %v549 = vld [vmem:[#allocation7 + $0x48] sm:$0xff]
          %v550 = vld [vmem:[%s2] sm:$0xff]
          %v551 = vld [vmem:[%s2 + $0x8] sm:$0xff]
          %v552 = vld [vmem:[%s2 + $0x10] sm:$0xff]
          %v553 = vld [vmem:[%s2 + $0x18] sm:$0xff]
          %v554 = vld [vmem:[%s2 + $0x20] sm:$0xff]
          %556 = vset.pattern.permute.xlu0 0
          %557 = vperm.xlu0 %556, %v550
          %v558 = vpop.permute.xlu0 %557
          %561 = vset.pattern.permute.xlu0 0
          %562 = vperm.xlu0 %561, %v551
          %v563 = vpop.permute.xlu0 %562
          %566 = vset.pattern.permute.xlu0 0
          %567 = vperm.xlu0 %566, %v552
          %v568 = vpop.permute.xlu0 %567
          %571 = vset.pattern.permute.xlu0 0
          %572 = vperm.xlu0 %571, %v553
          %v573 = vpop.permute.xlu0 %572
          %576 = vset.pattern.permute.xlu0 0
          %577 = vperm.xlu0 %576, %v554
          %v578 = vpop.permute.xlu0 %577
          %vm580 = vcmask 130048
          %v582 = vsel %vm580, %v541, 0
          %v585 = vsel %vm580, %v543, 0
          %v588 = vsel %vm580, %v545, 0
          %v591 = vsel %vm580, %v547, 0
          %v594 = vsel %vm580, %v549, 0
          %596 = vmatprep.subr.mxu0 %v509
          %597 = vmatpush1.msra.mxu0 %v508
          %598 = vmatprep.subr.mxu0 %v507
          %599 = vmatpush1.msra.mxu0 %v506
          %600 = vmatprep.subr.mxu0 %v479
          %601 = vmatpush1.msra.mxu0 %v478
          %602 = vmatprep.subr.mxu0 %v477
          %603 = vmatpush1.msra.mxu0 %v476
          %604 = vmatprep.subr.mxu0 %v449
          %605 = vmatpush1.msra.mxu0 %v448
          %606 = vmatprep.subr.mxu0 %v447
          %607 = vmatpush1.msra.mxu0 %v446
          %608 = vmatprep.subr.mxu0 %v419
          %609 = vmatpush1.msra.mxu0 %v418
          %610 = vmatprep.subr.mxu0 %v417
          %611 = vmatpush1.msra.mxu0 %v416
          %612 = vmatprep.subr.mxu0 %v402
          %613 = vmatpush1.msra.mxu0 %v401
          %614 = vmatprep.subr.mxu0 %v400
          %615 = vmatpush1.msra.mxu0 %v399
          %616 = vmatprep.subr.mxu0 %v372
          %617 = vmatpush1.msra.mxu0 %v371
          %618 = vmatprep.subr.mxu0 %v370
          %619 = vmatpush1.msra.mxu0 %v369
          %620 = vmatprep.subr.mxu0 %v342
          %621 = vmatpush1.msra.mxu0 %v341
          %622 = vmatprep.subr.mxu0 %v340
          %623 = vmatpush1.msra.mxu0 %v339
          %624 = vmatprep.subr.mxu0 %v312
          %625 = vmatpush1.msra.mxu0 %v311
          %626 = vmatprep.subr.mxu0 %v310
          %627 = vmatpush1.msra.mxu0 %v309
          %628 = vmatprep.subr.mxu0 0.0
          %629 = vmatpush2.msra.mxu0 0.0
          %630 = vmatprep.subr.mxu0 0.0
          %631 = vmatpush2.msra.mxu0 0.0
          %632 = vmatprep.subr.mxu0 0.0
          %633 = vmatpush2.msra.mxu0 0.0
          %634 = vmatprep.subr.mxu0 0.0
          %635 = vmatpush2.msra.mxu0 0.0
          %636 = vmatprep.subr.mxu0 0.0
          %637 = vmatpush2.msra.mxu0 0.0
          %638 = vmatprep.subr.mxu0 0.0
          %639 = vmatpush2.msra.mxu0 0.0
          %640 = vmatprep.subr.mxu0 0.0
          %641 = vmatpush2.msra.mxu0 0.0
          %642 = vmatprep.subr.mxu0 0.0
          %643 = vmatpush2.msra.mxu0 0.0
          %644 = vmatprep.subr.mxu0 0.0
          %645 = vmatpush2.msra.mxu0 0.0
          %646 = vmatprep.subr.mxu0 0.0
          %647 = vmatpush2.msra.mxu0 0.0
          %648 = vmatprep.subr.mxu0 0.0
          %649 = vmatpush2.msra.mxu0 0.0
          %650 = vmatprep.subr.mxu0 0.0
          %651 = vmatpush2.msra.mxu0 0.0
          %652 = vmatprep.subr.mxu0 0.0
          %653 = vmatpush2.msra.mxu0 0.0
          %654 = vmatprep.subr.mxu0 0.0
          %655 = vmatpush2.msra.mxu0 0.0
          %656 = vmatprep.subr.mxu0 %v539
          %657 = vmatpush2.msra.mxu0 %v538
          %658 = vmatprep.subr.mxu0 %v537
          %659 = vmatpush2.msra.mxu0 %v536
          %660 = vmatprep.mubr.f32.mxu0 %v582
          %661 = vmatmul.mubr.f32.gmra.mxu0 %v540
          %v662 = vpop.f32.mrf.mxu0
          %v663 = vadd.f32 %v558, %v662
          %v664 = vpop.f32.mrf.mxu0
          %v665 = vadd.f32 %v558, %v664
          %666 = vmatprep.mubr.f32.mxu0 %v585
          %667 = vmatmul.mubr.f32.gmra.mxu0 %v542
          %v668 = vpop.f32.mrf.mxu0
          %v669 = vadd.f32 %v563, %v668
          %v670 = vpop.f32.mrf.mxu0
          %v671 = vadd.f32 %v563, %v670
          %672 = vmatprep.mubr.f32.mxu0 %v588
          %673 = vmatmul.mubr.f32.gmra.mxu0 %v544
          %v674 = vpop.f32.mrf.mxu0
          %v675 = vadd.f32 %v568, %v674
          %v676 = vpop.f32.mrf.mxu0
          %v677 = vadd.f32 %v568, %v676
          %678 = vmatprep.mubr.f32.mxu0 %v591
          %679 = vmatmul.mubr.f32.gmra.mxu0 %v546
          %v680 = vpop.f32.mrf.mxu0
          %v681 = vadd.f32 %v573, %v680
          %v682 = vpop.f32.mrf.mxu0
          %v683 = vadd.f32 %v573, %v682
          %684 = vmatprep.mubr.f32.mxu0 %v594
          %685 = vmatmul.mubr.f32.gmra.mxu0 %v548
          %v686 = vpop.f32.mrf.mxu0
          %v687 = vadd.f32 %v578, %v686
          %v688 = vpop.f32.mrf.mxu0
          %v689 = vadd.f32 %v578, %v688
          %690 = vdwg.mxu0
          %691 = vst [vmem:[#allocation2] sm:$0xff] %v663
          %692 = vst [vmem:[#allocation2 + $0x8] sm:$0xff] %v665
          %693 = vst [vmem:[#allocation2 + $0x10] sm:$0xff] %v669
          %694 = vst [vmem:[#allocation2 + $0x18] sm:$0xff] %v671
          %695 = vst [vmem:[#allocation2 + $0x20] sm:$0xff] %v675
          %696 = vst [vmem:[#allocation2 + $0x28] sm:$0xff] %v677
          %697 = vst [vmem:[#allocation2 + $0x30] sm:$0xff] %v681
          %698 = vst [vmem:[#allocation2 + $0x38] sm:$0xff] %v683
          %699 = vst [vmem:[#allocation2 + $0x40] sm:$0xff] %v687
          %700 = vst [vmem:[#allocation2 + $0x48] sm:$0xff] %v689
        $region52: #{tpu_custom_call.1} parent=39 // pred_fallthru
          _
        %s701 = smul.u32 %s29, 256
        %s702 = sshra.s32 %s701, 7
        %s703 = sand.u32 %s701, 127
        %s704 = smul.addr %s702, 8
        %s705 = scalar_lea.vmem [#allocation2], %s704
        %v706 = vld [vmem:[%s705] sm:$0xff]
        %v707 = vld [vmem:[%s705 + $0x8] sm:$0xff]
        %v708 = vld [vmem:[#allocation2 + $0x10] sm:$0xff]
        %v709 = vld [vmem:[#allocation2 + $0x18] sm:$0xff]
        %v710 = vld [vmem:[#allocation2 + $0x20] sm:$0xff]
        %v711 = vld [vmem:[#allocation2 + $0x28] sm:$0xff]
        %v712 = vld [vmem:[#allocation2 + $0x30] sm:$0xff]
        %v713 = vld [vmem:[#allocation2 + $0x38] sm:$0xff]
        %v714 = vld [vmem:[#allocation2 + $0x40] sm:$0xff]
        %v715 = vld [vmem:[#allocation2 + $0x48] sm:$0xff]
        %716 = vxpose.xlu0.b32.start [1/16] %v708, 128
        %717 = vxpose.xlu0.b32.cont [2/16] 0.0, 128
        %718 = vxpose.xlu0.b32.cont [3/16] 0.0, 128
        %719 = vxpose.xlu0.b32.cont [4/16] 0.0, 128
        %720 = vxpose.xlu0.b32.cont [5/16] 0.0, 128
        %721 = vxpose.xlu0.b32.cont [6/16] 0.0, 128
        %722 = vxpose.xlu0.b32.cont [7/16] 0.0, 128
        %723 = vxpose.xlu0.b32.cont [8/16] 0.0, 128
        %724 = vxpose.xlu0.b32.cont [9/16] 0.0, 128
        %725 = vxpose.xlu0.b32.cont [10/16] 0.0, 128
        %726 = vxpose.xlu0.b32.cont [11/16] 0.0, 128
        %727 = vxpose.xlu0.b32.cont [12/16] 0.0, 128
        %728 = vxpose.xlu0.b32.cont [13/16] 0.0, 128
        %729 = vxpose.xlu0.b32.cont [14/16] 0.0, 128
        %730 = vxpose.xlu0.b32.cont [15/16] 0.0, 128
        %731 = vxpose.xlu0.b32.end [16/16] 0.0, 128
        %v732 = vpop.trf.xlu0
        %v733 = vpop.trf.xlu0
        %v734 = vpop.trf.xlu0
        %v735 = vpop.trf.xlu0
        %v736 = vpop.trf.xlu0
        %v737 = vpop.trf.xlu0
        %v738 = vpop.trf.xlu0
        %v739 = vpop.trf.xlu0
        %v740 = vpop.trf.xlu0
        %v741 = vpop.trf.xlu0
        %v742 = vpop.trf.xlu0
        %v743 = vpop.trf.xlu0
        %v744 = vpop.trf.xlu0
        %v745 = vpop.trf.xlu0
        %v746 = vpop.trf.xlu0
        %v747 = vpop.trf.xlu0
        %748 = vxpose.xlu0.b32.start [1/16] %v709, 128
        %749 = vxpose.xlu0.b32.cont [2/16] 0.0, 128
        %750 = vxpose.xlu0.b32.cont [3/16] 0.0, 128
        %751 = vxpose.xlu0.b32.cont [4/16] 0.0, 128
        %752 = vxpose.xlu0.b32.cont [5/16] 0.0, 128
        %753 = vxpose.xlu0.b32.cont [6/16] 0.0, 128
        %754 = vxpose.xlu0.b32.cont [7/16] 0.0, 128
        %755 = vxpose.xlu0.b32.cont [8/16] 0.0, 128
        %756 = vxpose.xlu0.b32.cont [9/16] 0.0, 128
        %757 = vxpose.xlu0.b32.cont [10/16] 0.0, 128
        %758 = vxpose.xlu0.b32.cont [11/16] 0.0, 128
        %759 = vxpose.xlu0.b32.cont [12/16] 0.0, 128
        %760 = vxpose.xlu0.b32.cont [13/16] 0.0, 128
        %761 = vxpose.xlu0.b32.cont [14/16] 0.0, 128
        %762 = vxpose.xlu0.b32.cont [15/16] 0.0, 128
        %763 = vxpose.xlu0.b32.end [16/16] 0.0, 128
        %v764 = vpop.trf.xlu0
        %v765 = vpop.trf.xlu0
        %v766 = vpop.trf.xlu0
        %v767 = vpop.trf.xlu0
        %v768 = vpop.trf.xlu0
        %v769 = vpop.trf.xlu0
        %v770 = vpop.trf.xlu0
        %v771 = vpop.trf.xlu0
        %v772 = vpop.trf.xlu0
        %v773 = vpop.trf.xlu0
        %v774 = vpop.trf.xlu0
        %v775 = vpop.trf.xlu0
        %v776 = vpop.trf.xlu0
        %v777 = vpop.trf.xlu0
        %v778 = vpop.trf.xlu0
        %v779 = vpop.trf.xlu0
        %vm780 = vcmask 64512
        %v782 = vsel %vm780, %v732, 0
        %v785 = vsel %vm780, %v733, 0
        %v788 = vsel %vm780, %v734, 0
        %v791 = vsel %vm780, %v735, 0
        %v794 = vsel %vm780, %v736, 0
        %v797 = vsel %vm780, %v737, 0
        %v800 = vsel %vm780, %v738, 0
        %v803 = vsel %vm780, %v739, 0
        %v806 = vsel %vm780, %v740, 0
        %v809 = vsel %vm780, %v741, 0
        %v812 = vsel %vm780, %v742, 0
        %v815 = vsel %vm780, %v743, 0
        %v818 = vsel %vm780, %v744, 0
        %v821 = vsel %vm780, %v745, 0
        %v824 = vsel %vm780, %v746, 0
        %v827 = vsel %vm780, %v747, 0
        %v830 = vsel %vm780, %v764, 0
        %v833 = vsel %vm780, %v765, 0
        %v836 = vsel %vm780, %v766, 0
        %v839 = vsel %vm780, %v767, 0
        %v842 = vsel %vm780, %v768, 0
        %v845 = vsel %vm780, %v769, 0
        %v848 = vsel %vm780, %v770, 0
        %v851 = vsel %vm780, %v771, 0
        %v854 = vsel %vm780, %v772, 0
        %v857 = vsel %vm780, %v773, 0
        %v860 = vsel %vm780, %v774, 0
        %v863 = vsel %vm780, %v775, 0
        %v866 = vsel %vm780, %v776, 0
        %v869 = vsel %vm780, %v777, 0
        %v872 = vsel %vm780, %v778, 0
        %v875 = vsel %vm780, %v779, 0
        %877 = vmatprep.subr.mxu0 0.0
        %878 = vmatpush1.msra.mxu0 0.0
        %879 = vmatprep.subr.mxu0 0.0
        %880 = vmatpush1.msra.mxu0 0.0
        %881 = vmatprep.subr.mxu0 0.0
        %882 = vmatpush1.msra.mxu0 0.0
        %883 = vmatprep.subr.mxu0 0.0
        %884 = vmatpush1.msra.mxu0 0.0
        %885 = vmatprep.subr.mxu0 0.0
        %886 = vmatpush1.msra.mxu0 0.0
        %887 = vmatprep.subr.mxu0 0.0
        %888 = vmatpush1.msra.mxu0 0.0
        %889 = vmatprep.subr.mxu0 0.0
        %890 = vmatpush1.msra.mxu0 0.0
        %891 = vmatprep.subr.mxu0 0.0
        %892 = vmatpush1.msra.mxu0 0.0
        %893 = vmatprep.subr.mxu0 0.0
        %894 = vmatpush1.msra.mxu0 0.0
        %895 = vmatprep.subr.mxu0 0.0
        %896 = vmatpush1.msra.mxu0 0.0
        %897 = vmatprep.subr.mxu0 0.0
        %898 = vmatpush1.msra.mxu0 0.0
        %899 = vmatprep.subr.mxu0 0.0
        %900 = vmatpush1.msra.mxu0 0.0
        %901 = vmatprep.subr.mxu0 0.0
        %902 = vmatpush1.msra.mxu0 0.0
        %903 = vmatprep.subr.mxu0 0.0
        %904 = vmatpush1.msra.mxu0 0.0
        %905 = vmatprep.subr.mxu0 0.0
        %906 = vmatpush1.msra.mxu0 0.0
        %907 = vmatprep.subr.mxu0 %v707
        %908 = vmatpush1.msra.mxu0 %v706
        %909 = vmatprep.subr.mxu0 0.0
        %910 = vmatpush2.msra.mxu0 0.0
        %911 = vmatprep.subr.mxu0 0.0
        %912 = vmatpush2.msra.mxu0 0.0
        %913 = vmatprep.subr.mxu0 0.0
        %914 = vmatpush2.msra.mxu0 0.0
        %915 = vmatprep.subr.mxu0 0.0
        %916 = vmatpush2.msra.mxu0 0.0
        %917 = vmatprep.subr.mxu0 0.0
        %918 = vmatpush2.msra.mxu0 0.0
        %919 = vmatprep.subr.mxu0 0.0
        %920 = vmatpush2.msra.mxu0 0.0
        %921 = vmatprep.subr.mxu0 0.0
        %922 = vmatpush2.msra.mxu0 0.0
        %923 = vmatprep.subr.mxu0 0.0
        %924 = vmatpush2.msra.mxu0 0.0
        %925 = vmatprep.subr.mxu0 0.0
        %926 = vmatpush2.msra.mxu0 0.0
        %927 = vmatprep.subr.mxu0 0.0
        %928 = vmatpush2.msra.mxu0 0.0
        %929 = vmatprep.subr.mxu0 0.0
        %930 = vmatpush2.msra.mxu0 0.0
        %931 = vmatprep.subr.mxu0 0.0
        %932 = vmatpush2.msra.mxu0 0.0
        %933 = vmatprep.subr.mxu0 0.0
        %934 = vmatpush2.msra.mxu0 0.0
        %935 = vmatprep.subr.mxu0 0.0
        %936 = vmatpush2.msra.mxu0 0.0
        %937 = vmatprep.subr.mxu0 0.0
        %938 = vmatpush2.msra.mxu0 0.0
        %939 = vmatprep.subr.mxu0 0.0
        %940 = vmatpush2.msra.mxu0 0.0
        %941 = vmatprep.mubr.f32.mxu0 0.0
        %942 = vmatmul.mubr.f32.gmra.mxu0 %v782
        %v943 = vpop.f32.mrf.mxu0
        %v944 = vadd.f32 0.0, %v943
        %v945 = vpop.f32.mrf.mxu0
        %v946 = vadd.f32 0.0, %v945
        %947 = vmatprep.mubr.f32.mxu0 0.0
        %948 = vmatmul.mubr.f32.gmra.mxu0 %v785
        %v949 = vpop.f32.mrf.mxu0
        %v950 = vadd.f32 0.0, %v949
        %v951 = vpop.f32.mrf.mxu0
        %v952 = vadd.f32 0.0, %v951
        %953 = vmatprep.mubr.f32.mxu0 0.0
        %954 = vmatmul.mubr.f32.gmra.mxu0 %v788
        %v955 = vpop.f32.mrf.mxu0
        %v956 = vadd.f32 0.0, %v955
        %v957 = vpop.f32.mrf.mxu0
        %v958 = vadd.f32 0.0, %v957
        %959 = vmatprep.mubr.f32.mxu0 0.0
        %960 = vmatmul.mubr.f32.gmra.mxu0 %v791
        %v961 = vpop.f32.mrf.mxu0
        %v962 = vadd.f32 0.0, %v961
        %v963 = vpop.f32.mrf.mxu0
        %v964 = vadd.f32 0.0, %v963
        %965 = vmatprep.mubr.f32.mxu0 0.0
        %966 = vmatmul.mubr.f32.gmra.mxu0 %v794
        %v967 = vpop.f32.mrf.mxu0
        %v968 = vadd.f32 0.0, %v967
        %v969 = vpop.f32.mrf.mxu0
        %v970 = vadd.f32 0.0, %v969
        %971 = vmatprep.mubr.f32.mxu0 0.0
        %972 = vmatmul.mubr.f32.gmra.mxu0 %v797
        %v973 = vpop.f32.mrf.mxu0
        %v974 = vadd.f32 0.0, %v973
        %v975 = vpop.f32.mrf.mxu0
        %v976 = vadd.f32 0.0, %v975
        %977 = vmatprep.mubr.f32.mxu0 0.0
        %978 = vmatmul.mubr.f32.gmra.mxu0 %v800
        %v979 = vpop.f32.mrf.mxu0
        %v980 = vadd.f32 0.0, %v979
        %v981 = vpop.f32.mrf.mxu0
        %v982 = vadd.f32 0.0, %v981
        %983 = vmatprep.mubr.f32.mxu0 0.0
        %984 = vmatmul.mubr.f32.gmra.mxu0 %v803
        %v985 = vpop.f32.mrf.mxu0
        %v986 = vadd.f32 0.0, %v985
        %v987 = vpop.f32.mrf.mxu0
        %v988 = vadd.f32 0.0, %v987
        %989 = vmatprep.mubr.f32.mxu0 0.0
        %990 = vmatmul.mubr.f32.gmra.mxu0 %v806
        %v991 = vpop.f32.mrf.mxu0
        %v992 = vadd.f32 0.0, %v991
        %v993 = vpop.f32.mrf.mxu0
        %v994 = vadd.f32 0.0, %v993
        %995 = vmatprep.mubr.f32.mxu0 0.0
        %996 = vmatmul.mubr.f32.gmra.mxu0 %v809
        %v997 = vpop.f32.mrf.mxu0
        %v998 = vadd.f32 0.0, %v997
        %v999 = vpop.f32.mrf.mxu0
        %v1000 = vadd.f32 0.0, %v999
        %1001 = vmatprep.mubr.f32.mxu0 0.0
        %1002 = vmatmul.mubr.f32.gmra.mxu0 %v812
        %v1003 = vpop.f32.mrf.mxu0
        %v1004 = vadd.f32 0.0, %v1003
        %v1005 = vpop.f32.mrf.mxu0
        %v1006 = vadd.f32 0.0, %v1005
        %1007 = vmatprep.mubr.f32.mxu0 0.0
        %1008 = vmatmul.mubr.f32.gmra.mxu0 %v815
        %v1009 = vpop.f32.mrf.mxu0
        %v1010 = vadd.f32 0.0, %v1009
        %v1011 = vpop.f32.mrf.mxu0
        %v1012 = vadd.f32 0.0, %v1011
        %1013 = vmatprep.mubr.f32.mxu0 0.0
        %1014 = vmatmul.mubr.f32.gmra.mxu0 %v818
        %v1015 = vpop.f32.mrf.mxu0
        %v1016 = vadd.f32 0.0, %v1015
        %v1017 = vpop.f32.mrf.mxu0
        %v1018 = vadd.f32 0.0, %v1017
        %1019 = vmatprep.mubr.f32.mxu0 0.0
        %1020 = vmatmul.mubr.f32.gmra.mxu0 %v821
        %v1021 = vpop.f32.mrf.mxu0
        %v1022 = vadd.f32 0.0, %v1021
        %v1023 = vpop.f32.mrf.mxu0
        %v1024 = vadd.f32 0.0, %v1023
        %1025 = vmatprep.mubr.f32.mxu0 0.0
        %1026 = vmatmul.mubr.f32.gmra.mxu0 %v824
        %v1027 = vpop.f32.mrf.mxu0
        %v1028 = vadd.f32 0.0, %v1027
        %v1029 = vpop.f32.mrf.mxu0
        %v1030 = vadd.f32 0.0, %v1029
        %1031 = vmatprep.mubr.f32.mxu0 0.0
        %1032 = vmatmul.mubr.f32.gmra.mxu0 %v827
        %v1033 = vpop.f32.mrf.mxu0
        %v1034 = vadd.f32 0.0, %v1033
        %v1035 = vpop.f32.mrf.mxu0
        %v1036 = vadd.f32 0.0, %v1035
        %1037 = vmatprep.mubr.f32.mxu0 0.0
        %1038 = vmatmul.mubr.f32.gmra.mxu0 %v830
        %v1039 = vpop.f32.mrf.mxu0
        %v1040 = vadd.f32 0.0, %v1039
        %v1041 = vpop.f32.mrf.mxu0
        %v1042 = vadd.f32 0.0, %v1041
        %1043 = vmatprep.mubr.f32.mxu0 0.0
        %1044 = vmatmul.mubr.f32.gmra.mxu0 %v833
        %v1045 = vpop.f32.mrf.mxu0
        %v1046 = vadd.f32 0.0, %v1045
        %v1047 = vpop.f32.mrf.mxu0
        %v1048 = vadd.f32 0.0, %v1047
        %1049 = vmatprep.mubr.f32.mxu0 0.0
        %1050 = vmatmul.mubr.f32.gmra.mxu0 %v836
        %v1051 = vpop.f32.mrf.mxu0
        %v1052 = vadd.f32 0.0, %v1051
        %v1053 = vpop.f32.mrf.mxu0
        %v1054 = vadd.f32 0.0, %v1053
        %1055 = vmatprep.mubr.f32.mxu0 0.0
        %1056 = vmatmul.mubr.f32.gmra.mxu0 %v839
        %v1057 = vpop.f32.mrf.mxu0
        %v1058 = vadd.f32 0.0, %v1057
        %v1059 = vpop.f32.mrf.mxu0
        %v1060 = vadd.f32 0.0, %v1059
        %1061 = vmatprep.mubr.f32.mxu0 0.0
        %1062 = vmatmul.mubr.f32.gmra.mxu0 %v842
        %v1063 = vpop.f32.mrf.mxu0
        %v1064 = vadd.f32 0.0, %v1063
        %v1065 = vpop.f32.mrf.mxu0
        %v1066 = vadd.f32 0.0, %v1065
        %1067 = vmatprep.mubr.f32.mxu0 0.0
        %1068 = vmatmul.mubr.f32.gmra.mxu0 %v845
        %v1069 = vpop.f32.mrf.mxu0
        %v1070 = vadd.f32 0.0, %v1069
        %v1071 = vpop.f32.mrf.mxu0
        %v1072 = vadd.f32 0.0, %v1071
        %1073 = vmatprep.mubr.f32.mxu0 0.0
        %1074 = vmatmul.mubr.f32.gmra.mxu0 %v848
        %v1075 = vpop.f32.mrf.mxu0
        %v1076 = vadd.f32 0.0, %v1075
        %v1077 = vpop.f32.mrf.mxu0
        %v1078 = vadd.f32 0.0, %v1077
        %1079 = vmatprep.mubr.f32.mxu0 0.0
        %1080 = vmatmul.mubr.f32.gmra.mxu0 %v851
        %v1081 = vpop.f32.mrf.mxu0
        %v1082 = vadd.f32 0.0, %v1081
        %v1083 = vpop.f32.mrf.mxu0
        %v1084 = vadd.f32 0.0, %v1083
        %1085 = vmatprep.mubr.f32.mxu0 0.0
        %1086 = vmatmul.mubr.f32.gmra.mxu0 %v854
        %v1087 = vpop.f32.mrf.mxu0
        %v1088 = vadd.f32 0.0, %v1087
        %v1089 = vpop.f32.mrf.mxu0
        %v1090 = vadd.f32 0.0, %v1089
        %1091 = vmatprep.mubr.f32.mxu0 0.0
        %1092 = vmatmul.mubr.f32.gmra.mxu0 %v857
        %v1093 = vpop.f32.mrf.mxu0
        %v1094 = vadd.f32 0.0, %v1093
        %v1095 = vpop.f32.mrf.mxu0
        %v1096 = vadd.f32 0.0, %v1095
        %1097 = vmatprep.mubr.f32.mxu0 0.0
        %1098 = vmatmul.mubr.f32.gmra.mxu0 %v860
        %v1099 = vpop.f32.mrf.mxu0
        %v1100 = vadd.f32 0.0, %v1099
        %v1101 = vpop.f32.mrf.mxu0
        %v1102 = vadd.f32 0.0, %v1101
        %1103 = vmatprep.mubr.f32.mxu0 0.0
        %1104 = vmatmul.mubr.f32.gmra.mxu0 %v863
        %v1105 = vpop.f32.mrf.mxu0
        %v1106 = vadd.f32 0.0, %v1105
        %v1107 = vpop.f32.mrf.mxu0
        %v1108 = vadd.f32 0.0, %v1107
        %1109 = vmatprep.mubr.f32.mxu0 0.0
        %1110 = vmatmul.mubr.f32.gmra.mxu0 %v866
        %v1111 = vpop.f32.mrf.mxu0
        %v1112 = vadd.f32 0.0, %v1111
        %v1113 = vpop.f32.mrf.mxu0
        %v1114 = vadd.f32 0.0, %v1113
        %1115 = vmatprep.mubr.f32.mxu0 0.0
        %1116 = vmatmul.mubr.f32.gmra.mxu0 %v869
        %v1117 = vpop.f32.mrf.mxu0
        %v1118 = vadd.f32 0.0, %v1117
        %v1119 = vpop.f32.mrf.mxu0
        %v1120 = vadd.f32 0.0, %v1119
        %1121 = vmatprep.mubr.f32.mxu0 0.0
        %1122 = vmatmul.mubr.f32.gmra.mxu0 %v872
        %v1123 = vpop.f32.mrf.mxu0
        %v1124 = vadd.f32 0.0, %v1123
        %v1125 = vpop.f32.mrf.mxu0
        %v1126 = vadd.f32 0.0, %v1125
        %1127 = vmatprep.mubr.f32.mxu0 0.0
        %1128 = vmatmul.mubr.f32.gmra.mxu0 %v875
        %v1129 = vpop.f32.mrf.mxu0
        %v1130 = vadd.f32 0.0, %v1129
        %v1131 = vpop.f32.mrf.mxu0
        %v1132 = vadd.f32 0.0, %v1131
        %1133 = vdwg.mxu0
        %v1134 = vmax.f32 %v944, %v956
        %v1135 = vmax.f32 %v950, %v962
        %v1136 = vmax.f32 %v1134, %v968
        %v1137 = vmax.f32 %v1135, %v974
        %v1138 = vmax.f32 %v1136, %v980
        %v1139 = vmax.f32 %v1137, %v986
        %v1140 = vmax.f32 %v1138, %v992
        %v1141 = vmax.f32 %v1139, %v998
        %v1142 = vmax.f32 %v1140, %v1004
        %v1143 = vmax.f32 %v1141, %v1010
        %v1144 = vmax.f32 %v1142, %v1016
        %v1145 = vmax.f32 %v1143, %v1022
        %v1146 = vmax.f32 %v1144, %v1028
        %v1147 = vmax.f32 %v1145, %v1034
        %v1148 = vmax.f32 %v1146, %v1040
        %v1149 = vmax.f32 %v1147, %v1046
        %v1150 = vmax.f32 %v1148, %v1052
        %v1151 = vmax.f32 %v1149, %v1058
        %v1152 = vmax.f32 %v1150, %v1064
        %v1153 = vmax.f32 %v1151, %v1070
        %v1154 = vmax.f32 %v1152, %v1076
        %v1155 = vmax.f32 %v1153, %v1082
        %v1156 = vmax.f32 %v1154, %v1088
        %v1157 = vmax.f32 %v1155, %v1094
        %v1158 = vmax.f32 %v1156, %v1100
        %v1159 = vmax.f32 %v1157, %v1106
        %v1160 = vmax.f32 %v1158, %v1112
        %v1161 = vmax.f32 %v1159, %v1118
        %v1162 = vmax.f32 %v1160, %v1124
        %v1163 = vmax.f32 %v1161, %v1130
        %v1164 = vmax.f32 %v1162, %v1163
        %v1165 = vrot.slane %v1164, 4
        %v1166 = vmax.f32 %v1164, %v1165
        %v1167 = vrot.slane %v1166, 2
        %v1168 = vmax.f32 %v1166, %v1167
        %v1169 = vrot.slane %v1168, 1
        %v1170 = vmax.f32 %v1168, %v1169
        %v1171 = vmax.f32 %v946, %v958
        %v1172 = vmax.f32 %v952, %v964
        %v1173 = vmax.f32 %v1171, %v970
        %v1174 = vmax.f32 %v1172, %v976
        %v1175 = vmax.f32 %v1173, %v982
        %v1176 = vmax.f32 %v1174, %v988
        %v1177 = vmax.f32 %v1175, %v994
        %v1178 = vmax.f32 %v1176, %v1000
        %v1179 = vmax.f32 %v1177, %v1006
        %v1180 = vmax.f32 %v1178, %v1012
        %v1181 = vmax.f32 %v1179, %v1018
        %v1182 = vmax.f32 %v1180, %v1024
        %v1183 = vmax.f32 %v1181, %v1030
        %v1184 = vmax.f32 %v1182, %v1036
        %v1185 = vmax.f32 %v1183, %v1042
        %v1186 = vmax.f32 %v1184, %v1048
        %v1187 = vmax.f32 %v1185, %v1054
        %v1188 = vmax.f32 %v1186, %v1060
        %v1189 = vmax.f32 %v1187, %v1066
        %v1190 = vmax.f32 %v1188, %v1072
        %v1191 = vmax.f32 %v1189, %v1078
        %v1192 = vmax.f32 %v1190, %v1084
        %v1193 = vmax.f32 %v1191, %v1090
        %v1194 = vmax.f32 %v1192, %v1096
        %v1195 = vmax.f32 %v1193, %v1102
        %v1196 = vmax.f32 %v1194, %v1108
        %v1197 = vmax.f32 %v1195, %v1114
        %v1198 = vmax.f32 %v1196, %v1120
        %v1199 = vmax.f32 %v1197, %v1126
        %v1200 = vmax.f32 %v1198, %v1132
        %v1201 = vmax.f32 %v1199, %v1200
        %v1202 = vrot.slane %v1201, 4
        %v1203 = vmax.f32 %v1201, %v1202
        %v1204 = vrot.slane %v1203, 2
        %v1205 = vmax.f32 %v1203, %v1204
        %v1206 = vrot.slane %v1205, 1
        %v1207 = vmax.f32 %v1205, %v1206
        %v1208 = vsub.f32 %v944, %v1170
        %v1209 = vsub.f32 %v946, %v1207
        %v1210 = vsub.f32 %v950, %v1170
        %v1211 = vsub.f32 %v952, %v1207
        %v1212 = vsub.f32 %v956, %v1170
        %v1213 = vsub.f32 %v958, %v1207
        %v1214 = vsub.f32 %v962, %v1170
        %v1215 = vsub.f32 %v964, %v1207
        %v1216 = vsub.f32 %v968, %v1170
        %v1217 = vsub.f32 %v970, %v1207
        %v1218 = vsub.f32 %v974, %v1170
        %v1219 = vsub.f32 %v976, %v1207
        %v1220 = vsub.f32 %v980, %v1170
        %v1221 = vsub.f32 %v982, %v1207
        %v1222 = vsub.f32 %v986, %v1170
        %v1223 = vsub.f32 %v988, %v1207
        %v1224 = vsub.f32 %v992, %v1170
        %v1225 = vsub.f32 %v994, %v1207
        %v1226 = vsub.f32 %v998, %v1170
        %v1227 = vsub.f32 %v1000, %v1207
        %v1228 = vsub.f32 %v1004, %v1170
        %v1229 = vsub.f32 %v1006, %v1207
        %v1230 = vsub.f32 %v1010, %v1170
        %v1231 = vsub.f32 %v1012, %v1207
        %v1232 = vsub.f32 %v1016, %v1170
        %v1233 = vsub.f32 %v1018, %v1207
        %v1234 = vsub.f32 %v1022, %v1170
        %v1235 = vsub.f32 %v1024, %v1207
        %v1236 = vsub.f32 %v1028, %v1170
        %v1237 = vsub.f32 %v1030, %v1207
        %v1238 = vsub.f32 %v1034, %v1170
        %v1239 = vsub.f32 %v1036, %v1207
        %v1240 = vsub.f32 %v1040, %v1170
        %v1241 = vsub.f32 %v1042, %v1207
        %v1242 = vsub.f32 %v1046, %v1170
        %v1243 = vsub.f32 %v1048, %v1207
        %v1244 = vsub.f32 %v1052, %v1170
        %v1245 = vsub.f32 %v1054, %v1207
        %v1246 = vsub.f32 %v1058, %v1170
        %v1247 = vsub.f32 %v1060, %v1207
        %v1248 = vsub.f32 %v1064, %v1170
        %v1249 = vsub.f32 %v1066, %v1207
        %v1250 = vsub.f32 %v1070, %v1170
        %v1251 = vsub.f32 %v1072, %v1207
        %v1252 = vsub.f32 %v1076, %v1170
        %v1253 = vsub.f32 %v1078, %v1207
        %v1254 = vsub.f32 %v1082, %v1170
        %v1255 = vsub.f32 %v1084, %v1207
        %v1256 = vsub.f32 %v1088, %v1170
        %v1257 = vsub.f32 %v1090, %v1207
        %v1258 = vsub.f32 %v1094, %v1170
        %v1259 = vsub.f32 %v1096, %v1207
        %v1260 = vsub.f32 %v1100, %v1170
        %v1261 = vsub.f32 %v1102, %v1207
        %v1262 = vsub.f32 %v1106, %v1170
        %v1263 = vsub.f32 %v1108, %v1207
        %v1264 = vsub.f32 %v1112, %v1170
        %v1265 = vsub.f32 %v1114, %v1207
        %v1266 = vsub.f32 %v1118, %v1170
        %v1267 = vsub.f32 %v1120, %v1207
        %v1268 = vsub.f32 %v1124, %v1170
        %v1269 = vsub.f32 %v1126, %v1207
        %v1270 = vsub.f32 %v1130, %v1170
        %v1271 = vsub.f32 %v1132, %v1207
        %v1272 = vmul.f32 %v1208, 1.442695
        %v1273 = vpow.pop %v1272
        %v1274 = vmul.f32 %v1209, 1.442695
        %v1275 = vpow.pop %v1274
        %v1276 = vmul.f32 %v1210, 1.442695
        %v1277 = vpow.pop %v1276
        %v1278 = vmul.f32 %v1211, 1.442695
        %v1279 = vpow.pop %v1278
        %v1280 = vmul.f32 %v1212, 1.442695
        %v1281 = vpow.pop %v1280
        %v1282 = vmul.f32 %v1213, 1.442695
        %v1283 = vpow.pop %v1282
        %v1284 = vmul.f32 %v1214, 1.442695
        %v1285 = vpow.pop %v1284
        %v1286 = vmul.f32 %v1215, 1.442695
        %v1287 = vpow.pop %v1286
        %v1288 = vmul.f32 %v1216, 1.442695
        %v1289 = vpow.pop %v1288
        %v1290 = vmul.f32 %v1217, 1.442695
        %v1291 = vpow.pop %v1290
        %v1292 = vmul.f32 %v1218, 1.442695
        %v1293 = vpow.pop %v1292
        %v1294 = vmul.f32 %v1219, 1.442695
        %v1295 = vpow.pop %v1294
        %v1296 = vmul.f32 %v1220, 1.442695
        %v1297 = vpow.pop %v1296
        %v1298 = vmul.f32 %v1221, 1.442695
        %v1299 = vpow.pop %v1298
        %v1300 = vmul.f32 %v1222, 1.442695
        %v1301 = vpow.pop %v1300
        %v1302 = vmul.f32 %v1223, 1.442695
        %v1303 = vpow.pop %v1302
        %v1304 = vmul.f32 %v1224, 1.442695
        %v1305 = vpow.pop %v1304
        %v1306 = vmul.f32 %v1225, 1.442695
        %v1307 = vpow.pop %v1306
        %v1308 = vmul.f32 %v1226, 1.442695
        %v1309 = vpow.pop %v1308
        %v1310 = vmul.f32 %v1227, 1.442695
        %v1311 = vpow.pop %v1310
        %v1312 = vmul.f32 %v1228, 1.442695
        %v1313 = vpow.pop %v1312
        %v1314 = vmul.f32 %v1229, 1.442695
        %v1315 = vpow.pop %v1314
        %v1316 = vmul.f32 %v1230, 1.442695
        %v1317 = vpow.pop %v1316
        %v1318 = vmul.f32 %v1231, 1.442695
        %v1319 = vpow.pop %v1318
        %v1320 = vmul.f32 %v1232, 1.442695
        %v1321 = vpow.pop %v1320
        %v1322 = vmul.f32 %v1233, 1.442695
        %v1323 = vpow.pop %v1322
        %v1324 = vmul.f32 %v1234, 1.442695
        %v1325 = vpow.pop %v1324
        %v1326 = vmul.f32 %v1235, 1.442695
        %v1327 = vpow.pop %v1326
        %v1328 = vmul.f32 %v1236, 1.442695
        %v1329 = vpow.pop %v1328
        %v1330 = vmul.f32 %v1237, 1.442695
        %v1331 = vpow.pop %v1330
        %v1332 = vmul.f32 %v1238, 1.442695
        %v1333 = vpow.pop %v1332
        %v1334 = vmul.f32 %v1239, 1.442695
        %v1335 = vpow.pop %v1334
        %v1336 = vmul.f32 %v1240, 1.442695
        %v1337 = vpow.pop %v1336
        %v1338 = vmul.f32 %v1241, 1.442695
        %v1339 = vpow.pop %v1338
        %v1340 = vmul.f32 %v1242, 1.442695
        %v1341 = vpow.pop %v1340
        %v1342 = vmul.f32 %v1243, 1.442695
        %v1343 = vpow.pop %v1342
        %v1344 = vmul.f32 %v1244, 1.442695
        %v1345 = vpow.pop %v1344
        %v1346 = vmul.f32 %v1245, 1.442695
        %v1347 = vpow.pop %v1346
        %v1348 = vmul.f32 %v1246, 1.442695
        %v1349 = vpow.pop %v1348
        %v1350 = vmul.f32 %v1247, 1.442695
        %v1351 = vpow.pop %v1350
        %v1352 = vmul.f32 %v1248, 1.442695
        %v1353 = vpow.pop %v1352
        %v1354 = vmul.f32 %v1249, 1.442695
        %v1355 = vpow.pop %v1354
        %v1356 = vmul.f32 %v1250, 1.442695
        %v1357 = vpow.pop %v1356
        %v1358 = vmul.f32 %v1251, 1.442695
        %v1359 = vpow.pop %v1358
        %v1360 = vmul.f32 %v1252, 1.442695
        %v1361 = vpow.pop %v1360
        %v1362 = vmul.f32 %v1253, 1.442695
        %v1363 = vpow.pop %v1362
        %v1364 = vmul.f32 %v1254, 1.442695
        %v1365 = vpow.pop %v1364
        %v1366 = vmul.f32 %v1255, 1.442695
        %v1367 = vpow.pop %v1366
        %v1368 = vmul.f32 %v1256, 1.442695
        %v1369 = vpow.pop %v1368
        %v1370 = vmul.f32 %v1257, 1.442695
        %v1371 = vpow.pop %v1370
        %v1372 = vmul.f32 %v1258, 1.442695
        %v1373 = vpow.pop %v1372
        %v1374 = vmul.f32 %v1259, 1.442695
        %v1375 = vpow.pop %v1374
        %v1376 = vmul.f32 %v1260, 1.442695
        %v1377 = vpow.pop %v1376
        %v1378 = vmul.f32 %v1261, 1.442695
        %v1379 = vpow.pop %v1378
        %v1380 = vmul.f32 %v1262, 1.442695
        %v1381 = vpow.pop %v1380
        %v1382 = vmul.f32 %v1263, 1.442695
        %v1383 = vpow.pop %v1382
        %v1384 = vmul.f32 %v1264, 1.442695
        %v1385 = vpow.pop %v1384
        %v1386 = vmul.f32 %v1265, 1.442695
        %v1387 = vpow.pop %v1386
        %v1388 = vmul.f32 %v1266, 1.442695
        %v1389 = vpow.pop %v1388
        %v1390 = vmul.f32 %v1267, 1.442695
        %v1391 = vpow.pop %v1390
        %v1392 = vmul.f32 %v1268, 1.442695
        %v1393 = vpow.pop %v1392
        %v1394 = vmul.f32 %v1269, 1.442695
        %v1395 = vpow.pop %v1394
        %v1396 = vmul.f32 %v1270, 1.442695
        %v1397 = vpow.pop %v1396
        %v1398 = vmul.f32 %v1271, 1.442695
        %v1399 = vpow.pop %v1398
        %1400 = vmatprep.subr.mxu0 %v1335
        %1401 = vmatpush1.msra.mxu0 %v1333
        %1402 = vmatprep.subr.mxu0 %v1331
        %1403 = vmatpush1.msra.mxu0 %v1329
        %1404 = vmatprep.subr.mxu0 %v1327
        %1405 = vmatpush1.msra.mxu0 %v1325
        %1406 = vmatprep.subr.mxu0 %v1323
        %1407 = vmatpush1.msra.mxu0 %v1321
        %1408 = vmatprep.subr.mxu0 %v1319
        %1409 = vmatpush1.msra.mxu0 %v1317
        %1410 = vmatprep.subr.mxu0 %v1315
        %1411 = vmatpush1.msra.mxu0 %v1313
        %1412 = vmatprep.subr.mxu0 %v1311
        %1413 = vmatpush1.msra.mxu0 %v1309
        %1414 = vmatprep.subr.mxu0 %v1307
        %1415 = vmatpush1.msra.mxu0 %v1305
        %1416 = vmatprep.subr.mxu0 %v1303
        %1417 = vmatpush1.msra.mxu0 %v1301
        %1418 = vmatprep.subr.mxu0 %v1299
        %1419 = vmatpush1.msra.mxu0 %v1297
        %1420 = vmatprep.subr.mxu0 %v1295
        %1421 = vmatpush1.msra.mxu0 %v1293
        %1422 = vmatprep.subr.mxu0 %v1291
        %1423 = vmatpush1.msra.mxu0 %v1289
        %1424 = vmatprep.subr.mxu0 %v1287
        %1425 = vmatpush1.msra.mxu0 %v1285
        %1426 = vmatprep.subr.mxu0 %v1283
        %1427 = vmatpush1.msra.mxu0 %v1281
        %1428 = vmatprep.subr.mxu0 %v1279
        %1429 = vmatpush1.msra.mxu0 %v1277
        %1430 = vmatprep.subr.mxu0 %v1275
        %1431 = vmatpush1.msra.mxu0 %v1273
        %1432 = vmatprep.subr.mxu0 %v1399
        %1433 = vmatpush2.msra.mxu0 %v1397
        %1434 = vmatprep.subr.mxu0 %v1395
        %1435 = vmatpush2.msra.mxu0 %v1393
        %1436 = vmatprep.subr.mxu0 %v1391
        %1437 = vmatpush2.msra.mxu0 %v1389
        %1438 = vmatprep.subr.mxu0 %v1387
        %1439 = vmatpush2.msra.mxu0 %v1385
        %1440 = vmatprep.subr.mxu0 %v1383
        %1441 = vmatpush2.msra.mxu0 %v1381
        %1442 = vmatprep.subr.mxu0 %v1379
        %1443 = vmatpush2.msra.mxu0 %v1377
        %1444 = vmatprep.subr.mxu0 %v1375
        %1445 = vmatpush2.msra.mxu0 %v1373
        %1446 = vmatprep.subr.mxu0 %v1371
        %1447 = vmatpush2.msra.mxu0 %v1369
        %1448 = vmatprep.subr.mxu0 %v1367
        %1449 = vmatpush2.msra.mxu0 %v1365
        %1450 = vmatprep.subr.mxu0 %v1363
        %1451 = vmatpush2.msra.mxu0 %v1361
        %1452 = vmatprep.subr.mxu0 %v1359
        %1453 = vmatpush2.msra.mxu0 %v1357
        %1454 = vmatprep.subr.mxu0 %v1355
        %1455 = vmatpush2.msra.mxu0 %v1353
        %1456 = vmatprep.subr.mxu0 %v1351
        %1457 = vmatpush2.msra.mxu0 %v1349
        %1458 = vmatprep.subr.mxu0 %v1347
        %1459 = vmatpush2.msra.mxu0 %v1345
        %1460 = vmatprep.subr.mxu0 %v1343
        %1461 = vmatpush2.msra.mxu0 %v1341
        %1462 = vmatprep.subr.mxu0 %v1339
        %1463 = vmatpush2.msra.mxu0 %v1337
        %1464 = vmatprep.mubr.f32.mxu0 %v711
        %1465 = vmatmul.mubr.f32.gmra.mxu0 %v710
        %v1466 = vpop.f32.mrf.mxu0
        %v1467 = vadd.f32 0.0, %v1466
        %v1468 = vpop.f32.mrf.mxu0
        %v1469 = vadd.f32 0.0, %v1468
        %1470 = vmatprep.mubr.f32.mxu0 %v713
        %1471 = vmatmul.mubr.f32.gmra.mxu0 %v712
        %v1472 = vpop.f32.mrf.mxu0
        %v1473 = vadd.f32 0.0, %v1472
        %v1474 = vpop.f32.mrf.mxu0
        %v1475 = vadd.f32 0.0, %v1474
        %1476 = vmatprep.mubr.f32.mxu0 %v715
        %1477 = vmatmul.mubr.f32.gmra.mxu0 %v714
        %v1478 = vpop.f32.mrf.mxu0
        %v1479 = vadd.f32 0.0, %v1478
        %v1480 = vpop.f32.mrf.mxu0
        %v1481 = vadd.f32 0.0, %v1480
        %1482 = vdwg.mxu0
        %s1483 = sld [smem:[#allocation3]]
        %v1484 = vrcp.pop %v1479
        %v1485 = vrcp.pop %v1481
        %v1486 = vstv %s1483
        %v1487 = vmul.f32 %v1486, %v1484
        %v1488 = vmul.f32 %v1486, %v1485
        %s1489 = smul.addr %s702, 8
        %s1490 = scalar_lea.vmem %s242, %s1489 [#allocation4]
        %v1491 = vld [vmem:[%s1490] sm:$0xff]
        %v1492 = vld [vmem:[%s1490 + $0x8] sm:$0xff]
        %v1493 = vld [vmem:[%s1490 + $0x10] sm:$0xff]
        %v1494 = vld [vmem:[%s1490 + $0x18] sm:$0xff]
        %v1495 = vlaneseq
        %v1496 = vshrl.u32 %v1495, 7
        %v1497 = vsub.s32 0, %v1496
        %v1498 = vrot.slane %v1487, %v1497
        %v1499 = vlaneseq
        %v1500 = vshrl.u32 %v1499, 7
        %v1501 = vsub.s32 0, %v1500
        %v1502 = vrot.slane %v1488, %v1501
        %v1503 = vmul.f32 %v1467, %v1498
        %v1504 = vmul.f32 %v1469, %v1502
        %v1505 = vmul.f32 %v1473, %v1498
        %v1506 = vmul.f32 %v1475, %v1502
        %v1507 = vadd.f32 %v1503, %v1491
        %v1508 = vadd.f32 %v1504, %v1492
        %v1509 = vadd.f32 %v1505, %v1493
        %v1510 = vadd.f32 %v1506, %v1494
        %1511 = vst [vmem:[%s272] sm:$0xff] %v1507
        %1512 = vst [vmem:[%s272 + $0x8] sm:$0xff] %v1508
        %1513 = vst [vmem:[%s272 + $0x10] sm:$0xff] %v1509
        %1514 = vst [vmem:[%s272 + $0x18] sm:$0xff] %v1510
        %s1515 = sand.u32 %s156, 1
        %s1516 = scalar_lea.sflag [#allocation6], %s1515
        %s1517 = sand.u32 %s156, 1
        %s1518 = smul.addr %s1517, 32
        %s1519 = scalar_lea.vmem [#allocation9], %s1518
        // Predicated region
        $region53: #{tpu_custom_call.1} parent=39 // pred_check
          %p1520 = pneg %p166
        $region54: #{tpu_custom_call.1} parent=39 // pred_check_branch
          %1522 = sbr.rel (%p1520) target = $region56
        $region55: #{tpu_custom_call.1} parent=39 // pred_region
          %s1523 = smul.u32 2, %s29
          %s1525 = ssub.s32 512, 512
          %1526 = vsyncadd %s1516, %s1525
          %s1527 = smul.addr %s28, 4
          %s1528 = sadd.s32 %s1523, %s1527
          %s1529 = smul.addr %s1528, 128
          %s1530 = scalar_lea.hbm %s5, %s1529
          %s1531 = sshll.u32 %s1519, 4
          %s1532 = int_to_ptr.vmem [resolvable:$true] %s1531
          %1537 = dma.vmem_to_hbm [thread:$0]  %s1532, 512, %s1530, %s1516, 256, 256, 16
        $region56: #{tpu_custom_call.1} parent=39 // pred_fallthru
          _
      $region40: #{tpu_custom_call.1} parent=5 // pred_fallthru
        _
      %p1538 = scmp.le.s32.totalorder 2, %s19
      // Predicated region
      $region57: #{tpu_custom_call.1} parent=5 // pred_check
        %p1539 = pneg %p1538
      $region58: #{tpu_custom_call.1} parent=5 // pred_check_branch
        %1541 = sbr.rel (%p1539) target = $region60
      $region59: #{tpu_custom_call.1} parent=5 // pred_region
        %s1542 = ssub.s32 %s19, 2
        // Predicated region
        $region61: #{tpu_custom_call.1} parent=59 // pred_check
          %p1543 = pneg %p172
        $region62: #{tpu_custom_call.1} parent=59 // pred_check_branch
          %1545 = sbr.rel (%p1543) target = $region64
        $region63: #{tpu_custom_call.1} parent=59 // pred_region
          %s1546 = sand.u32 %s157, 1
          %s1547 = scalar_lea.sflag [#allocation6], %s1546
          %s1548 = sand.u32 %s157, 1
          %s1549 = smul.addr %s1548, 32
          %s1550 = scalar_lea.vmem [#allocation9], %s1549
          %1551 = dma.done %s1547, 512
        $region64: #{tpu_custom_call.1} parent=59 // pred_fallthru
          _
      $region60: #{tpu_custom_call.1} parent=5 // pred_fallthru
        _
    $region6: #{tpu_custom_call.1} parent=1 // loop_footer
      %s23 = sadd.s32 1, %s19
    $region7: #{tpu_custom_call.1} parent=1 // loop_footer_branch
      %18 = sbr.rel target = $region3
    $region8: #{tpu_custom_call.1} parent=1 // loop_exit
      _
    %1552 = vsyncpa [#allocation5], 1
    %s1553 = scalar_lea.sflag [#allocation5], 1
    %1554 = vsyncpa %s1553, 1
    %1555 = vsyncpa [#allocation8], 1
    %1556 = vsyncpa [#allocation6], 1
    %s1557 = scalar_lea.sflag [#allocation6], 1
    %1558 = vsyncpa %s1557, 1

// kernel: tpu_custom_call.1
$region0: #{tpu_custom_call.1}
  #allocation0 [shape = 'u32[]', space=smem, size = 0x4, offset = 0x4, fixed_abs, tag = 'smem constant byte address 0x4 - core index']
  #allocation1 [shape = 'u32[144,128]{1,0:T(1,128)}', space=vmem, size = 0x12000, scoped, tag = 'internal scratch']
  #allocation2 [shape = 'f32[40,256]{1,0:T(8,128)}', space=vmem, size = 0xa000, scoped, tag = 'scratch operand']
  #allocation3 [shape = 'f32[1,1]{1,0:T(1,128)S(6)}', space=smem, size = 0x200, scoped, tag = 'scoped memory for tpu_custom_call.1']
  %s0 = inlined_call_operand.hbm [shape: f32[2,16,256], index: 0, kind: input, shape index: {}]
  %s1 = inlined_call_operand.hbm [shape: f32[40,144], index: 1, kind: input, shape index: {}]
  %s2 = inlined_call_operand.vmem [shape: f32[40,1], index: 2, kind: input, shape index: {}]
  %s3 = inlined_call_operand.vmem [shape: f32[9,256], index: 3, kind: input, shape index: {}]
  %s4 = inlined_call_operand.<no memory space> [shape: f32[1,1], index: 4, kind: input, shape index: {}]
  %s5 = inlined_call_operand.hbm [shape: f32[2,16,256], index: 5, kind: output, shape index: {}]
  %s6 = sld [smem:[#allocation0]]
  $region65: #{tpu_custom_call.1} parent=0
    _
  %s8 = ssub.s32 1, %s6
  %s9 = scalar_select 0, %s8, %s6
  %10 = sst [smem:[#allocation3]] %s4
  $region1: #{tpu_custom_call.1} parent=0
    #allocation4 [shape = 'u8[32768]{0}', space=vmem, size = 0x8000, scoped, tag = 'input window, operand 0']
    #allocation5 [shape = 's32[2]{0}', space=sflag, size = 0x8, scoped, tag = 'scoped memory for tpu_custom_call.1']
    #allocation6 [shape = 's32[2]{0}', space=sflag, size = 0x8, scoped, tag = 'scoped memory for tpu_custom_call.1']
    #allocation7 [shape = 'u8[40960]{0}', space=vmem, size = 0xa000, scoped, tag = 'input window, operand 1, single buffered']
    #allocation8 [shape = 's32[1]{0}', space=sflag, size = 0x4, scoped, tag = 'scoped memory for tpu_custom_call.1']
    #allocation9 [shape = 'u8[32768]{0}', space=vmem, size = 0x8000, scoped, tag = 'output window, operand 0']
    %11 = vsyncpa [#allocation5], 0
    %s12 = scalar_lea.sflag [#allocation5], 1
    %13 = vsyncpa %s12, 0
    %14 = vsyncpa [#allocation8], 0
    %15 = vsyncpa [#allocation6], 0
    %s16 = scalar_lea.sflag [#allocation6], 1
    %17 = vsyncpa %s16, 0
    loop: start=0, step=1, limit=4
    $region2: #{tpu_custom_call.1} parent=1 // loop_pre_header
      _
    $region3: #{tpu_custom_call.1} parent=1 // loop_header
      %s19 = sphi 0, %s23
      %p20 = scmp.ge.s32.totalorder %s19, 4
      %s26 = sphi 0, %s38
      %s27 = sphi 0, %s34
      %s28 = sphi 0, %s26
      %s29 = sphi 0, %s27
      %s30 = sphi 0, %s28
      %s31 = sphi 0, %s29
      %s41 = sphi 0, %s43
      %s44 = sphi 0, %s41
      %s45 = sphi 0, %s44
      %s61 = sphi 0, %s45
      %s65 = sphi 0, %s65
      %s67 = sphi 0, %s65
      %s68 = sphi 0, %s67
      %s82 = sphi 0, %s68
      %s86 = sphi 0, %s86
      %s88 = sphi 0, %s86
      %s89 = sphi 0, %s88
      %s103 = sphi 0, %s89
      %s107 = sphi 0, %s107
      %s109 = sphi 0, %s107
      %s110 = sphi 0, %s109
      %s124 = sphi 0, %s110
      %s128 = sphi 0, %s128
      %s130 = sphi 0, %s128
      %s131 = sphi 0, %s130
      %s145 = sphi 0, %s131
      %s153 = sphi 0, %s155
      %s156 = sphi 0, %s153
      %s157 = sphi 0, %s156
      %s173 = sphi 0, %s157
    $region4: #{tpu_custom_call.1} parent=1 // loop_header_branch
      %22 = sbr.rel (%p20) target = $region8
    $region5: #{tpu_custom_call.1} parent=1 // loop_body
      %s24 = ssub.s32 %s19, 1
      %s25 = ssub.s32 %s19, 2
      %s32 = sadd.s32 1, %s27
      %p33 = scmp.ge.s32.totalorder %s32, 1
      %s34 = scalar_select %p33, 0, %s32
      %s35 = sadd.s32 1, %s26
      %s36 = scalar_select %p33, %s35, %s26
      %p37 = scmp.ge.s32.totalorder %s36, 2
      %s38 = scalar_select %p37, 0, %s36
      %s39 = ssub.s32 %s26, %s38
      %p40 = scmp.eq.s32.totalorder %s39, 0
      %s42 = sadd.s32 %s41, 1
      %s43 = scalar_select %p40, %s41, %s42
      %p46 = pneg %p40
      %p47 = scmp.eq.s32.totalorder %s19, 1
      %p48 = por %p46, %p47
      %p49 = scmp.ne.s32.totalorder %s41, %s44
      %p50 = scmp.eq.s32.totalorder %s19, 0
      %p51 = por %p49, %p50
      %p52 = scmp.ne.s32.totalorder %s41, %s44
      %p53 = scmp.eq.s32.totalorder %s24, 1
      %p54 = por %p52, %p53
      %p55 = scmp.ne.s32.totalorder %s44, %s45
      %p56 = scmp.eq.s32.totalorder %s24, 0
      %p57 = por %p55, %p56
      %p58 = scmp.ne.s32.totalorder %s44, %s45
      %p59 = scmp.eq.s32.totalorder %s25, 1
      %p60 = por %p58, %p59
      %p62 = scmp.ne.s32.totalorder %s45, %s61
      %p63 = scmp.eq.s32.totalorder %s25, 0
      %p64 = por %p62, %p63
      %s66 = sadd.s32 %s65, 1
      %p69 = scmp.eq.s32.totalorder %s19, 1
      %p70 = scmp.ne.s32.totalorder %s65, %s67
      %p71 = scmp.eq.s32.totalorder %s19, 0
      %p72 = por %p70, %p71
      %p73 = scmp.ne.s32.totalorder %s65, %s67
      %p74 = scmp.eq.s32.totalorder %s24, 1
      %p75 = por %p73, %p74
      %p76 = scmp.ne.s32.totalorder %s67, %s68
      %p77 = scmp.eq.s32.totalorder %s24, 0
      %p78 = por %p76, %p77
      %p79 = scmp.ne.s32.totalorder %s67, %s68
      %p80 = scmp.eq.s32.totalorder %s25, 1
      %p81 = por %p79, %p80
      %p83 = scmp.ne.s32.totalorder %s68, %s82
      %p84 = scmp.eq.s32.totalorder %s25, 0
      %p85 = por %p83, %p84
      %s87 = sadd.s32 %s86, 1
      %p90 = scmp.eq.s32.totalorder %s19, 1
      %p91 = scmp.ne.s32.totalorder %s86, %s88
      %p92 = scmp.eq.s32.totalorder %s19, 0
      %p93 = por %p91, %p92
      %p94 = scmp.ne.s32.totalorder %s86, %s88
      %p95 = scmp.eq.s32.totalorder %s24, 1
      %p96 = por %p94, %p95
      %p97 = scmp.ne.s32.totalorder %s88, %s89
      %p98 = scmp.eq.s32.totalorder %s24, 0
      %p99 = por %p97, %p98
      %p100 = scmp.ne.s32.totalorder %s88, %s89
      %p101 = scmp.eq.s32.totalorder %s25, 1
      %p102 = por %p100, %p101
      %p104 = scmp.ne.s32.totalorder %s89, %s103
      %p105 = scmp.eq.s32.totalorder %s25, 0
      %p106 = por %p104, %p105
      %s108 = sadd.s32 %s107, 1
      %p111 = scmp.eq.s32.totalorder %s19, 1
      %p112 = scmp.ne.s32.totalorder %s107, %s109
      %p113 = scmp.eq.s32.totalorder %s19, 0
      %p114 = por %p112, %p113
      %p115 = scmp.ne.s32.totalorder %s107, %s109
      %p116 = scmp.eq.s32.totalorder %s24, 1
      %p117 = por %p115, %p116
      %p118 = scmp.ne.s32.totalorder %s109, %s110
      %p119 = scmp.eq.s32.totalorder %s24, 0
      %p120 = por %p118, %p119
      %p121 = scmp.ne.s32.totalorder %s109, %s110
      %p122 = scmp.eq.s32.totalorder %s25, 1
      %p123 = por %p121, %p122
      %p125 = scmp.ne.s32.totalorder %s110, %s124
      %p126 = scmp.eq.s32.totalorder %s25, 0
      %p127 = por %p125, %p126
      %s129 = sadd.s32 %s128, 1
      %p132 = scmp.eq.s32.totalorder %s19, 1
      %p133 = scmp.ne.s32.totalorder %s128, %s130
      %p134 = scmp.eq.s32.totalorder %s19, 0
      %p135 = por %p133, %p134
      %p136 = scmp.ne.s32.totalorder %s128, %s130
      %p137 = scmp.eq.s32.totalorder %s24, 1
      %p138 = por %p136, %p137
      %p139 = scmp.ne.s32.totalorder %s130, %s131
      %p140 = scmp.eq.s32.totalorder %s24, 0
      %p141 = por %p139, %p140
      %p142 = scmp.ne.s32.totalorder %s130, %s131
      %p143 = scmp.eq.s32.totalorder %s25, 1
      %p144 = por %p142, %p143
      %p146 = scmp.ne.s32.totalorder %s131, %s145
      %p147 = scmp.eq.s32.totalorder %s25, 0
      %p148 = por %p146, %p147
      %s149 = ssub.s32 %s26, %s38
      %s150 = ssub.s32 %s27, %s34
      %s151 = sor.u32 %s149, %s150
      %p152 = scmp.eq.s32.totalorder %s151, 0
      %s154 = sadd.s32 %s153, 1
      %s155 = scalar_select %p152, %s153, %s154
      %p158 = pneg %p152
      %p159 = scmp.eq.s32.totalorder %s19, 1
      %p160 = por %p158, %p159
      %p161 = scmp.ne.s32.totalorder %s153, %s156
      %p162 = scmp.eq.s32.totalorder %s19, 0
      %p163 = por %p161, %p162
      %p164 = scmp.ne.s32.totalorder %s153, %s156
      %p165 = scmp.eq.s32.totalorder %s24, 1
      %p166 = por %p164, %p165
      %p167 = scmp.ne.s32.totalorder %s156, %s157
      %p168 = scmp.eq.s32.totalorder %s24, 0
      %p169 = por %p167, %p168
      %p170 = scmp.ne.s32.totalorder %s156, %s157
      %p171 = scmp.eq.s32.totalorder %s25, 1
      %p172 = por %p170, %p171
      %p174 = scmp.ne.s32.totalorder %s157, %s173
      %p175 = scmp.eq.s32.totalorder %s25, 0
      %p176 = por %p174, %p175
      %p177 = scmp.le.s32.totalorder 1, %s19
      %p178 = scmp.lt.s32.totalorder %s19, 3
      %p179 = pnand %p177, %p178
      %p180 = pneg %p179
      // Predicated region
      $region9: #{tpu_custom_call.1} parent=5 // pred_check
        _
      $region10: #{tpu_custom_call.1} parent=5 // pred_check_branch
        %182 = sbr.rel (%p179) target = $region12
      $region11: #{tpu_custom_call.1} parent=5 // pred_region
        %s183 = ssub.s32 %s19, 1
        // Predicated region
        $region13: #{tpu_custom_call.1} parent=11 // pred_check
          %p184 = pneg %p78
        $region14: #{tpu_custom_call.1} parent=11 // pred_check_branch
          %186 = sbr.rel (%p184) target = $region16
        $region15: #{tpu_custom_call.1} parent=11 // pred_region
          %s188 = ssub.s32 1280, 1280
          %189 = vsyncadd [#allocation8], %s188
          %s190 = sshll.u32 [#allocation7], 4
          %s191 = int_to_ptr.vmem [resolvable:$true] %s190
          %196 = dma.hbm_to_vmem [thread:$0]  %s1, 1280, %s191, [#allocation8], 256, 256, 16
        $region16: #{tpu_custom_call.1} parent=11 // pred_fallthru
          _
        // Predicated region
        $region17: #{tpu_custom_call.1} parent=11 // pred_check
          %p197 = pneg %p99
        $region18: #{tpu_custom_call.1} parent=11 // pred_check_branch
          %199 = sbr.rel (%p197) target = $region20
        $region19: #{tpu_custom_call.1} parent=11 // pred_region
          _
        $region20: #{tpu_custom_call.1} parent=11 // pred_fallthru
          _
        // Predicated region
        $region21: #{tpu_custom_call.1} parent=11 // pred_check
          %p200 = pneg %p120
        $region22: #{tpu_custom_call.1} parent=11 // pred_check_branch
          %202 = sbr.rel (%p200) target = $region24
        $region23: #{tpu_custom_call.1} parent=11 // pred_region
          _
        $region24: #{tpu_custom_call.1} parent=11 // pred_fallthru
          _
        // Predicated region
        $region25: #{tpu_custom_call.1} parent=11 // pred_check
          %p203 = pneg %p141
        $region26: #{tpu_custom_call.1} parent=11 // pred_check_branch
          %205 = sbr.rel (%p203) target = $region28
        $region27: #{tpu_custom_call.1} parent=11 // pred_region
          _
        $region28: #{tpu_custom_call.1} parent=11 // pred_fallthru
          _
      $region12: #{tpu_custom_call.1} parent=5 // pred_fallthru
        _
      %p206 = scmp.lt.s32.totalorder %s19, 2
      // Predicated region
      $region29: #{tpu_custom_call.1} parent=5 // pred_check
        %p207 = pneg %p206
      $region30: #{tpu_custom_call.1} parent=5 // pred_check_branch
        %209 = sbr.rel (%p207) target = $region32
      $region31: #{tpu_custom_call.1} parent=5 // pred_region
        // Predicated region
        $region33: #{tpu_custom_call.1} parent=31 // pred_check
          %p210 = pneg %p51
        $region34: #{tpu_custom_call.1} parent=31 // pred_check_branch
          %212 = sbr.rel (%p210) target = $region36
        $region35: #{tpu_custom_call.1} parent=31 // pred_region
          %s213 = sand.u32 %s41, 1
          %s214 = scalar_lea.sflag [#allocation5], %s213
          %s215 = sand.u32 %s41, 1
          %s216 = smul.addr %s215, 32
          %s217 = scalar_lea.vmem [#allocation4], %s216
          %s219 = ssub.s32 512, 512
          %220 = vsyncadd %s214, %s219
          %s221 = smul.addr %s26, 4
          %s222 = smul.addr %s221, 128
          %s223 = scalar_lea.hbm %s0, %s222
          %s224 = sshll.u32 %s217, 4
          %s225 = int_to_ptr.vmem [resolvable:$true] %s224
          %230 = dma.hbm_to_vmem [thread:$0]  %s223, 512, %s225, %s214, 256, 256, 16
        $region36: #{tpu_custom_call.1} parent=31 // pred_fallthru
          _
      $region32: #{tpu_custom_call.1} parent=5 // pred_fallthru
        _
      %p231 = scmp.le.s32.totalorder 1, %s19
      %p232 = scmp.lt.s32.totalorder %s19, 3
      %p233 = pnand %p231, %p232
      %p234 = pneg %p233
      // Predicated region
      $region37: #{tpu_custom_call.1} parent=5 // pred_check
        _
      $region38: #{tpu_custom_call.1} parent=5 // pred_check_branch
        %236 = sbr.rel (%p233) target = $region40
      $region39: #{tpu_custom_call.1} parent=5 // pred_region
        %s237 = ssub.s32 %s19, 1
        %s238 = sand.u32 %s44, 1
        %s239 = scalar_lea.sflag [#allocation5], %s238
        %s240 = sand.u32 %s44, 1
        %s241 = smul.addr %s240, 32
        %s242 = scalar_lea.vmem [#allocation4], %s241
        // Predicated region
        $region41: #{tpu_custom_call.1} parent=39 // pred_check
          %p243 = pneg %p57
        $region42: #{tpu_custom_call.1} parent=39 // pred_check_branch
          %245 = sbr.rel (%p243) target = $region44
        $region43: #{tpu_custom_call.1} parent=39 // pred_region
          %246 = dma.done %s239, 512
        $region44: #{tpu_custom_call.1} parent=39 // pred_fallthru
          _
        // Predicated region
        $region45: #{tpu_custom_call.1} parent=39 // pred_check
          %p247 = pneg %p78
        $region46: #{tpu_custom_call.1} parent=39 // pred_check_branch
          %249 = sbr.rel (%p247) target = $region48
        $region47: #{tpu_custom_call.1} parent=39 // pred_region
          %250 = dma.done [#allocation8], 1280
        $region48: #{tpu_custom_call.1} parent=39 // pred_fallthru
          _
        %s251 = sand.u32 %s44, 1
        %s252 = scalar_lea.sflag [#allocation5], %s251
        %s253 = sand.u32 %s44, 1
        %s254 = smul.addr %s253, 32
        %s255 = scalar_lea.vmem [#allocation4], %s254
        %p256 = pneg %p57
        %p257 = pneg %p54
        %p258 = pneg %p78
        %p259 = pneg %p75
        %p260 = pneg %p99
        %p261 = pneg %p96
        %p262 = pneg %p120
        %p263 = pneg %p117
        %p264 = pneg %p141
        %p265 = pneg %p138
        %p266 = pneg %p169
        %p267 = pneg %p166
        %s268 = sand.u32 %s156, 1
        %s269 = scalar_lea.sflag [#allocation6], %s268
        %s270 = sand.u32 %s156, 1
        %s271 = smul.addr %s270, 32
        %s272 = scalar_lea.vmem [#allocation9], %s271
        %s273 = smul.u32 2, %s29
        %p274 = scmp.eq.s32.totalorder %s29, 0
        // Predicated region
        $region49: #{tpu_custom_call.1} parent=39 // pred_check
          %p275 = pneg %p274
        $region50: #{tpu_custom_call.1} parent=39 // pred_check_branch
          %277 = sbr.rel (%p275) target = $region52
        $region51: #{tpu_custom_call.1} parent=39 // pred_region
          %v278 = vld [vmem:[%s242] sm:$0xff]
          %v279 = vld [vmem:[%s242 + $0x8] sm:$0xff]
          %v280 = vld [vmem:[%s242 + $0x10] sm:$0xff]
          %v281 = vld [vmem:[%s242 + $0x18] sm:$0xff]
          %282 = vrot.lane.b32.xlu0 %v278, 17
          %v283 = vpop.permute.xlu0 %282
          %284 = vrot.lane.b32.xlu0 %v280, 17
          %v285 = vpop.permute.xlu0 %284
          %286 = vrot.lane.b32.xlu0 %v279, 17
          %v287 = vpop.permute.xlu0 %286
          %288 = vrot.lane.b32.xlu0 %v281, 17
          %v289 = vpop.permute.xlu0 %288
          %v290 = vlaneseq
          %v291 = vand.u32 %v290, 127
          %vm292 = vcmp.lt.s32.totalorder %v291, 17
          %v293 = vsel %vm292, %v283, %v287
          %v294 = vsel %vm292, %v285, %v289
          %v295 = vsel %vm292, %v287, %v283
          %v296 = vsel %vm292, %v289, %v285
          %v297 = vld [vmem:[%s3] ss:$8 sm:$0x3]
          %v299 = vlaneseq
          %v300 = vshrl.u32 %v299, 7
          %v301 = vsub.s32 0, %v300
          %v302 = vrot.slane %v297, %v301
          %v303 = vlaneseq
          %v304 = vshrl.u32 %v303, 7
          %v305 = vsub.s32 1, %v304
          %v306 = vrot.slane %v297, %v305
          %v309 = vmul.f32 %v295, %v302
          %v310 = vmul.f32 %v293, %v306
          %v311 = vmul.f32 %v296, %v302
          %v312 = vmul.f32 %v294, %v306
          %313 = vrot.lane.b32.xlu0 %v278, 16
          %v314 = vpop.permute.xlu0 %313
          %315 = vrot.lane.b32.xlu0 %v280, 16
          %v316 = vpop.permute.xlu0 %315
          %317 = vrot.lane.b32.xlu0 %v279, 16
          %v318 = vpop.permute.xlu0 %317
          %319 = vrot.lane.b32.xlu0 %v281, 16
          %v320 = vpop.permute.xlu0 %319
          %vm321 = vcmp.lt.s32.totalorder %v291, 16
          %v322 = vsel %vm321, %v314, %v318
          %v323 = vsel %vm321, %v316, %v320
          %v324 = vsel %vm321, %v318, %v314
          %v325 = vsel %vm321, %v320, %v316
          %s326 = scalar_lea.vmem %s3, 1
          %v327 = vld [vmem:[%s326] ss:$8 sm:$0x3]
          %v329 = vlaneseq
          %v330 = vshrl.u32 %v329, 7
          %v331 = vsub.s32 0, %v330
          %v332 = vrot.slane %v327, %v331
          %v333 = vlaneseq
          %v334 = vshrl.u32 %v333, 7
          %v335 = vsub.s32 1, %v334
          %v336 = vrot.slane %v327, %v335
          %v339 = vmul.f32 %v324, %v332
          %v340 = vmul.f32 %v322, %v336
          %v341 = vmul.f32 %v325, %v332
          %v342 = vmul.f32 %v323, %v336
          %343 = vrot.lane.b32.xlu0 %v278, 15
          %v344 = vpop.permute.xlu0 %343
          %345 = vrot.lane.b32.xlu0 %v280, 15
          %v346 = vpop.permute.xlu0 %345
          %347 = vrot.lane.b32.xlu0 %v279, 15
          %v348 = vpop.permute.xlu0 %347
          %349 = vrot.lane.b32.xlu0 %v281, 15
          %v350 = vpop.permute.xlu0 %349
          %vm351 = vcmp.lt.s32.totalorder %v291, 15
          %v352 = vsel %vm351, %v344, %v348
          %v353 = vsel %vm351, %v346, %v350
          %v354 = vsel %vm351, %v348, %v344
          %v355 = vsel %vm351, %v350, %v346
          %s356 = scalar_lea.vmem %s3, 2
          %v357 = vld [vmem:[%s356] ss:$8 sm:$0x3]
          %v359 = vlaneseq
          %v360 = vshrl.u32 %v359, 7
          %v361 = vsub.s32 0, %v360
          %v362 = vrot.slane %v357, %v361
          %v363 = vlaneseq
          %v364 = vshrl.u32 %v363, 7
          %v365 = vsub.s32 1, %v364
          %v366 = vrot.slane %v357, %v365
          %v369 = vmul.f32 %v354, %v362
          %v370 = vmul.f32 %v352, %v366
          %v371 = vmul.f32 %v355, %v362
          %v372 = vmul.f32 %v353, %v366
          %373 = vrot.lane.b32.xlu0 %v278, 1
          %v374 = vpop.permute.xlu0 %373
          %375 = vrot.lane.b32.xlu0 %v280, 1
          %v376 = vpop.permute.xlu0 %375
          %377 = vrot.lane.b32.xlu0 %v279, 1
          %v378 = vpop.permute.xlu0 %377
          %379 = vrot.lane.b32.xlu0 %v281, 1
          %v380 = vpop.permute.xlu0 %379
          %vm381 = vcmp.lt.s32.totalorder %v291, 1
          %v382 = vsel %vm381, %v374, %v378
          %v383 = vsel %vm381, %v376, %v380
          %v384 = vsel %vm381, %v378, %v374
          %v385 = vsel %vm381, %v380, %v376
          %s386 = scalar_lea.vmem %s3, 3
          %v387 = vld [vmem:[%s386] ss:$8 sm:$0x3]
          %v389 = vlaneseq
          %v390 = vshrl.u32 %v389, 7
          %v391 = vsub.s32 0, %v390
          %v392 = vrot.slane %v387, %v391
          %v393 = vlaneseq
          %v394 = vshrl.u32 %v393, 7
          %v395 = vsub.s32 1, %v394
          %v396 = vrot.slane %v387, %v395
          %v399 = vmul.f32 %v384, %v392
          %v400 = vmul.f32 %v382, %v396
          %v401 = vmul.f32 %v385, %v392
          %v402 = vmul.f32 %v383, %v396
          %s403 = scalar_lea.vmem %s3, 4
          %v404 = vld [vmem:[%s403] ss:$8 sm:$0x3]
          %v406 = vlaneseq
          %v407 = vshrl.u32 %v406, 7
          %v408 = vsub.s32 0, %v407
          %v409 = vrot.slane %v404, %v408
          %v410 = vlaneseq
          %v411 = vshrl.u32 %v410, 7
          %v412 = vsub.s32 1, %v411
          %v413 = vrot.slane %v404, %v412
          %v416 = vmul.f32 %v278, %v409
          %v417 = vmul.f32 %v279, %v413
          %v418 = vmul.f32 %v280, %v409
          %v419 = vmul.f32 %v281, %v413
          %420 = vrot.lane.b32.xlu0 %v278, 127
          %v421 = vpop.permute.xlu0 %420
          %422 = vrot.lane.b32.xlu0 %v280, 127
          %v423 = vpop.permute.xlu0 %422
          %424 = vrot.lane.b32.xlu0 %v279, 127
          %v425 = vpop.permute.xlu0 %424
          %426 = vrot.lane.b32.xlu0 %v281, 127
          %v427 = vpop.permute.xlu0 %426
          %vm428 = vcmp.lt.s32.totalorder %v291, 127
          %v429 = vsel %vm428, %v421, %v425
          %v430 = vsel %vm428, %v423, %v427
          %v431 = vsel %vm428, %v425, %v421
          %v432 = vsel %vm428, %v427, %v423
          %s433 = scalar_lea.vmem %s3, 5
          %v434 = vld [vmem:[%s433] ss:$8 sm:$0x3]
          %v436 = vlaneseq
          %v437 = vshrl.u32 %v436, 7
          %v438 = vsub.s32 0, %v437
          %v439 = vrot.slane %v434, %v438
          %v440 = vlaneseq
          %v441 = vshrl.u32 %v440, 7
          %v442 = vsub.s32 1, %v441
          %v443 = vrot.slane %v434, %v442
          %v446 = vmul.f32 %v429, %v439
          %v447 = vmul.f32 %v431, %v443
          %v448 = vmul.f32 %v430, %v439
          %v449 = vmul.f32 %v432, %v443
          %450 = vrot.lane.b32.xlu0 %v278, 113
          %v451 = vpop.permute.xlu0 %450
          %452 = vrot.lane.b32.xlu0 %v280, 113
          %v453 = vpop.permute.xlu0 %452
          %454 = vrot.lane.b32.xlu0 %v279, 113
          %v455 = vpop.permute.xlu0 %454
          %456 = vrot.lane.b32.xlu0 %v281, 113
          %v457 = vpop.permute.xlu0 %456
          %vm458 = vcmp.lt.s32.totalorder %v291, 113
          %v459 = vsel %vm458, %v451, %v455
          %v460 = vsel %vm458, %v453, %v457
          %v461 = vsel %vm458, %v455, %v451
          %v462 = vsel %vm458, %v457, %v453
          %s463 = scalar_lea.vmem %s3, 6
          %v464 = vld [vmem:[%s463] ss:$8 sm:$0x3]
          %v466 = vlaneseq
          %v467 = vshrl.u32 %v466, 7
          %v468 = vsub.s32 0, %v467
          %v469 = vrot.slane %v464, %v468
          %v470 = vlaneseq
          %v471 = vshrl.u32 %v470, 7
          %v472 = vsub.s32 1, %v471
          %v473 = vrot.slane %v464, %v472
          %v476 = vmul.f32 %v459, %v469
          %v477 = vmul.f32 %v461, %v473
          %v478 = vmul.f32 %v460, %v469
          %v479 = vmul.f32 %v462, %v473
          %480 = vrot.lane.b32.xlu0 %v278, 112
          %v481 = vpop.permute.xlu0 %480
          %482 = vrot.lane.b32.xlu0 %v280, 112
          %v483 = vpop.permute.xlu0 %482
          %484 = vrot.lane.b32.xlu0 %v279, 112
          %v485 = vpop.permute.xlu0 %484
          %486 = vrot.lane.b32.xlu0 %v281, 112
          %v487 = vpop.permute.xlu0 %486
          %vm488 = vcmp.lt.s32.totalorder %v291, 112
          %v489 = vsel %vm488, %v481, %v485
          %v490 = vsel %vm488, %v483, %v487
          %v491 = vsel %vm488, %v485, %v481
          %v492 = vsel %vm488, %v487, %v483
          %s493 = scalar_lea.vmem %s3, 7
          %v494 = vld [vmem:[%s493] ss:$8 sm:$0x3]
          %v496 = vlaneseq
          %v497 = vshrl.u32 %v496, 7
          %v498 = vsub.s32 0, %v497
          %v499 = vrot.slane %v494, %v498
          %v500 = vlaneseq
          %v501 = vshrl.u32 %v500, 7
          %v502 = vsub.s32 1, %v501
          %v503 = vrot.slane %v494, %v502
          %v506 = vmul.f32 %v489, %v499
          %v507 = vmul.f32 %v491, %v503
          %v508 = vmul.f32 %v490, %v499
          %v509 = vmul.f32 %v492, %v503
          %510 = vrot.lane.b32.xlu0 %v278, 111
          %v511 = vpop.permute.xlu0 %510
          %512 = vrot.lane.b32.xlu0 %v280, 111
          %v513 = vpop.permute.xlu0 %512
          %514 = vrot.lane.b32.xlu0 %v279, 111
          %v515 = vpop.permute.xlu0 %514
          %516 = vrot.lane.b32.xlu0 %v281, 111
          %v517 = vpop.permute.xlu0 %516
          %vm518 = vcmp.lt.s32.totalorder %v291, 111
          %v519 = vsel %vm518, %v511, %v515
          %v520 = vsel %vm518, %v513, %v517
          %v521 = vsel %vm518, %v515, %v511
          %v522 = vsel %vm518, %v517, %v513
          %s523 = scalar_lea.vmem %s3, 16
          %v524 = vld [vmem:[%s523] ss:$8 sm:$0x3]
          %v526 = vlaneseq
          %v527 = vshrl.u32 %v526, 7
          %v528 = vsub.s32 0, %v527
          %v529 = vrot.slane %v524, %v528
          %v530 = vlaneseq
          %v531 = vshrl.u32 %v530, 7
          %v532 = vsub.s32 1, %v531
          %v533 = vrot.slane %v524, %v532
          %v536 = vmul.f32 %v519, %v529
          %v537 = vmul.f32 %v521, %v533
          %v538 = vmul.f32 %v520, %v529
          %v539 = vmul.f32 %v522, %v533
          %v540 = vld [vmem:[#allocation7] sm:$0xff]
          %v541 = vld [vmem:[#allocation7 + $0x8] sm:$0xff]
          %v542 = vld [vmem:[#allocation7 + $0x10] sm:$0xff]
          %v543 = vld [vmem:[#allocation7 + $0x18] sm:$0xff]
          %v544 = vld [vmem:[#allocation7 + $0x20] sm:$0xff]
          %v545 = vld [vmem:[#allocation7 + $0x28] sm:$0xff]
          %v546 = vld [vmem:[#allocation7 + $0x30] sm:$0xff]
          %v547 = vld [vmem:[#allocation7 + $0x38] sm:$0xff]
          %v548 = vld [vmem:[#allocation7 + $0x40] sm:$0xff]
          %v549 = vld [vmem:[#allocation7 + $0x48] sm:$0xff]
          %v550 = vld [vmem:[%s2] sm:$0xff]
          %v551 = vld [vmem:[%s2 + $0x8] sm:$0xff]
          %v552 = vld [vmem:[%s2 + $0x10] sm:$0xff]
          %v553 = vld [vmem:[%s2 + $0x18] sm:$0xff]
          %v554 = vld [vmem:[%s2 + $0x20] sm:$0xff]
          %556 = vset.pattern.permute.xlu0 0
          %557 = vperm.xlu0 %556, %v550
          %v558 = vpop.permute.xlu0 %557
          %561 = vset.pattern.permute.xlu0 0
          %562 = vperm.xlu0 %561, %v551
          %v563 = vpop.permute.xlu0 %562
          %566 = vset.pattern.permute.xlu0 0
          %567 = vperm.xlu0 %566, %v552
          %v568 = vpop.permute.xlu0 %567
          %571 = vset.pattern.permute.xlu0 0
          %572 = vperm.xlu0 %571, %v553
          %v573 = vpop.permute.xlu0 %572
          %576 = vset.pattern.permute.xlu0 0
          %577 = vperm.xlu0 %576, %v554
          %v578 = vpop.permute.xlu0 %577
          %vm580 = vcmask 130048
          %v582 = vsel %vm580, %v541, 0
          %v585 = vsel %vm580, %v543, 0
          %v588 = vsel %vm580, %v545, 0
          %v591 = vsel %vm580, %v547, 0
          %v594 = vsel %vm580, %v549, 0
          %596 = vmatprep.subr.mxu0 %v509
          %597 = vmatpush1.msra.mxu0 %v508
          %598 = vmatprep.subr.mxu0 %v507
          %599 = vmatpush1.msra.mxu0 %v506
          %600 = vmatprep.subr.mxu0 %v479
          %601 = vmatpush1.msra.mxu0 %v478
          %602 = vmatprep.subr.mxu0 %v477
          %603 = vmatpush1.msra.mxu0 %v476
          %604 = vmatprep.subr.mxu0 %v449
          %605 = vmatpush1.msra.mxu0 %v448
          %606 = vmatprep.subr.mxu0 %v447
          %607 = vmatpush1.msra.mxu0 %v446
          %608 = vmatprep.subr.mxu0 %v419
          %609 = vmatpush1.msra.mxu0 %v418
          %610 = vmatprep.subr.mxu0 %v417
          %611 = vmatpush1.msra.mxu0 %v416
          %612 = vmatprep.subr.mxu0 %v402
          %613 = vmatpush1.msra.mxu0 %v401
          %614 = vmatprep.subr.mxu0 %v400
          %615 = vmatpush1.msra.mxu0 %v399
          %616 = vmatprep.subr.mxu0 %v372
          %617 = vmatpush1.msra.mxu0 %v371
          %618 = vmatprep.subr.mxu0 %v370
          %619 = vmatpush1.msra.mxu0 %v369
          %620 = vmatprep.subr.mxu0 %v342
          %621 = vmatpush1.msra.mxu0 %v341
          %622 = vmatprep.subr.mxu0 %v340
          %623 = vmatpush1.msra.mxu0 %v339
          %624 = vmatprep.subr.mxu0 %v312
          %625 = vmatpush1.msra.mxu0 %v311
          %626 = vmatprep.subr.mxu0 %v310
          %627 = vmatpush1.msra.mxu0 %v309
          %628 = vmatprep.subr.mxu0 0.0
          %629 = vmatpush2.msra.mxu0 0.0
          %630 = vmatprep.subr.mxu0 0.0
          %631 = vmatpush2.msra.mxu0 0.0
          %632 = vmatprep.subr.mxu0 0.0
          %633 = vmatpush2.msra.mxu0 0.0
          %634 = vmatprep.subr.mxu0 0.0
          %635 = vmatpush2.msra.mxu0 0.0
          %636 = vmatprep.subr.mxu0 0.0
          %637 = vmatpush2.msra.mxu0 0.0
          %638 = vmatprep.subr.mxu0 0.0
          %639 = vmatpush2.msra.mxu0 0.0
          %640 = vmatprep.subr.mxu0 0.0
          %641 = vmatpush2.msra.mxu0 0.0
          %642 = vmatprep.subr.mxu0 0.0
          %643 = vmatpush2.msra.mxu0 0.0
          %644 = vmatprep.subr.mxu0 0.0
          %645 = vmatpush2.msra.mxu0 0.0
          %646 = vmatprep.subr.mxu0 0.0
          %647 = vmatpush2.msra.mxu0 0.0
          %648 = vmatprep.subr.mxu0 0.0
          %649 = vmatpush2.msra.mxu0 0.0
          %650 = vmatprep.subr.mxu0 0.0
          %651 = vmatpush2.msra.mxu0 0.0
          %652 = vmatprep.subr.mxu0 0.0
          %653 = vmatpush2.msra.mxu0 0.0
          %654 = vmatprep.subr.mxu0 0.0
          %655 = vmatpush2.msra.mxu0 0.0
          %656 = vmatprep.subr.mxu0 %v539
          %657 = vmatpush2.msra.mxu0 %v538
          %658 = vmatprep.subr.mxu0 %v537
          %659 = vmatpush2.msra.mxu0 %v536
          %660 = vmatprep.mubr.f32.mxu0 %v582
          %661 = vmatmul.mubr.f32.gmra.mxu0 %v540
          %v662 = vpop.f32.mrf.mxu0
          %v663 = vadd.f32 %v558, %v662
          %v664 = vpop.f32.mrf.mxu0
          %v665 = vadd.f32 %v558, %v664
          %666 = vmatprep.mubr.f32.mxu0 %v585
          %667 = vmatmul.mubr.f32.gmra.mxu0 %v542
          %v668 = vpop.f32.mrf.mxu0
          %v669 = vadd.f32 %v563, %v668
          %v670 = vpop.f32.mrf.mxu0
          %v671 = vadd.f32 %v563, %v670
          %672 = vmatprep.mubr.f32.mxu0 %v588
          %673 = vmatmul.mubr.f32.gmra.mxu0 %v544
          %v674 = vpop.f32.mrf.mxu0
          %v675 = vadd.f32 %v568, %v674
          %v676 = vpop.f32.mrf.mxu0
          %v677 = vadd.f32 %v568, %v676
          %678 = vmatprep.mubr.f32.mxu0 %v591
          %679 = vmatmul.mubr.f32.gmra.mxu0 %v546
          %v680 = vpop.f32.mrf.mxu0
          %v681 = vadd.f32 %v573, %v680
          %v682 = vpop.f32.mrf.mxu0
          %v683 = vadd.f32 %v573, %v682
          %684 = vmatprep.mubr.f32.mxu0 %v594
          %685 = vmatmul.mubr.f32.gmra.mxu0 %v548
          %v686 = vpop.f32.mrf.mxu0
          %v687 = vadd.f32 %v578, %v686
          %v688 = vpop.f32.mrf.mxu0
          %v689 = vadd.f32 %v578, %v688
          %690 = vdwg.mxu0
          %691 = vst [vmem:[#allocation2] sm:$0xff] %v663
          %692 = vst [vmem:[#allocation2 + $0x8] sm:$0xff] %v665
          %693 = vst [vmem:[#allocation2 + $0x10] sm:$0xff] %v669
          %694 = vst [vmem:[#allocation2 + $0x18] sm:$0xff] %v671
          %695 = vst [vmem:[#allocation2 + $0x20] sm:$0xff] %v675
          %696 = vst [vmem:[#allocation2 + $0x28] sm:$0xff] %v677
          %697 = vst [vmem:[#allocation2 + $0x30] sm:$0xff] %v681
          %698 = vst [vmem:[#allocation2 + $0x38] sm:$0xff] %v683
          %699 = vst [vmem:[#allocation2 + $0x40] sm:$0xff] %v687
          %700 = vst [vmem:[#allocation2 + $0x48] sm:$0xff] %v689
        $region52: #{tpu_custom_call.1} parent=39 // pred_fallthru
          _
        %s701 = smul.u32 %s29, 256
        %s702 = sshra.s32 %s701, 7
        %s703 = sand.u32 %s701, 127
        %s704 = smul.addr %s702, 8
        %s705 = scalar_lea.vmem [#allocation2], %s704
        %v706 = vld [vmem:[%s705] sm:$0xff]
        %v707 = vld [vmem:[%s705 + $0x8] sm:$0xff]
        %v708 = vld [vmem:[#allocation2 + $0x10] sm:$0xff]
        %v709 = vld [vmem:[#allocation2 + $0x18] sm:$0xff]
        %v710 = vld [vmem:[#allocation2 + $0x20] sm:$0xff]
        %v711 = vld [vmem:[#allocation2 + $0x28] sm:$0xff]
        %v712 = vld [vmem:[#allocation2 + $0x30] sm:$0xff]
        %v713 = vld [vmem:[#allocation2 + $0x38] sm:$0xff]
        %v714 = vld [vmem:[#allocation2 + $0x40] sm:$0xff]
        %v715 = vld [vmem:[#allocation2 + $0x48] sm:$0xff]
        %716 = vxpose.xlu0.b32.start [1/16] %v708, 128
        %717 = vxpose.xlu0.b32.cont [2/16] 0.0, 128
        %718 = vxpose.xlu0.b32.cont [3/16] 0.0, 128
        %719 = vxpose.xlu0.b32.cont [4/16] 0.0, 128
        %720 = vxpose.xlu0.b32.cont [5/16] 0.0, 128
        %721 = vxpose.xlu0.b32.cont [6/16] 0.0, 128
        %722 = vxpose.xlu0.b32.cont [7/16] 0.0, 128
        %723 = vxpose.xlu0.b32.cont [8/16] 0.0, 128
        %724 = vxpose.xlu0.b32.cont [9/16] 0.0, 128
        %725 = vxpose.xlu0.b32.cont [10/16] 0.0, 128
        %726 = vxpose.xlu0.b32.cont [11/16] 0.0, 128
        %727 = vxpose.xlu0.b32.cont [12/16] 0.0, 128
        %728 = vxpose.xlu0.b32.cont [13/16] 0.0, 128
        %729 = vxpose.xlu0.b32.cont [14/16] 0.0, 128
        %730 = vxpose.xlu0.b32.cont [15/16] 0.0, 128
        %731 = vxpose.xlu0.b32.end [16/16] 0.0, 128
        %v732 = vpop.trf.xlu0
        %v733 = vpop.trf.xlu0
        %v734 = vpop.trf.xlu0
        %v735 = vpop.trf.xlu0
        %v736 = vpop.trf.xlu0
        %v737 = vpop.trf.xlu0
        %v738 = vpop.trf.xlu0
        %v739 = vpop.trf.xlu0
        %v740 = vpop.trf.xlu0
        %v741 = vpop.trf.xlu0
        %v742 = vpop.trf.xlu0
        %v743 = vpop.trf.xlu0
        %v744 = vpop.trf.xlu0
        %v745 = vpop.trf.xlu0
        %v746 = vpop.trf.xlu0
        %v747 = vpop.trf.xlu0
        %748 = vxpose.xlu0.b32.start [1/16] %v709, 128
        %749 = vxpose.xlu0.b32.cont [2/16] 0.0, 128
        %750 = vxpose.xlu0.b32.cont [3/16] 0.0, 128
        %751 = vxpose.xlu0.b32.cont [4/16] 0.0, 128
        %752 = vxpose.xlu0.b32.cont [5/16] 0.0, 128
        %753 = vxpose.xlu0.b32.cont [6/16] 0.0, 128
        %754 = vxpose.xlu0.b32.cont [7/16] 0.0, 128
        %755 = vxpose.xlu0.b32.cont [8/16] 0.0, 128
        %756 = vxpose.xlu0.b32.cont [9/16] 0.0, 128
        %757 = vxpose.xlu0.b32.cont [10/16] 0.0, 128
        %758 = vxpose.xlu0.b32.cont [11/16] 0.0, 128
        %759 = vxpose.xlu0.b32.cont [12/16] 0.0, 128
        %760 = vxpose.xlu0.b32.cont [13/16] 0.0, 128
        %761 = vxpose.xlu0.b32.cont [14/16] 0.0, 128
        %762 = vxpose.xlu0.b32.cont [15/16] 0.0, 128
        %763 = vxpose.xlu0.b32.end [16/16] 0.0, 128
        %v764 = vpop.trf.xlu0
        %v765 = vpop.trf.xlu0
        %v766 = vpop.trf.xlu0
        %v767 = vpop.trf.xlu0
        %v768 = vpop.trf.xlu0
        %v769 = vpop.trf.xlu0
        %v770 = vpop.trf.xlu0
        %v771 = vpop.trf.xlu0
        %v772 = vpop.trf.xlu0
        %v773 = vpop.trf.xlu0
        %v774 = vpop.trf.xlu0
        %v775 = vpop.trf.xlu0
        %v776 = vpop.trf.xlu0
        %v777 = vpop.trf.xlu0
        %v778 = vpop.trf.xlu0
        %v779 = vpop.trf.xlu0
        %vm780 = vcmask 64512
        %v782 = vsel %vm780, %v732, 0
        %v785 = vsel %vm780, %v733, 0
        %v788 = vsel %vm780, %v734, 0
        %v791 = vsel %vm780, %v735, 0
        %v794 = vsel %vm780, %v736, 0
        %v797 = vsel %vm780, %v737, 0
        %v800 = vsel %vm780, %v738, 0
        %v803 = vsel %vm780, %v739, 0
        %v806 = vsel %vm780, %v740, 0
        %v809 = vsel %vm780, %v741, 0
        %v812 = vsel %vm780, %v742, 0
        %v815 = vsel %vm780, %v743, 0
        %v818 = vsel %vm780, %v744, 0
        %v821 = vsel %vm780, %v745, 0
        %v824 = vsel %vm780, %v746, 0
        %v827 = vsel %vm780, %v747, 0
        %v830 = vsel %vm780, %v764, 0
        %v833 = vsel %vm780, %v765, 0
        %v836 = vsel %vm780, %v766, 0
        %v839 = vsel %vm780, %v767, 0
        %v842 = vsel %vm780, %v768, 0
        %v845 = vsel %vm780, %v769, 0
        %v848 = vsel %vm780, %v770, 0
        %v851 = vsel %vm780, %v771, 0
        %v854 = vsel %vm780, %v772, 0
        %v857 = vsel %vm780, %v773, 0
        %v860 = vsel %vm780, %v774, 0
        %v863 = vsel %vm780, %v775, 0
        %v866 = vsel %vm780, %v776, 0
        %v869 = vsel %vm780, %v777, 0
        %v872 = vsel %vm780, %v778, 0
        %v875 = vsel %vm780, %v779, 0
        %877 = vmatprep.subr.mxu0 0.0
        %878 = vmatpush1.msra.mxu0 0.0
        %879 = vmatprep.subr.mxu0 0.0
        %880 = vmatpush1.msra.mxu0 0.0
        %881 = vmatprep.subr.mxu0 0.0
        %882 = vmatpush1.msra.mxu0 0.0
        %883 = vmatprep.subr.mxu0 0.0
        %884 = vmatpush1.msra.mxu0 0.0
        %885 = vmatprep.subr.mxu0 0.0
        %886 = vmatpush1.msra.mxu0 0.0
        %887 = vmatprep.subr.mxu0 0.0
        %888 = vmatpush1.msra.mxu0 0.0
        %889 = vmatprep.subr.mxu0 0.0
        %890 = vmatpush1.msra.mxu0 0.0
        %891 = vmatprep.subr.mxu0 0.0
        %892 = vmatpush1.msra.mxu0 0.0
        %893 = vmatprep.subr.mxu0 0.0
        %894 = vmatpush1.msra.mxu0 0.0
        %895 = vmatprep.subr.mxu0 0.0
        %896 = vmatpush1.msra.mxu0 0.0
        %897 = vmatprep.subr.mxu0 0.0
        %898 = vmatpush1.msra.mxu0 0.0
        %899 = vmatprep.subr.mxu0 0.0
        %900 = vmatpush1.msra.mxu0 0.0
        %901 = vmatprep.subr.mxu0 0.0
        %902 = vmatpush1.msra.mxu0 0.0
        %903 = vmatprep.subr.mxu0 0.0
        %904 = vmatpush1.msra.mxu0 0.0
        %905 = vmatprep.subr.mxu0 0.0
        %906 = vmatpush1.msra.mxu0 0.0
        %907 = vmatprep.subr.mxu0 %v707
        %908 = vmatpush1.msra.mxu0 %v706
        %909 = vmatprep.subr.mxu0 0.0
        %910 = vmatpush2.msra.mxu0 0.0
        %911 = vmatprep.subr.mxu0 0.0
        %912 = vmatpush2.msra.mxu0 0.0
        %913 = vmatprep.subr.mxu0 0.0
        %914 = vmatpush2.msra.mxu0 0.0
        %915 = vmatprep.subr.mxu0 0.0
        %916 = vmatpush2.msra.mxu0 0.0
        %917 = vmatprep.subr.mxu0 0.0
        %918 = vmatpush2.msra.mxu0 0.0
        %919 = vmatprep.subr.mxu0 0.0
        %920 = vmatpush2.msra.mxu0 0.0
        %921 = vmatprep.subr.mxu0 0.0
        %922 = vmatpush2.msra.mxu0 0.0
        %923 = vmatprep.subr.mxu0 0.0
        %924 = vmatpush2.msra.mxu0 0.0
        %925 = vmatprep.subr.mxu0 0.0
        %926 = vmatpush2.msra.mxu0 0.0
        %927 = vmatprep.subr.mxu0 0.0
        %928 = vmatpush2.msra.mxu0 0.0
        %929 = vmatprep.subr.mxu0 0.0
        %930 = vmatpush2.msra.mxu0 0.0
        %931 = vmatprep.subr.mxu0 0.0
        %932 = vmatpush2.msra.mxu0 0.0
        %933 = vmatprep.subr.mxu0 0.0
        %934 = vmatpush2.msra.mxu0 0.0
        %935 = vmatprep.subr.mxu0 0.0
        %936 = vmatpush2.msra.mxu0 0.0
        %937 = vmatprep.subr.mxu0 0.0
        %938 = vmatpush2.msra.mxu0 0.0
        %939 = vmatprep.subr.mxu0 0.0
        %940 = vmatpush2.msra.mxu0 0.0
        %941 = vmatprep.mubr.f32.mxu0 0.0
        %942 = vmatmul.mubr.f32.gmra.mxu0 %v782
        %v943 = vpop.f32.mrf.mxu0
        %v944 = vadd.f32 0.0, %v943
        %v945 = vpop.f32.mrf.mxu0
        %v946 = vadd.f32 0.0, %v945
        %947 = vmatprep.mubr.f32.mxu0 0.0
        %948 = vmatmul.mubr.f32.gmra.mxu0 %v785
        %v949 = vpop.f32.mrf.mxu0
        %v950 = vadd.f32 0.0, %v949
        %v951 = vpop.f32.mrf.mxu0
        %v952 = vadd.f32 0.0, %v951
        %953 = vmatprep.mubr.f32.mxu0 0.0
        %954 = vmatmul.mubr.f32.gmra.mxu0 %v788
        %v955 = vpop.f32.mrf.mxu0
        %v956 = vadd.f32 0.0, %v955
        %v957 = vpop.f32.mrf.mxu0
        %v958 = vadd.f32 0.0, %v957
        %959 = vmatprep.mubr.f32.mxu0 0.0
        %960 = vmatmul.mubr.f32.gmra.mxu0 %v791
        %v961 = vpop.f32.mrf.mxu0
        %v962 = vadd.f32 0.0, %v961
        %v963 = vpop.f32.mrf.mxu0
        %v964 = vadd.f32 0.0, %v963
        %965 = vmatprep.mubr.f32.mxu0 0.0
        %966 = vmatmul.mubr.f32.gmra.mxu0 %v794
        %v967 = vpop.f32.mrf.mxu0
        %v968 = vadd.f32 0.0, %v967
        %v969 = vpop.f32.mrf.mxu0
        %v970 = vadd.f32 0.0, %v969
        %971 = vmatprep.mubr.f32.mxu0 0.0
        %972 = vmatmul.mubr.f32.gmra.mxu0 %v797
        %v973 = vpop.f32.mrf.mxu0
        %v974 = vadd.f32 0.0, %v973
        %v975 = vpop.f32.mrf.mxu0
        %v976 = vadd.f32 0.0, %v975
        %977 = vmatprep.mubr.f32.mxu0 0.0
        %978 = vmatmul.mubr.f32.gmra.mxu0 %v800
        %v979 = vpop.f32.mrf.mxu0
        %v980 = vadd.f32 0.0, %v979
        %v981 = vpop.f32.mrf.mxu0
        %v982 = vadd.f32 0.0, %v981
        %983 = vmatprep.mubr.f32.mxu0 0.0
        %984 = vmatmul.mubr.f32.gmra.mxu0 %v803
        %v985 = vpop.f32.mrf.mxu0
        %v986 = vadd.f32 0.0, %v985
        %v987 = vpop.f32.mrf.mxu0
        %v988 = vadd.f32 0.0, %v987
        %989 = vmatprep.mubr.f32.mxu0 0.0
        %990 = vmatmul.mubr.f32.gmra.mxu0 %v806
        %v991 = vpop.f32.mrf.mxu0
        %v992 = vadd.f32 0.0, %v991
        %v993 = vpop.f32.mrf.mxu0
        %v994 = vadd.f32 0.0, %v993
        %995 = vmatprep.mubr.f32.mxu0 0.0
        %996 = vmatmul.mubr.f32.gmra.mxu0 %v809
        %v997 = vpop.f32.mrf.mxu0
        %v998 = vadd.f32 0.0, %v997
        %v999 = vpop.f32.mrf.mxu0
        %v1000 = vadd.f32 0.0, %v999
        %1001 = vmatprep.mubr.f32.mxu0 0.0
        %1002 = vmatmul.mubr.f32.gmra.mxu0 %v812
        %v1003 = vpop.f32.mrf.mxu0
        %v1004 = vadd.f32 0.0, %v1003
        %v1005 = vpop.f32.mrf.mxu0
        %v1006 = vadd.f32 0.0, %v1005
        %1007 = vmatprep.mubr.f32.mxu0 0.0
        %1008 = vmatmul.mubr.f32.gmra.mxu0 %v815
        %v1009 = vpop.f32.mrf.mxu0
        %v1010 = vadd.f32 0.0, %v1009
        %v1011 = vpop.f32.mrf.mxu0
        %v1012 = vadd.f32 0.0, %v1011
        %1013 = vmatprep.mubr.f32.mxu0 0.0
        %1014 = vmatmul.mubr.f32.gmra.mxu0 %v818
        %v1015 = vpop.f32.mrf.mxu0
        %v1016 = vadd.f32 0.0, %v1015
        %v1017 = vpop.f32.mrf.mxu0
        %v1018 = vadd.f32 0.0, %v1017
        %1019 = vmatprep.mubr.f32.mxu0 0.0
        %1020 = vmatmul.mubr.f32.gmra.mxu0 %v821
        %v1021 = vpop.f32.mrf.mxu0
        %v1022 = vadd.f32 0.0, %v1021
        %v1023 = vpop.f32.mrf.mxu0
        %v1024 = vadd.f32 0.0, %v1023
        %1025 = vmatprep.mubr.f32.mxu0 0.0
        %1026 = vmatmul.mubr.f32.gmra.mxu0 %v824
        %v1027 = vpop.f32.mrf.mxu0
        %v1028 = vadd.f32 0.0, %v1027
        %v1029 = vpop.f32.mrf.mxu0
        %v1030 = vadd.f32 0.0, %v1029
        %1031 = vmatprep.mubr.f32.mxu0 0.0
        %1032 = vmatmul.mubr.f32.gmra.mxu0 %v827
        %v1033 = vpop.f32.mrf.mxu0
        %v1034 = vadd.f32 0.0, %v1033
        %v1035 = vpop.f32.mrf.mxu0
        %v1036 = vadd.f32 0.0, %v1035
        %1037 = vmatprep.mubr.f32.mxu0 0.0
        %1038 = vmatmul.mubr.f32.gmra.mxu0 %v830
        %v1039 = vpop.f32.mrf.mxu0
        %v1040 = vadd.f32 0.0, %v1039
        %v1041 = vpop.f32.mrf.mxu0
        %v1042 = vadd.f32 0.0, %v1041
        %1043 = vmatprep.mubr.f32.mxu0 0.0
        %1044 = vmatmul.mubr.f32.gmra.mxu0 %v833
        %v1045 = vpop.f32.mrf.mxu0
        %v1046 = vadd.f32 0.0, %v1045
        %v1047 = vpop.f32.mrf.mxu0
        %v1048 = vadd.f32 0.0, %v1047
        %1049 = vmatprep.mubr.f32.mxu0 0.0
        %1050 = vmatmul.mubr.f32.gmra.mxu0 %v836
        %v1051 = vpop.f32.mrf.mxu0
        %v1052 = vadd.f32 0.0, %v1051
        %v1053 = vpop.f32.mrf.mxu0
        %v1054 = vadd.f32 0.0, %v1053
        %1055 = vmatprep.mubr.f32.mxu0 0.0
        %1056 = vmatmul.mubr.f32.gmra.mxu0 %v839
        %v1057 = vpop.f32.mrf.mxu0
        %v1058 = vadd.f32 0.0, %v1057
        %v1059 = vpop.f32.mrf.mxu0
        %v1060 = vadd.f32 0.0, %v1059
        %1061 = vmatprep.mubr.f32.mxu0 0.0
        %1062 = vmatmul.mubr.f32.gmra.mxu0 %v842
        %v1063 = vpop.f32.mrf.mxu0
        %v1064 = vadd.f32 0.0, %v1063
        %v1065 = vpop.f32.mrf.mxu0
        %v1066 = vadd.f32 0.0, %v1065
        %1067 = vmatprep.mubr.f32.mxu0 0.0
        %1068 = vmatmul.mubr.f32.gmra.mxu0 %v845
        %v1069 = vpop.f32.mrf.mxu0
        %v1070 = vadd.f32 0.0, %v1069
        %v1071 = vpop.f32.mrf.mxu0
        %v1072 = vadd.f32 0.0, %v1071
        %1073 = vmatprep.mubr.f32.mxu0 0.0
        %1074 = vmatmul.mubr.f32.gmra.mxu0 %v848
        %v1075 = vpop.f32.mrf.mxu0
        %v1076 = vadd.f32 0.0, %v1075
        %v1077 = vpop.f32.mrf.mxu0
        %v1078 = vadd.f32 0.0, %v1077
        %1079 = vmatprep.mubr.f32.mxu0 0.0
        %1080 = vmatmul.mubr.f32.gmra.mxu0 %v851
        %v1081 = vpop.f32.mrf.mxu0
        %v1082 = vadd.f32 0.0, %v1081
        %v1083 = vpop.f32.mrf.mxu0
        %v1084 = vadd.f32 0.0, %v1083
        %1085 = vmatprep.mubr.f32.mxu0 0.0
        %1086 = vmatmul.mubr.f32.gmra.mxu0 %v854
        %v1087 = vpop.f32.mrf.mxu0
        %v1088 = vadd.f32 0.0, %v1087
        %v1089 = vpop.f32.mrf.mxu0
        %v1090 = vadd.f32 0.0, %v1089
        %1091 = vmatprep.mubr.f32.mxu0 0.0
        %1092 = vmatmul.mubr.f32.gmra.mxu0 %v857
        %v1093 = vpop.f32.mrf.mxu0
        %v1094 = vadd.f32 0.0, %v1093
        %v1095 = vpop.f32.mrf.mxu0
        %v1096 = vadd.f32 0.0, %v1095
        %1097 = vmatprep.mubr.f32.mxu0 0.0
        %1098 = vmatmul.mubr.f32.gmra.mxu0 %v860
        %v1099 = vpop.f32.mrf.mxu0
        %v1100 = vadd.f32 0.0, %v1099
        %v1101 = vpop.f32.mrf.mxu0
        %v1102 = vadd.f32 0.0, %v1101
        %1103 = vmatprep.mubr.f32.mxu0 0.0
        %1104 = vmatmul.mubr.f32.gmra.mxu0 %v863
        %v1105 = vpop.f32.mrf.mxu0
        %v1106 = vadd.f32 0.0, %v1105
        %v1107 = vpop.f32.mrf.mxu0
        %v1108 = vadd.f32 0.0, %v1107
        %1109 = vmatprep.mubr.f32.mxu0 0.0
        %1110 = vmatmul.mubr.f32.gmra.mxu0 %v866
        %v1111 = vpop.f32.mrf.mxu0
        %v1112 = vadd.f32 0.0, %v1111
        %v1113 = vpop.f32.mrf.mxu0
        %v1114 = vadd.f32 0.0, %v1113
        %1115 = vmatprep.mubr.f32.mxu0 0.0
        %1116 = vmatmul.mubr.f32.gmra.mxu0 %v869
        %v1117 = vpop.f32.mrf.mxu0
        %v1118 = vadd.f32 0.0, %v1117
        %v1119 = vpop.f32.mrf.mxu0
        %v1120 = vadd.f32 0.0, %v1119
        %1121 = vmatprep.mubr.f32.mxu0 0.0
        %1122 = vmatmul.mubr.f32.gmra.mxu0 %v872
        %v1123 = vpop.f32.mrf.mxu0
        %v1124 = vadd.f32 0.0, %v1123
        %v1125 = vpop.f32.mrf.mxu0
        %v1126 = vadd.f32 0.0, %v1125
        %1127 = vmatprep.mubr.f32.mxu0 0.0
        %1128 = vmatmul.mubr.f32.gmra.mxu0 %v875
        %v1129 = vpop.f32.mrf.mxu0
        %v1130 = vadd.f32 0.0, %v1129
        %v1131 = vpop.f32.mrf.mxu0
        %v1132 = vadd.f32 0.0, %v1131
        %1133 = vdwg.mxu0
        %v1134 = vmax.f32 %v944, %v956
        %v1135 = vmax.f32 %v950, %v962
        %v1136 = vmax.f32 %v1134, %v968
        %v1137 = vmax.f32 %v1135, %v974
        %v1138 = vmax.f32 %v1136, %v980
        %v1139 = vmax.f32 %v1137, %v986
        %v1140 = vmax.f32 %v1138, %v992
        %v1141 = vmax.f32 %v1139, %v998
        %v1142 = vmax.f32 %v1140, %v1004
        %v1143 = vmax.f32 %v1141, %v1010
        %v1144 = vmax.f32 %v1142, %v1016
        %v1145 = vmax.f32 %v1143, %v1022
        %v1146 = vmax.f32 %v1144, %v1028
        %v1147 = vmax.f32 %v1145, %v1034
        %v1148 = vmax.f32 %v1146, %v1040
        %v1149 = vmax.f32 %v1147, %v1046
        %v1150 = vmax.f32 %v1148, %v1052
        %v1151 = vmax.f32 %v1149, %v1058
        %v1152 = vmax.f32 %v1150, %v1064
        %v1153 = vmax.f32 %v1151, %v1070
        %v1154 = vmax.f32 %v1152, %v1076
        %v1155 = vmax.f32 %v1153, %v1082
        %v1156 = vmax.f32 %v1154, %v1088
        %v1157 = vmax.f32 %v1155, %v1094
        %v1158 = vmax.f32 %v1156, %v1100
        %v1159 = vmax.f32 %v1157, %v1106
        %v1160 = vmax.f32 %v1158, %v1112
        %v1161 = vmax.f32 %v1159, %v1118
        %v1162 = vmax.f32 %v1160, %v1124
        %v1163 = vmax.f32 %v1161, %v1130
        %v1164 = vmax.f32 %v1162, %v1163
        %v1165 = vrot.slane %v1164, 4
        %v1166 = vmax.f32 %v1164, %v1165
        %v1167 = vrot.slane %v1166, 2
        %v1168 = vmax.f32 %v1166, %v1167
        %v1169 = vrot.slane %v1168, 1
        %v1170 = vmax.f32 %v1168, %v1169
        %v1171 = vmax.f32 %v946, %v958
        %v1172 = vmax.f32 %v952, %v964
        %v1173 = vmax.f32 %v1171, %v970
        %v1174 = vmax.f32 %v1172, %v976
        %v1175 = vmax.f32 %v1173, %v982
        %v1176 = vmax.f32 %v1174, %v988
        %v1177 = vmax.f32 %v1175, %v994
        %v1178 = vmax.f32 %v1176, %v1000
        %v1179 = vmax.f32 %v1177, %v1006
        %v1180 = vmax.f32 %v1178, %v1012
        %v1181 = vmax.f32 %v1179, %v1018
        %v1182 = vmax.f32 %v1180, %v1024
        %v1183 = vmax.f32 %v1181, %v1030
        %v1184 = vmax.f32 %v1182, %v1036
        %v1185 = vmax.f32 %v1183, %v1042
        %v1186 = vmax.f32 %v1184, %v1048
        %v1187 = vmax.f32 %v1185, %v1054
        %v1188 = vmax.f32 %v1186, %v1060
        %v1189 = vmax.f32 %v1187, %v1066
        %v1190 = vmax.f32 %v1188, %v1072
        %v1191 = vmax.f32 %v1189, %v1078
        %v1192 = vmax.f32 %v1190, %v1084
        %v1193 = vmax.f32 %v1191, %v1090
        %v1194 = vmax.f32 %v1192, %v1096
        %v1195 = vmax.f32 %v1193, %v1102
        %v1196 = vmax.f32 %v1194, %v1108
        %v1197 = vmax.f32 %v1195, %v1114
        %v1198 = vmax.f32 %v1196, %v1120
        %v1199 = vmax.f32 %v1197, %v1126
        %v1200 = vmax.f32 %v1198, %v1132
        %v1201 = vmax.f32 %v1199, %v1200
        %v1202 = vrot.slane %v1201, 4
        %v1203 = vmax.f32 %v1201, %v1202
        %v1204 = vrot.slane %v1203, 2
        %v1205 = vmax.f32 %v1203, %v1204
        %v1206 = vrot.slane %v1205, 1
        %v1207 = vmax.f32 %v1205, %v1206
        %v1208 = vsub.f32 %v944, %v1170
        %v1209 = vsub.f32 %v946, %v1207
        %v1210 = vsub.f32 %v950, %v1170
        %v1211 = vsub.f32 %v952, %v1207
        %v1212 = vsub.f32 %v956, %v1170
        %v1213 = vsub.f32 %v958, %v1207
        %v1214 = vsub.f32 %v962, %v1170
        %v1215 = vsub.f32 %v964, %v1207
        %v1216 = vsub.f32 %v968, %v1170
        %v1217 = vsub.f32 %v970, %v1207
        %v1218 = vsub.f32 %v974, %v1170
        %v1219 = vsub.f32 %v976, %v1207
        %v1220 = vsub.f32 %v980, %v1170
        %v1221 = vsub.f32 %v982, %v1207
        %v1222 = vsub.f32 %v986, %v1170
        %v1223 = vsub.f32 %v988, %v1207
        %v1224 = vsub.f32 %v992, %v1170
        %v1225 = vsub.f32 %v994, %v1207
        %v1226 = vsub.f32 %v998, %v1170
        %v1227 = vsub.f32 %v1000, %v1207
        %v1228 = vsub.f32 %v1004, %v1170
        %v1229 = vsub.f32 %v1006, %v1207
        %v1230 = vsub.f32 %v1010, %v1170
        %v1231 = vsub.f32 %v1012, %v1207
        %v1232 = vsub.f32 %v1016, %v1170
        %v1233 = vsub.f32 %v1018, %v1207
        %v1234 = vsub.f32 %v1022, %v1170
        %v1235 = vsub.f32 %v1024, %v1207
        %v1236 = vsub.f32 %v1028, %v1170
        %v1237 = vsub.f32 %v1030, %v1207
        %v1238 = vsub.f32 %v1034, %v1170
        %v1239 = vsub.f32 %v1036, %v1207
        %v1240 = vsub.f32 %v1040, %v1170
        %v1241 = vsub.f32 %v1042, %v1207
        %v1242 = vsub.f32 %v1046, %v1170
        %v1243 = vsub.f32 %v1048, %v1207
        %v1244 = vsub.f32 %v1052, %v1170
        %v1245 = vsub.f32 %v1054, %v1207
        %v1246 = vsub.f32 %v1058, %v1170
        %v1247 = vsub.f32 %v1060, %v1207
        %v1248 = vsub.f32 %v1064, %v1170
        %v1249 = vsub.f32 %v1066, %v1207
        %v1250 = vsub.f32 %v1070, %v1170
        %v1251 = vsub.f32 %v1072, %v1207
        %v1252 = vsub.f32 %v1076, %v1170
        %v1253 = vsub.f32 %v1078, %v1207
        %v1254 = vsub.f32 %v1082, %v1170
        %v1255 = vsub.f32 %v1084, %v1207
        %v1256 = vsub.f32 %v1088, %v1170
        %v1257 = vsub.f32 %v1090, %v1207
        %v1258 = vsub.f32 %v1094, %v1170
        %v1259 = vsub.f32 %v1096, %v1207
        %v1260 = vsub.f32 %v1100, %v1170
        %v1261 = vsub.f32 %v1102, %v1207
        %v1262 = vsub.f32 %v1106, %v1170
        %v1263 = vsub.f32 %v1108, %v1207
        %v1264 = vsub.f32 %v1112, %v1170
        %v1265 = vsub.f32 %v1114, %v1207
        %v1266 = vsub.f32 %v1118, %v1170
        %v1267 = vsub.f32 %v1120, %v1207
        %v1268 = vsub.f32 %v1124, %v1170
        %v1269 = vsub.f32 %v1126, %v1207
        %v1270 = vsub.f32 %v1130, %v1170
        %v1271 = vsub.f32 %v1132, %v1207
        %v1272 = vmul.f32 %v1208, 1.442695
        %v1273 = vpow.pop %v1272
        %v1274 = vmul.f32 %v1209, 1.442695
        %v1275 = vpow.pop %v1274
        %v1276 = vmul.f32 %v1210, 1.442695
        %v1277 = vpow.pop %v1276
        %v1278 = vmul.f32 %v1211, 1.442695
        %v1279 = vpow.pop %v1278
        %v1280 = vmul.f32 %v1212, 1.442695
        %v1281 = vpow.pop %v1280
        %v1282 = vmul.f32 %v1213, 1.442695
        %v1283 = vpow.pop %v1282
        %v1284 = vmul.f32 %v1214, 1.442695
        %v1285 = vpow.pop %v1284
        %v1286 = vmul.f32 %v1215, 1.442695
        %v1287 = vpow.pop %v1286
        %v1288 = vmul.f32 %v1216, 1.442695
        %v1289 = vpow.pop %v1288
        %v1290 = vmul.f32 %v1217, 1.442695
        %v1291 = vpow.pop %v1290
        %v1292 = vmul.f32 %v1218, 1.442695
        %v1293 = vpow.pop %v1292
        %v1294 = vmul.f32 %v1219, 1.442695
        %v1295 = vpow.pop %v1294
        %v1296 = vmul.f32 %v1220, 1.442695
        %v1297 = vpow.pop %v1296
        %v1298 = vmul.f32 %v1221, 1.442695
        %v1299 = vpow.pop %v1298
        %v1300 = vmul.f32 %v1222, 1.442695
        %v1301 = vpow.pop %v1300
        %v1302 = vmul.f32 %v1223, 1.442695
        %v1303 = vpow.pop %v1302
        %v1304 = vmul.f32 %v1224, 1.442695
        %v1305 = vpow.pop %v1304
        %v1306 = vmul.f32 %v1225, 1.442695
        %v1307 = vpow.pop %v1306
        %v1308 = vmul.f32 %v1226, 1.442695
        %v1309 = vpow.pop %v1308
        %v1310 = vmul.f32 %v1227, 1.442695
        %v1311 = vpow.pop %v1310
        %v1312 = vmul.f32 %v1228, 1.442695
        %v1313 = vpow.pop %v1312
        %v1314 = vmul.f32 %v1229, 1.442695
        %v1315 = vpow.pop %v1314
        %v1316 = vmul.f32 %v1230, 1.442695
        %v1317 = vpow.pop %v1316
        %v1318 = vmul.f32 %v1231, 1.442695
        %v1319 = vpow.pop %v1318
        %v1320 = vmul.f32 %v1232, 1.442695
        %v1321 = vpow.pop %v1320
        %v1322 = vmul.f32 %v1233, 1.442695
        %v1323 = vpow.pop %v1322
        %v1324 = vmul.f32 %v1234, 1.442695
        %v1325 = vpow.pop %v1324
        %v1326 = vmul.f32 %v1235, 1.442695
        %v1327 = vpow.pop %v1326
        %v1328 = vmul.f32 %v1236, 1.442695
        %v1329 = vpow.pop %v1328
        %v1330 = vmul.f32 %v1237, 1.442695
        %v1331 = vpow.pop %v1330
        %v1332 = vmul.f32 %v1238, 1.442695
        %v1333 = vpow.pop %v1332
        %v1334 = vmul.f32 %v1239, 1.442695
        %v1335 = vpow.pop %v1334
        %v1336 = vmul.f32 %v1240, 1.442695
        %v1337 = vpow.pop %v1336
        %v1338 = vmul.f32 %v1241, 1.442695
        %v1339 = vpow.pop %v1338
        %v1340 = vmul.f32 %v1242, 1.442695
        %v1341 = vpow.pop %v1340
        %v1342 = vmul.f32 %v1243, 1.442695
        %v1343 = vpow.pop %v1342
        %v1344 = vmul.f32 %v1244, 1.442695
        %v1345 = vpow.pop %v1344
        %v1346 = vmul.f32 %v1245, 1.442695
        %v1347 = vpow.pop %v1346
        %v1348 = vmul.f32 %v1246, 1.442695
        %v1349 = vpow.pop %v1348
        %v1350 = vmul.f32 %v1247, 1.442695
        %v1351 = vpow.pop %v1350
        %v1352 = vmul.f32 %v1248, 1.442695
        %v1353 = vpow.pop %v1352
        %v1354 = vmul.f32 %v1249, 1.442695
        %v1355 = vpow.pop %v1354
        %v1356 = vmul.f32 %v1250, 1.442695
        %v1357 = vpow.pop %v1356
        %v1358 = vmul.f32 %v1251, 1.442695
        %v1359 = vpow.pop %v1358
        %v1360 = vmul.f32 %v1252, 1.442695
        %v1361 = vpow.pop %v1360
        %v1362 = vmul.f32 %v1253, 1.442695
        %v1363 = vpow.pop %v1362
        %v1364 = vmul.f32 %v1254, 1.442695
        %v1365 = vpow.pop %v1364
        %v1366 = vmul.f32 %v1255, 1.442695
        %v1367 = vpow.pop %v1366
        %v1368 = vmul.f32 %v1256, 1.442695
        %v1369 = vpow.pop %v1368
        %v1370 = vmul.f32 %v1257, 1.442695
        %v1371 = vpow.pop %v1370
        %v1372 = vmul.f32 %v1258, 1.442695
        %v1373 = vpow.pop %v1372
        %v1374 = vmul.f32 %v1259, 1.442695
        %v1375 = vpow.pop %v1374
        %v1376 = vmul.f32 %v1260, 1.442695
        %v1377 = vpow.pop %v1376
        %v1378 = vmul.f32 %v1261, 1.442695
        %v1379 = vpow.pop %v1378
        %v1380 = vmul.f32 %v1262, 1.442695
        %v1381 = vpow.pop %v1380
        %v1382 = vmul.f32 %v1263, 1.442695
        %v1383 = vpow.pop %v1382
        %v1384 = vmul.f32 %v1264, 1.442695
        %v1385 = vpow.pop %v1384
        %v1386 = vmul.f32 %v1265, 1.442695
        %v1387 = vpow.pop %v1386
        %v1388 = vmul.f32 %v1266, 1.442695
        %v1389 = vpow.pop %v1388
        %v1390 = vmul.f32 %v1267, 1.442695
        %v1391 = vpow.pop %v1390
        %v1392 = vmul.f32 %v1268, 1.442695
        %v1393 = vpow.pop %v1392
        %v1394 = vmul.f32 %v1269, 1.442695
        %v1395 = vpow.pop %v1394
        %v1396 = vmul.f32 %v1270, 1.442695
        %v1397 = vpow.pop %v1396
        %v1398 = vmul.f32 %v1271, 1.442695
        %v1399 = vpow.pop %v1398
        %1400 = vmatprep.subr.mxu0 %v1335
        %1401 = vmatpush1.msra.mxu0 %v1333
        %1402 = vmatprep.subr.mxu0 %v1331
        %1403 = vmatpush1.msra.mxu0 %v1329
        %1404 = vmatprep.subr.mxu0 %v1327
        %1405 = vmatpush1.msra.mxu0 %v1325
        %1406 = vmatprep.subr.mxu0 %v1323
        %1407 = vmatpush1.msra.mxu0 %v1321
        %1408 = vmatprep.subr.mxu0 %v1319
        %1409 = vmatpush1.msra.mxu0 %v1317
        %1410 = vmatprep.subr.mxu0 %v1315
        %1411 = vmatpush1.msra.mxu0 %v1313
        %1412 = vmatprep.subr.mxu0 %v1311
        %1413 = vmatpush1.msra.mxu0 %v1309
        %1414 = vmatprep.subr.mxu0 %v1307
        %1415 = vmatpush1.msra.mxu0 %v1305
        %1416 = vmatprep.subr.mxu0 %v1303
        %1417 = vmatpush1.msra.mxu0 %v1301
        %1418 = vmatprep.subr.mxu0 %v1299
        %1419 = vmatpush1.msra.mxu0 %v1297
        %1420 = vmatprep.subr.mxu0 %v1295
        %1421 = vmatpush1.msra.mxu0 %v1293
        %1422 = vmatprep.subr.mxu0 %v1291
        %1423 = vmatpush1.msra.mxu0 %v1289
        %1424 = vmatprep.subr.mxu0 %v1287
        %1425 = vmatpush1.msra.mxu0 %v1285
        %1426 = vmatprep.subr.mxu0 %v1283
        %1427 = vmatpush1.msra.mxu0 %v1281
        %1428 = vmatprep.subr.mxu0 %v1279
        %1429 = vmatpush1.msra.mxu0 %v1277
        %1430 = vmatprep.subr.mxu0 %v1275
        %1431 = vmatpush1.msra.mxu0 %v1273
        %1432 = vmatprep.subr.mxu0 %v1399
        %1433 = vmatpush2.msra.mxu0 %v1397
        %1434 = vmatprep.subr.mxu0 %v1395
        %1435 = vmatpush2.msra.mxu0 %v1393
        %1436 = vmatprep.subr.mxu0 %v1391
        %1437 = vmatpush2.msra.mxu0 %v1389
        %1438 = vmatprep.subr.mxu0 %v1387
        %1439 = vmatpush2.msra.mxu0 %v1385
        %1440 = vmatprep.subr.mxu0 %v1383
        %1441 = vmatpush2.msra.mxu0 %v1381
        %1442 = vmatprep.subr.mxu0 %v1379
        %1443 = vmatpush2.msra.mxu0 %v1377
        %1444 = vmatprep.subr.mxu0 %v1375
        %1445 = vmatpush2.msra.mxu0 %v1373
        %1446 = vmatprep.subr.mxu0 %v1371
        %1447 = vmatpush2.msra.mxu0 %v1369
        %1448 = vmatprep.subr.mxu0 %v1367
        %1449 = vmatpush2.msra.mxu0 %v1365
        %1450 = vmatprep.subr.mxu0 %v1363
        %1451 = vmatpush2.msra.mxu0 %v1361
        %1452 = vmatprep.subr.mxu0 %v1359
        %1453 = vmatpush2.msra.mxu0 %v1357
        %1454 = vmatprep.subr.mxu0 %v1355
        %1455 = vmatpush2.msra.mxu0 %v1353
        %1456 = vmatprep.subr.mxu0 %v1351
        %1457 = vmatpush2.msra.mxu0 %v1349
        %1458 = vmatprep.subr.mxu0 %v1347
        %1459 = vmatpush2.msra.mxu0 %v1345
        %1460 = vmatprep.subr.mxu0 %v1343
        %1461 = vmatpush2.msra.mxu0 %v1341
        %1462 = vmatprep.subr.mxu0 %v1339
        %1463 = vmatpush2.msra.mxu0 %v1337
        %1464 = vmatprep.mubr.f32.mxu0 %v711
        %1465 = vmatmul.mubr.f32.gmra.mxu0 %v710
        %v1466 = vpop.f32.mrf.mxu0
        %v1467 = vadd.f32 0.0, %v1466
        %v1468 = vpop.f32.mrf.mxu0
        %v1469 = vadd.f32 0.0, %v1468
        %1470 = vmatprep.mubr.f32.mxu0 %v713
        %1471 = vmatmul.mubr.f32.gmra.mxu0 %v712
        %v1472 = vpop.f32.mrf.mxu0
        %v1473 = vadd.f32 0.0, %v1472
        %v1474 = vpop.f32.mrf.mxu0
        %v1475 = vadd.f32 0.0, %v1474
        %1476 = vmatprep.mubr.f32.mxu0 %v715
        %1477 = vmatmul.mubr.f32.gmra.mxu0 %v714
        %v1478 = vpop.f32.mrf.mxu0
        %v1479 = vadd.f32 0.0, %v1478
        %v1480 = vpop.f32.mrf.mxu0
        %v1481 = vadd.f32 0.0, %v1480
        %1482 = vdwg.mxu0
        %s1483 = sld [smem:[#allocation3]]
        %v1484 = vrcp.pop %v1479
        %v1485 = vrcp.pop %v1481
        %v1486 = vstv %s1483
        %v1487 = vmul.f32 %v1486, %v1484
        %v1488 = vmul.f32 %v1486, %v1485
        %s1489 = smul.addr %s702, 8
        %s1490 = scalar_lea.vmem %s242, %s1489 [#allocation4]
        %v1491 = vld [vmem:[%s1490] sm:$0xff]
        %v1492 = vld [vmem:[%s1490 + $0x8] sm:$0xff]
        %v1493 = vld [vmem:[%s1490 + $0x10] sm:$0xff]
        %v1494 = vld [vmem:[%s1490 + $0x18] sm:$0xff]
        %v1495 = vlaneseq
        %v1496 = vshrl.u32 %v1495, 7
        %v1497 = vsub.s32 0, %v1496
        %v1498 = vrot.slane %v1487, %v1497
        %v1499 = vlaneseq
        %v1500 = vshrl.u32 %v1499, 7
        %v1501 = vsub.s32 0, %v1500
        %v1502 = vrot.slane %v1488, %v1501
        %v1503 = vmul.f32 %v1467, %v1498
        %v1504 = vmul.f32 %v1469, %v1502
        %v1505 = vmul.f32 %v1473, %v1498
        %v1506 = vmul.f32 %v1475, %v1502
        %v1507 = vadd.f32 %v1503, %v1491
        %v1508 = vadd.f32 %v1504, %v1492
        %v1509 = vadd.f32 %v1505, %v1493
        %v1510 = vadd.f32 %v1506, %v1494
        %1511 = vst [vmem:[%s272] sm:$0xff] %v1507
        %1512 = vst [vmem:[%s272 + $0x8] sm:$0xff] %v1508
        %1513 = vst [vmem:[%s272 + $0x10] sm:$0xff] %v1509
        %1514 = vst [vmem:[%s272 + $0x18] sm:$0xff] %v1510
        %s1515 = sand.u32 %s156, 1
        %s1516 = scalar_lea.sflag [#allocation6], %s1515
        %s1517 = sand.u32 %s156, 1
        %s1518 = smul.addr %s1517, 32
        %s1519 = scalar_lea.vmem [#allocation9], %s1518
        // Predicated region
        $region53: #{tpu_custom_call.1} parent=39 // pred_check
          %p1520 = pneg %p166
        $region54: #{tpu_custom_call.1} parent=39 // pred_check_branch
          %1522 = sbr.rel (%p1520) target = $region56
        $region55: #{tpu_custom_call.1} parent=39 // pred_region
          %s1523 = smul.u32 2, %s29
          %s1525 = ssub.s32 512, 512
          %1526 = vsyncadd %s1516, %s1525
          %s1527 = smul.addr %s28, 4
          %s1528 = sadd.s32 %s1523, %s1527
          %s1529 = smul.addr %s1528, 128
          %s1530 = scalar_lea.hbm %s5, %s1529
          %s1531 = sshll.u32 %s1519, 4
          %s1532 = int_to_ptr.vmem [resolvable:$true] %s1531
          %1537 = dma.vmem_to_hbm [thread:$0]  %s1532, 512, %s1530, %s1516, 256, 256, 16
        $region56: #{tpu_custom_call.1} parent=39 // pred_fallthru
          _
      $region40: #{tpu_custom_call.1} parent=5 // pred_fallthru
        _
      %p1538 = scmp.le.s32.totalorder 2, %s19
      // Predicated region
      $region57: #{tpu_custom_call.1} parent=5 // pred_check
        %p1539 = pneg %p1538
      $region58: #{tpu_custom_call.1} parent=5 // pred_check_branch
        %1541 = sbr.rel (%p1539) target = $region60
      $region59: #{tpu_custom_call.1} parent=5 // pred_region
        %s1542 = ssub.s32 %s19, 2
        // Predicated region
        $region61: #{tpu_custom_call.1} parent=59 // pred_check
          %p1543 = pneg %p172
        $region62: #{tpu_custom_call.1} parent=59 // pred_check_branch
          %1545 = sbr.rel (%p1543) target = $region64
        $region63: #{tpu_custom_call.1} parent=59 // pred_region
          %s1546 = sand.u32 %s157, 1
          %s1547 = scalar_lea.sflag [#allocation6], %s1546
          %s1548 = sand.u32 %s157, 1
          %s1549 = smul.addr %s1548, 32
          %s1550 = scalar_lea.vmem [#allocation9], %s1549
          %1551 = dma.done %s1547, 512
        $region64: #{tpu_custom_call.1} parent=59 // pred_fallthru
          _
      $region60: #{tpu_custom_call.1} parent=5 // pred_fallthru
        _
    $region6: #{tpu_custom_call.1} parent=1 // loop_footer
      %s23 = sadd.s32 1, %s19
    $region7: #{tpu_custom_call.1} parent=1 // loop_footer_branch
      %18 = sbr.rel target = $region3
    $region8: #{tpu_custom_call.1} parent=1 // loop_exit
      _
    %1552 = vsyncpa [#allocation5], 1
    %s1553 = scalar_lea.sflag [#allocation5], 1
    %1554 = vsyncpa %s1553, 1
    %1555 = vsyncpa [#allocation8], 1
    %1556 = vsyncpa [#allocation6], 1
    %s1557 = scalar_lea.sflag [#allocation6], 1
    %1558 = vsyncpa %s1557, 1

</llo_original>
